<compile_context>
chip_gen: v6e
topology: v6e:2x2x1
jax: 0.10.0
libtpu: 0.0.40
codegen_flags: <defaults>
</compile_context>

<pallas_src>
import math
import jax
import jax.numpy as jnp
from jax.experimental import pallas as pl
from jax.experimental.pallas import tpu as pltpu


def make_attention_kernel(block_b, T, C, n_head):
    HD = C // n_head

    def kernel(x_ref,
               wq_ref, wk_ref, wv_ref,
               bq_ref, bk_ref, bv_ref,
               wp_ref, bp_ref,
               o_ref,
               y_scratch):
        # Stack this block's batch rows into one (block_b*T, C) matrix (free
        # reshape: T is a multiple of the sublane tile) so the QKV and output
        # projections are single MXU matmuls with M = block_b*T.
        x = x_ref[...].reshape(block_b * T, C)                  # bf16 (nb*T, C)

        # --- QKV projection: bf16 MXU operands, f32 accumulation ----------
        # 1/sqrt(HD) is already folded into wq/bq in the wrapper.
        q = jnp.dot(x, wq_ref[...], preferred_element_type=jnp.float32) + bq_ref[...]
        k = jnp.dot(x, wk_ref[...], preferred_element_type=jnp.float32) + bk_ref[...]
        v = jnp.dot(x, wv_ref[...], preferred_element_type=jnp.float32) + bv_ref[...]
        q = q.astype(jnp.bfloat16)
        k = k.astype(jnp.bfloat16)
        v = v.astype(jnp.bfloat16)

        # Causal mask, computed once and shared by all (batch-row, head) pairs.
        row = jax.lax.broadcasted_iota(jnp.int32, (T, T), 0)
        col = jax.lax.broadcasted_iota(jnp.int32, (T, T), 1)
        causal = row >= col

        # --- per (batch-row, head) attention -------------------------------
        # HD % 128 == 0 -> all row/column slices below are lane/sublane
        # aligned free views (no relayout copies).
        for bb in range(block_b):
            rows = slice(bb * T, (bb + 1) * T)
            for hh in range(n_head):
                cols = slice(hh * HD, (hh + 1) * HD)
                qh = q[rows, cols]                              # (T, HD) bf16
                kh = k[rows, cols]
                vh = v[rows, cols]
                # q @ k^T without an explicit transpose: contract last dims.
                s = jax.lax.dot_general(
                    qh, kh, (((1,), (1,)), ((), ())),
                    preferred_element_type=jnp.float32)         # (T, T) f32
                s = jnp.where(causal, s, -1e30)                 # mask in f32
                s = s - jnp.max(s, axis=-1, keepdims=True)      # softmax in f32
                p = jnp.exp(s)
                p = p * pl.reciprocal(jnp.sum(p, axis=-1, keepdims=True),
                                      approx=True)
                yh = jnp.dot(p.astype(jnp.bfloat16), vh,
                             preferred_element_type=jnp.float32)  # (T, HD) f32
                # Store straight into the lane-aligned column slot of the
                # concatenated-heads scratch (no jnp.concatenate copy).
                y_scratch[rows, cols] = yh.astype(jnp.bfloat16)

        # Output projection: single full-depth (K = C) matmul, lane-dense store.
        y = y_scratch[...]                                      # (nb*T, C) bf16
        out = jnp.dot(y, wp_ref[...], preferred_element_type=jnp.float32) + bp_ref[...]
        o_ref[...] = out.reshape(block_b, T, C).astype(o_ref.dtype)

    return kernel


def causal_self_attention_pallas(x, params, n_head):
    B, T, C = x.shape
    assert C % n_head == 0
    HD = C // n_head
    # Per-head slices / scratch stores are only free views when head_dim is a
    # multiple of the 128-lane width; smaller head dims need explicit handling.
    assert HD % 128 == 0, "head_dim must be a multiple of 128 lanes"

    out_dtype = x.dtype
    # Compute in bf16: halves the x HBM DMA and removes the in-kernel cast.
    x = x.astype(jnp.bfloat16)

    # Keep >= 2 grid steps so both v7x TensorCores get work (grid axes marked
    # "parallel" are sharded across cores); on single-TC chips (v5e/v6e) the
    # grid is just a serial loop, so bigger blocks simply cut per-step overhead.
    grid_steps = 2 if (B >= 2 and B % 2 == 0) else 1
    block_b = B // grid_steps

    kernel = make_attention_kernel(block_b, T, C, n_head)

    # Split the fused c_attn weight outside the kernel so every in-kernel
    # operand is lane-aligned; fold 1/sqrt(HD) into wq/bq (exact, applied once
    # to static weights); weights go to bf16 (MXU operands), biases stay f32.
    scale = 1.0 / math.sqrt(HD)
    w_attn = params["w_attn"]                       # (C, 3C) f32
    b_attn = params["b_attn"]                       # (3C,)   f32
    wq = (w_attn[:, 0 * C:1 * C] * scale).astype(jnp.bfloat16)
    wk = w_attn[:, 1 * C:2 * C].astype(jnp.bfloat16)
    wv = w_attn[:, 2 * C:3 * C].astype(jnp.bfloat16)
    bq = (b_attn[0 * C:1 * C] * scale).reshape(1, C)
    bk = b_attn[1 * C:2 * C].reshape(1, C)
    bv = b_attn[2 * C:3 * C].reshape(1, C)
    wp = params["w_proj"].astype(jnp.bfloat16)      # (C, C)
    bp = params["b_proj"].reshape(1, C)             # (1, C) f32

    param_list = [wq, wk, wv, bq, bk, bv, wp, bp]

    x_spec = pl.BlockSpec((block_b, T, C), lambda b: (b, 0, 0))
    o_spec = pl.BlockSpec((block_b, T, C), lambda b: (b, 0, 0))
    # Block-invariant params (constant index_map): single-buffer them so they
    # are not pointlessly double-buffered in VMEM (decisive at GPT-scale C,
    # especially on v7x's 64 MiB VMEM).
    param_specs = [
        pl.BlockSpec(p.shape, lambda b: (0, 0), pipeline_mode=pl.Buffered(1))
        for p in param_list
    ]

    return pl.pallas_call(
        kernel,
        out_shape=jax.ShapeDtypeStruct((B, T, C), out_dtype),
        grid_spec=pltpu.PrefetchScalarGridSpec(
            num_scalar_prefetch=0,
            grid=(grid_steps,),
            in_specs=[x_spec] + param_specs,
            out_specs=o_spec,
            scratch_shapes=[pltpu.VMEM((block_b * T, C), jnp.bfloat16)],
        ),
        compiler_params=pltpu.CompilerParams(
            dimension_semantics=("parallel",),
            vmem_limit_bytes=32 * 1024 * 1024),
    )(x, *param_list)


def causal_self_attention_reference(x, params, n_head):
    """Pure-JAX f32 reference mirroring the PyTorch forward."""
    B, T, C = x.shape
    HD = C // n_head
    qkv = x @ params["w_attn"] + params["b_attn"]
    q, k, v = jnp.split(qkv, 3, axis=-1)
    q = q.reshape(B, T, n_head, HD).transpose(0, 2, 1, 3)
    k = k.reshape(B, T, n_head, HD).transpose(0, 2, 1, 3)
    v = v.reshape(B, T, n_head, HD).transpose(0, 2, 1, 3)
    s = (q @ k.transpose(0, 1, 3, 2)) / math.sqrt(HD)
    mask = jnp.tril(jnp.ones((T, T), dtype=bool))
    s = jnp.where(mask, s, -jnp.inf)
    a = jax.nn.softmax(s, axis=-1)
    y = (a @ v).transpose(0, 2, 1, 3).reshape(B, T, C)
    return y @ params["w_proj"] + params["b_proj"]


def init_params(key, C):
    k1, k2, k3, k4 = jax.random.split(key, 4)
    std = 0.02
    return {
        "w_attn": (std * jax.random.normal(k1, (C, 3 * C))).astype(jnp.float32),
        "b_attn": (0.01 * jax.random.normal(k2, (3 * C,))).astype(jnp.float32),
        "w_proj": (std * jax.random.normal(k3, (C, C))).astype(jnp.float32),
        "b_proj": (0.01 * jax.random.normal(k4, (C,))).astype(jnp.float32),
    }


if __name__ == "__main__":
    # Small, TPU-friendly config: head_dim = 256 / 2 = 128 (lane-aligned),
    # T = 128, B = 4 -> 2 grid steps of 2 batch rows each (both v7x cores busy,
    # matmul M = 256 fills the v6e/v7x MXU).
    B, T, C, n_head = 4, 128, 256, 2

    key = jax.random.PRNGKey(0)
    k_x, k_p = jax.random.split(key)
    x = jax.random.normal(k_x, (B, T, C), dtype=jnp.float32)
    params = init_params(k_p, C)

    out = jax.block_until_ready(causal_self_attention_pallas(x, params, n_head))
    ref = jax.block_until_ready(causal_self_attention_reference(x, params, n_head))

    assert out.shape == (B, T, C)
    max_err = jnp.max(jnp.abs(out - ref))
    assert jnp.allclose(out, ref, atol=2e-2, rtol=2e-2), f"max abs err = {max_err}"

    print("KERNEL_OK")
</pallas_src>

<mosaic_0001>
module attributes {stable_mosaic.version = 11 : i64} {
  func.func @kernel(%arg0: i32, %arg1: memref<2x128x256xbf16, #tpu.memory_space<vmem>>, %arg2: memref<256x256xbf16, #tpu.memory_space<vmem>>, %arg3: memref<256x256xbf16, #tpu.memory_space<vmem>>, %arg4: memref<256x256xbf16, #tpu.memory_space<vmem>>, %arg5: memref<1x256xf32, #tpu.memory_space<vmem>>, %arg6: memref<1x256xf32, #tpu.memory_space<vmem>>, %arg7: memref<1x256xf32, #tpu.memory_space<vmem>>, %arg8: memref<256x256xbf16, #tpu.memory_space<vmem>>, %arg9: memref<1x256xf32, #tpu.memory_space<vmem>>, %arg10: memref<2x128x256xf32, #tpu.memory_space<vmem>>, %arg11: memref<256x256xbf16, #tpu.memory_space<vmem>>) attributes {dimension_semantics = [#tpu.dimension_semantics<parallel>], iteration_bounds = array<i64: 2>, scalar_prefetch = 0 : i64, scratch_operands = 1 : i64, tpu.core_type = #tpu.core_type<tc>, window_params = [{transform_indices = @transform_0, window_bounds = array<i64: 2, 128, 256>}, {pipeline_mode = #tpu.pipeline_mode<synchronous>, transform_indices = @transform_1, window_bounds = array<i64: 256, 256>}, {pipeline_mode = #tpu.pipeline_mode<synchronous>, transform_indices = @transform_2, window_bounds = array<i64: 256, 256>}, {pipeline_mode = #tpu.pipeline_mode<synchronous>, transform_indices = @transform_3, window_bounds = array<i64: 256, 256>}, {pipeline_mode = #tpu.pipeline_mode<synchronous>, transform_indices = @transform_4, window_bounds = array<i64: 1, 256>}, {pipeline_mode = #tpu.pipeline_mode<synchronous>, transform_indices = @transform_5, window_bounds = array<i64: 1, 256>}, {pipeline_mode = #tpu.pipeline_mode<synchronous>, transform_indices = @transform_6, window_bounds = array<i64: 1, 256>}, {pipeline_mode = #tpu.pipeline_mode<synchronous>, transform_indices = @transform_7, window_bounds = array<i64: 256, 256>}, {pipeline_mode = #tpu.pipeline_mode<synchronous>, transform_indices = @transform_8, window_bounds = array<i64: 1, 256>}, {transform_indices = @transform_9, window_bounds = array<i64: 2, 128, 256>}]} {
    %c0 = arith.constant 0 : index
    %c0_0 = arith.constant 0 : index
    %c0_1 = arith.constant 0 : index
    %0 = vector.load %arg1[%c0, %c0_0, %c0_1] : memref<2x128x256xbf16, #tpu.memory_space<vmem>>, vector<2x128x256xbf16>
    %1 = vector.shape_cast %0 : vector<2x128x256xbf16> to vector<256x256xbf16>
    %c0_2 = arith.constant 0 : index
    %c0_3 = arith.constant 0 : index
    %2 = vector.load %arg2[%c0_2, %c0_3] : memref<256x256xbf16, #tpu.memory_space<vmem>>, vector<256x256xbf16>
    %cst = arith.constant dense<0.000000e+00> : vector<256x256xf32>
    %3 = tpu.matmul %1, %2, %cst {dimension_numbers = #tpu.dot_dimension_numbers<[1], [0], [0], [1], [0, 0, 1, 1], [], []>} : vector<256x256xbf16>, vector<256x256xbf16>, vector<256x256xf32> -> vector<256x256xf32>
    %c0_4 = arith.constant 0 : index
    %c0_5 = arith.constant 0 : index
    %4 = vector.load %arg5[%c0_4, %c0_5] : memref<1x256xf32, #tpu.memory_space<vmem>>, vector<1x256xf32>
    %5 = vector.broadcast %4 : vector<1x256xf32> to vector<256x256xf32>
    %6 = arith.addf %3, %5 : vector<256x256xf32>
    %c0_6 = arith.constant 0 : index
    %c0_7 = arith.constant 0 : index
    %7 = vector.load %arg3[%c0_6, %c0_7] : memref<256x256xbf16, #tpu.memory_space<vmem>>, vector<256x256xbf16>
    %cst_8 = arith.constant dense<0.000000e+00> : vector<256x256xf32>
    %8 = tpu.matmul %1, %7, %cst_8 {dimension_numbers = #tpu.dot_dimension_numbers<[1], [0], [0], [1], [0, 0, 1, 1], [], []>} : vector<256x256xbf16>, vector<256x256xbf16>, vector<256x256xf32> -> vector<256x256xf32>
    %c0_9 = arith.constant 0 : index
    %c0_10 = arith.constant 0 : index
    %9 = vector.load %arg6[%c0_9, %c0_10] : memref<1x256xf32, #tpu.memory_space<vmem>>, vector<1x256xf32>
    %10 = vector.broadcast %9 : vector<1x256xf32> to vector<256x256xf32>
    %11 = arith.addf %8, %10 : vector<256x256xf32>
    %c0_11 = arith.constant 0 : index
    %c0_12 = arith.constant 0 : index
    %12 = vector.load %arg4[%c0_11, %c0_12] : memref<256x256xbf16, #tpu.memory_space<vmem>>, vector<256x256xbf16>
    %cst_13 = arith.constant dense<0.000000e+00> : vector<256x256xf32>
    %13 = tpu.matmul %1, %12, %cst_13 {dimension_numbers = #tpu.dot_dimension_numbers<[1], [0], [0], [1], [0, 0, 1, 1], [], []>} : vector<256x256xbf16>, vector<256x256xbf16>, vector<256x256xf32> -> vector<256x256xf32>
    %c0_14 = arith.constant 0 : index
    %c0_15 = arith.constant 0 : index
    %14 = vector.load %arg7[%c0_14, %c0_15] : memref<1x256xf32, #tpu.memory_space<vmem>>, vector<1x256xf32>
    %15 = vector.broadcast %14 : vector<1x256xf32> to vector<256x256xf32>
    %16 = arith.addf %13, %15 : vector<256x256xf32>
    %17 = arith.truncf %6 : vector<256x256xf32> to vector<256x256xbf16>
    %18 = arith.truncf %11 : vector<256x256xf32> to vector<256x256xbf16>
    %19 = arith.truncf %16 : vector<256x256xf32> to vector<256x256xbf16>
    %20 = tpu.iota {dimensions = array<i32: 0>} : vector<128x128xi32>
    %21 = tpu.iota {dimensions = array<i32: 1>} : vector<128x128xi32>
    %22 = arith.cmpi sge, %20, %21 : vector<128x128xi32>
    %23 = vector.extract_strided_slice %17 {offsets = [0, 0], sizes = [128, 128], strides = [1, 1]} : vector<256x256xbf16> to vector<128x128xbf16>
    %24 = vector.extract_strided_slice %18 {offsets = [0, 0], sizes = [128, 128], strides = [1, 1]} : vector<256x256xbf16> to vector<128x128xbf16>
    %25 = vector.extract_strided_slice %19 {offsets = [0, 0], sizes = [128, 128], strides = [1, 1]} : vector<256x256xbf16> to vector<128x128xbf16>
    %cst_16 = arith.constant dense<0.000000e+00> : vector<128x128xf32>
    %26 = tpu.matmul %23, %24, %cst_16 {dimension_numbers = #tpu.dot_dimension_numbers<[1], [1], [0], [0], [0, 0, 1, 0], [], []>} : vector<128x128xbf16>, vector<128x128xbf16>, vector<128x128xf32> -> vector<128x128xf32>
    %cst_17 = arith.constant -1.000000e+30 : f32
    %27 = vector.broadcast %cst_17 : f32 to vector<128x128xf32>
    %28 = arith.select %22, %26, %27 : vector<128x128xi1>, vector<128x128xf32>
    %cst_18 = arith.constant dense<0xFF800000> : vector<128xf32>
    %29 = vector.multi_reduction <maximumf>, %28, %cst_18 [1] : vector<128x128xf32> to vector<128xf32>
    %30 = vector.shape_cast %29 : vector<128xf32> to vector<128x1xf32>
    %31 = vector.broadcast %30 : vector<128x1xf32> to vector<128x128xf32>
    %32 = arith.subf %28, %31 : vector<128x128xf32>
    %33 = math.exp %32 : vector<128x128xf32>
    %cst_19 = arith.constant dense<0.000000e+00> : vector<128xf32>
    %34 = vector.multi_reduction <add>, %33, %cst_19 [1] : vector<128x128xf32> to vector<128xf32>
    %35 = vector.shape_cast %34 : vector<128xf32> to vector<128x1xf32>
    %36 = tpu.reciprocal %35 {approx = true} : vector<128x1xf32> -> vector<128x1xf32>
    %37 = vector.broadcast %36 : vector<128x1xf32> to vector<128x128xf32>
    %38 = arith.mulf %33, %37 : vector<128x128xf32>
    %39 = arith.truncf %38 : vector<128x128xf32> to vector<128x128xbf16>
    %cst_20 = arith.constant dense<0.000000e+00> : vector<128x128xf32>
    %40 = tpu.matmul %39, %25, %cst_20 {dimension_numbers = #tpu.dot_dimension_numbers<[1], [0], [0], [1], [0, 0, 1, 1], [], []>} : vector<128x128xbf16>, vector<128x128xbf16>, vector<128x128xf32> -> vector<128x128xf32>
    %41 = arith.truncf %40 : vector<128x128xf32> to vector<128x128xbf16>
    %c0_21 = arith.constant 0 : index
    %c0_22 = arith.constant 0 : index
    %42 = vector.load %arg11[%c0_21, %c0_22] : memref<256x256xbf16, #tpu.memory_space<vmem>>, vector<128x128xbf16>
    tpu.vector_store %arg11[%c0_21, %c0_22], %41 {strides = array<i32>} : memref<256x256xbf16, #tpu.memory_space<vmem>>, vector<128x128xbf16>,
    %43 = vector.extract_strided_slice %17 {offsets = [0, 128], sizes = [128, 128], strides = [1, 1]} : vector<256x256xbf16> to vector<128x128xbf16>
    %44 = vector.extract_strided_slice %18 {offsets = [0, 128], sizes = [128, 128], strides = [1, 1]} : vector<256x256xbf16> to vector<128x128xbf16>
    %45 = vector.extract_strided_slice %19 {offsets = [0, 128], sizes = [128, 128], strides = [1, 1]} : vector<256x256xbf16> to vector<128x128xbf16>
    %cst_23 = arith.constant dense<0.000000e+00> : vector<128x128xf32>
    %46 = tpu.matmul %43, %44, %cst_23 {dimension_numbers = #tpu.dot_dimension_numbers<[1], [1], [0], [0], [0, 0, 1, 0], [], []>} : vector<128x128xbf16>, vector<128x128xbf16>, vector<128x128xf32> -> vector<128x128xf32>
    %cst_24 = arith.constant -1.000000e+30 : f32
    %47 = vector.broadcast %cst_24 : f32 to vector<128x128xf32>
    %48 = arith.select %22, %46, %47 : vector<128x128xi1>, vector<128x128xf32>
    %cst_25 = arith.constant dense<0xFF800000> : vector<128xf32>
    %49 = vector.multi_reduction <maximumf>, %48, %cst_25 [1] : vector<128x128xf32> to vector<128xf32>
    %50 = vector.shape_cast %49 : vector<128xf32> to vector<128x1xf32>
    %51 = vector.broadcast %50 : vector<128x1xf32> to vector<128x128xf32>
    %52 = arith.subf %48, %51 : vector<128x128xf32>
    %53 = math.exp %52 : vector<128x128xf32>
    %cst_26 = arith.constant dense<0.000000e+00> : vector<128xf32>
    %54 = vector.multi_reduction <add>, %53, %cst_26 [1] : vector<128x128xf32> to vector<128xf32>
    %55 = vector.shape_cast %54 : vector<128xf32> to vector<128x1xf32>
    %56 = tpu.reciprocal %55 {approx = true} : vector<128x1xf32> -> vector<128x1xf32>
    %57 = vector.broadcast %56 : vector<128x1xf32> to vector<128x128xf32>
    %58 = arith.mulf %53, %57 : vector<128x128xf32>
    %59 = arith.truncf %58 : vector<128x128xf32> to vector<128x128xbf16>
    %cst_27 = arith.constant dense<0.000000e+00> : vector<128x128xf32>
    %60 = tpu.matmul %59, %45, %cst_27 {dimension_numbers = #tpu.dot_dimension_numbers<[1], [0], [0], [1], [0, 0, 1, 1], [], []>} : vector<128x128xbf16>, vector<128x128xbf16>, vector<128x128xf32> -> vector<128x128xf32>
    %61 = arith.truncf %60 : vector<128x128xf32> to vector<128x128xbf16>
    %c0_28 = arith.constant 0 : index
    %c128 = arith.constant 128 : index
    %62 = vector.load %arg11[%c0_28, %c128] : memref<256x256xbf16, #tpu.memory_space<vmem>>, vector<128x128xbf16>
    tpu.vector_store %arg11[%c0_28, %c128], %61 {strides = array<i32>} : memref<256x256xbf16, #tpu.memory_space<vmem>>, vector<128x128xbf16>,
    %63 = vector.extract_strided_slice %17 {offsets = [128, 0], sizes = [128, 128], strides = [1, 1]} : vector<256x256xbf16> to vector<128x128xbf16>
    %64 = vector.extract_strided_slice %18 {offsets = [128, 0], sizes = [128, 128], strides = [1, 1]} : vector<256x256xbf16> to vector<128x128xbf16>
    %65 = vector.extract_strided_slice %19 {offsets = [128, 0], sizes = [128, 128], strides = [1, 1]} : vector<256x256xbf16> to vector<128x128xbf16>
    %cst_29 = arith.constant dense<0.000000e+00> : vector<128x128xf32>
    %66 = tpu.matmul %63, %64, %cst_29 {dimension_numbers = #tpu.dot_dimension_numbers<[1], [1], [0], [0], [0, 0, 1, 0], [], []>} : vector<128x128xbf16>, vector<128x128xbf16>, vector<128x128xf32> -> vector<128x128xf32>
    %cst_30 = arith.constant -1.000000e+30 : f32
    %67 = vector.broadcast %cst_30 : f32 to vector<128x128xf32>
    %68 = arith.select %22, %66, %67 : vector<128x128xi1>, vector<128x128xf32>
    %cst_31 = arith.constant dense<0xFF800000> : vector<128xf32>
    %69 = vector.multi_reduction <maximumf>, %68, %cst_31 [1] : vector<128x128xf32> to vector<128xf32>
    %70 = vector.shape_cast %69 : vector<128xf32> to vector<128x1xf32>
    %71 = vector.broadcast %70 : vector<128x1xf32> to vector<128x128xf32>
    %72 = arith.subf %68, %71 : vector<128x128xf32>
    %73 = math.exp %72 : vector<128x128xf32>
    %cst_32 = arith.constant dense<0.000000e+00> : vector<128xf32>
    %74 = vector.multi_reduction <add>, %73, %cst_32 [1] : vector<128x128xf32> to vector<128xf32>
    %75 = vector.shape_cast %74 : vector<128xf32> to vector<128x1xf32>
    %76 = tpu.reciprocal %75 {approx = true} : vector<128x1xf32> -> vector<128x1xf32>
    %77 = vector.broadcast %76 : vector<128x1xf32> to vector<128x128xf32>
    %78 = arith.mulf %73, %77 : vector<128x128xf32>
    %79 = arith.truncf %78 : vector<128x128xf32> to vector<128x128xbf16>
    %cst_33 = arith.constant dense<0.000000e+00> : vector<128x128xf32>
    %80 = tpu.matmul %79, %65, %cst_33 {dimension_numbers = #tpu.dot_dimension_numbers<[1], [0], [0], [1], [0, 0, 1, 1], [], []>} : vector<128x128xbf16>, vector<128x128xbf16>, vector<128x128xf32> -> vector<128x128xf32>
    %81 = arith.truncf %80 : vector<128x128xf32> to vector<128x128xbf16>
    %c128_34 = arith.constant 128 : index
    %c0_35 = arith.constant 0 : index
    %82 = vector.load %arg11[%c128_34, %c0_35] : memref<256x256xbf16, #tpu.memory_space<vmem>>, vector<128x128xbf16>
    tpu.vector_store %arg11[%c128_34, %c0_35], %81 {strides = array<i32>} : memref<256x256xbf16, #tpu.memory_space<vmem>>, vector<128x128xbf16>,
    %83 = vector.extract_strided_slice %17 {offsets = [128, 128], sizes = [128, 128], strides = [1, 1]} : vector<256x256xbf16> to vector<128x128xbf16>
    %84 = vector.extract_strided_slice %18 {offsets = [128, 128], sizes = [128, 128], strides = [1, 1]} : vector<256x256xbf16> to vector<128x128xbf16>
    %85 = vector.extract_strided_slice %19 {offsets = [128, 128], sizes = [128, 128], strides = [1, 1]} : vector<256x256xbf16> to vector<128x128xbf16>
    %cst_36 = arith.constant dense<0.000000e+00> : vector<128x128xf32>
    %86 = tpu.matmul %83, %84, %cst_36 {dimension_numbers = #tpu.dot_dimension_numbers<[1], [1], [0], [0], [0, 0, 1, 0], [], []>} : vector<128x128xbf16>, vector<128x128xbf16>, vector<128x128xf32> -> vector<128x128xf32>
    %cst_37 = arith.constant -1.000000e+30 : f32
    %87 = vector.broadcast %cst_37 : f32 to vector<128x128xf32>
    %88 = arith.select %22, %86, %87 : vector<128x128xi1>, vector<128x128xf32>
    %cst_38 = arith.constant dense<0xFF800000> : vector<128xf32>
    %89 = vector.multi_reduction <maximumf>, %88, %cst_38 [1] : vector<128x128xf32> to vector<128xf32>
    %90 = vector.shape_cast %89 : vector<128xf32> to vector<128x1xf32>
    %91 = vector.broadcast %90 : vector<128x1xf32> to vector<128x128xf32>
    %92 = arith.subf %88, %91 : vector<128x128xf32>
    %93 = math.exp %92 : vector<128x128xf32>
    %cst_39 = arith.constant dense<0.000000e+00> : vector<128xf32>
    %94 = vector.multi_reduction <add>, %93, %cst_39 [1] : vector<128x128xf32> to vector<128xf32>
    %95 = vector.shape_cast %94 : vector<128xf32> to vector<128x1xf32>
    %96 = tpu.reciprocal %95 {approx = true} : vector<128x1xf32> -> vector<128x1xf32>
    %97 = vector.broadcast %96 : vector<128x1xf32> to vector<128x128xf32>
    %98 = arith.mulf %93, %97 : vector<128x128xf32>
    %99 = arith.truncf %98 : vector<128x128xf32> to vector<128x128xbf16>
    %cst_40 = arith.constant dense<0.000000e+00> : vector<128x128xf32>
    %100 = tpu.matmul %99, %85, %cst_40 {dimension_numbers = #tpu.dot_dimension_numbers<[1], [0], [0], [1], [0, 0, 1, 1], [], []>} : vector<128x128xbf16>, vector<128x128xbf16>, vector<128x128xf32> -> vector<128x128xf32>
    %101 = arith.truncf %100 : vector<128x128xf32> to vector<128x128xbf16>
    %c128_41 = arith.constant 128 : index
    %c128_42 = arith.constant 128 : index
    %102 = vector.load %arg11[%c128_41, %c128_42] : memref<256x256xbf16, #tpu.memory_space<vmem>>, vector<128x128xbf16>
    tpu.vector_store %arg11[%c128_41, %c128_42], %101 {strides = array<i32>} : memref<256x256xbf16, #tpu.memory_space<vmem>>, vector<128x128xbf16>,
    %c0_43 = arith.constant 0 : index
    %c0_44 = arith.constant 0 : index
    %103 = vector.load %arg11[%c0_43, %c0_44] : memref<256x256xbf16, #tpu.memory_space<vmem>>, vector<256x256xbf16>
    %c0_45 = arith.constant 0 : index
    %c0_46 = arith.constant 0 : index
    %104 = vector.load %arg8[%c0_45, %c0_46] : memref<256x256xbf16, #tpu.memory_space<vmem>>, vector<256x256xbf16>
    %cst_47 = arith.constant dense<0.000000e+00> : vector<256x256xf32>
    %105 = tpu.matmul %103, %104, %cst_47 {dimension_numbers = #tpu.dot_dimension_numbers<[1], [0], [0], [1], [0, 0, 1, 1], [], []>} : vector<256x256xbf16>, vector<256x256xbf16>, vector<256x256xf32> -> vector<256x256xf32>
    %c0_48 = arith.constant 0 : index
    %c0_49 = arith.constant 0 : index
    %106 = vector.load %arg9[%c0_48, %c0_49] : memref<1x256xf32, #tpu.memory_space<vmem>>, vector<1x256xf32>
    %107 = vector.broadcast %106 : vector<1x256xf32> to vector<256x256xf32>
    %108 = arith.addf %105, %107 : vector<256x256xf32>
    %109 = vector.shape_cast %108 : vector<256x256xf32> to vector<2x128x256xf32>
    %c0_50 = arith.constant 0 : index
    %c0_51 = arith.constant 0 : index
    %c0_52 = arith.constant 0 : index
    %110 = vector.load %arg10[%c0_50, %c0_51, %c0_52] : memref<2x128x256xf32, #tpu.memory_space<vmem>>, vector<2x128x256xf32>
    tpu.vector_store %arg10[%c0_50, %c0_51, %c0_52], %109 {strides = array<i32>} : memref<2x128x256xf32, #tpu.memory_space<vmem>>, vector<2x128x256xf32>,
    return
  }
  func.func @transform_0(%arg0: i32) -> (i32, i32, i32) {
    %c0_i32 = arith.constant 0 : i32
    %c0_i32_0 = arith.constant 0 : i32
    %c0_i32_1 = arith.constant 0 : i32
    return %arg0, %c0_i32, %c0_i32_0 : i32, i32, i32
  }
  func.func @transform_1(%arg0: i32) -> (i32, i32) {
    %c0_i32 = arith.constant 0 : i32
    %c0_i32_0 = arith.constant 0 : i32
    %c0_i32_1 = arith.constant 0 : i32
    return %c0_i32, %c0_i32_0 : i32, i32
  }
  func.func @transform_2(%arg0: i32) -> (i32, i32) {
    %c0_i32 = arith.constant 0 : i32
    %c0_i32_0 = arith.constant 0 : i32
    %c0_i32_1 = arith.constant 0 : i32
    return %c0_i32, %c0_i32_0 : i32, i32
  }
  func.func @transform_3(%arg0: i32) -> (i32, i32) {
    %c0_i32 = arith.constant 0 : i32
    %c0_i32_0 = arith.constant 0 : i32
    %c0_i32_1 = arith.constant 0 : i32
    return %c0_i32, %c0_i32_0 : i32, i32
  }
  func.func @transform_4(%arg0: i32) -> (i32, i32) {
    %c0_i32 = arith.constant 0 : i32
    %c0_i32_0 = arith.constant 0 : i32
    %c0_i32_1 = arith.constant 0 : i32
    return %c0_i32, %c0_i32_0 : i32, i32
  }
  func.func @transform_5(%arg0: i32) -> (i32, i32) {
    %c0_i32 = arith.constant 0 : i32
    %c0_i32_0 = arith.constant 0 : i32
    %c0_i32_1 = arith.constant 0 : i32
    return %c0_i32, %c0_i32_0 : i32, i32
  }
  func.func @transform_6(%arg0: i32) -> (i32, i32) {
    %c0_i32 = arith.constant 0 : i32
    %c0_i32_0 = arith.constant 0 : i32
    %c0_i32_1 = arith.constant 0 : i32
    return %c0_i32, %c0_i32_0 : i32, i32
  }
  func.func @transform_7(%arg0: i32) -> (i32, i32) {
    %c0_i32 = arith.constant 0 : i32
    %c0_i32_0 = arith.constant 0 : i32
    %c0_i32_1 = arith.constant 0 : i32
    return %c0_i32, %c0_i32_0 : i32, i32
  }
  func.func @transform_8(%arg0: i32) -> (i32, i32) {
    %c0_i32 = arith.constant 0 : i32
    %c0_i32_0 = arith.constant 0 : i32
    %c0_i32_1 = arith.constant 0 : i32
    return %c0_i32, %c0_i32_0 : i32, i32
  }
  func.func @transform_9(%arg0: i32) -> (i32, i32, i32) {
    %c0_i32 = arith.constant 0 : i32
    %c0_i32_0 = arith.constant 0 : i32
    %c0_i32_1 = arith.constant 0 : i32
    return %arg0, %c0_i32, %c0_i32_0 : i32, i32, i32
  }
}

</mosaic_0001>

<llo_original>
// kernel: tpu_custom_call.1
$region0: #{tpu_custom_call.1}
  #allocation0 [shape = 'u32[]', space=smem, size = 0x4, offset = 0x4, fixed_abs, tag = 'smem constant byte address 0x4 - core index']
  #allocation1 [shape = 'u32[144,128]{1,0:T(1,128)}', space=vmem, size = 0x12000, scoped, tag = 'internal scratch']
  #allocation2 [shape = 'bf16[256,256]{1,0:T(8,128)(2,1)}', space=vmem, size = 0x20000, scoped, tag = 'scratch operand']
  %s0 = inlined_call_operand.hbm [shape: bf16[4,128,256], index: 0, kind: input, shape index: {}]
  %s1 = inlined_call_operand.hbm [shape: bf16[256,256], index: 1, kind: input, shape index: {}]
  %s2 = inlined_call_operand.hbm [shape: bf16[256,256], index: 2, kind: input, shape index: {}]
  %s3 = inlined_call_operand.hbm [shape: bf16[256,256], index: 3, kind: input, shape index: {}]
  %s4 = inlined_call_operand.vmem [shape: f32[1,256], index: 4, kind: input, shape index: {}]
  %s5 = inlined_call_operand.vmem [shape: f32[1,256], index: 5, kind: input, shape index: {}]
  %s6 = inlined_call_operand.vmem [shape: f32[1,256], index: 6, kind: input, shape index: {}]
  %s7 = inlined_call_operand.hbm [shape: bf16[256,256], index: 7, kind: input, shape index: {}]
  %s8 = inlined_call_operand.vmem [shape: f32[1,256], index: 8, kind: input, shape index: {}]
  %s9 = inlined_call_operand.hbm [shape: f32[4,128,256], index: 9, kind: output, shape index: {}]
  %s10 = sld [smem:[#allocation0]]
  $region89: #{tpu_custom_call.1} parent=0
    _
  %s12 = ssub.s32 1, %s10
  %s13 = scalar_select 0, %s12, %s10
  $region1: #{tpu_custom_call.1} parent=0
    #allocation3 [shape = 'u8[262144]{0}', space=vmem, size = 0x40000, scoped, tag = 'input window, operand 0']
    #allocation4 [shape = 's32[2]{0}', space=sflag, size = 0x8, scoped, tag = 'scoped memory for tpu_custom_call.1']
    #allocation5 [shape = 's32[2]{0}', space=sflag, size = 0x8, scoped, tag = 'scoped memory for tpu_custom_call.1']
    #allocation6 [shape = 'u8[131072]{0}', space=vmem, size = 0x20000, scoped, tag = 'input window, operand 1, single buffered']
    #allocation7 [shape = 's32[1]{0}', space=sflag, size = 0x4, scoped, tag = 'scoped memory for tpu_custom_call.1']
    #allocation8 [shape = 'u8[131072]{0}', space=vmem, size = 0x20000, scoped, tag = 'input window, operand 2, single buffered']
    #allocation9 [shape = 'u8[131072]{0}', space=vmem, size = 0x20000, scoped, tag = 'input window, operand 3, single buffered']
    #allocation10 [shape = 's32[1]{0}', space=sflag, size = 0x4, scoped, tag = 'scoped memory for tpu_custom_call.1']
    #allocation11 [shape = 'u8[131072]{0}', space=vmem, size = 0x20000, scoped, tag = 'input window, operand 7, single buffered']
    #allocation12 [shape = 'u8[524288]{0}', space=vmem, size = 0x80000, scoped, tag = 'output window, operand 0']
    %14 = vsyncpa [#allocation4], 0
    %s15 = scalar_lea.sflag [#allocation4], 1
    %16 = vsyncpa %s15, 0
    %17 = vsyncpa [#allocation7], 0
    %18 = vsyncpa [#allocation10], 0
    %19 = vsyncpa [#allocation5], 0
    %s20 = scalar_lea.sflag [#allocation5], 1
    %21 = vsyncpa %s20, 0
    loop: start=0, step=1, limit=4
    $region2: #{tpu_custom_call.1} parent=1 // loop_pre_header
      _
    $region3: #{tpu_custom_call.1} parent=1 // loop_header
      %s23 = sphi 0, %s27
      %p24 = scmp.ge.s32.totalorder %s23, 4
      %s33 = sphi 0, %s35
      %s36 = sphi 0, %s33
      %s37 = sphi 0, %s36
      %s53 = sphi 0, %s37
      %s57 = sphi 0, %s57
      %s59 = sphi 0, %s57
      %s60 = sphi 0, %s59
      %s74 = sphi 0, %s60
      %s78 = sphi 0, %s78
      %s80 = sphi 0, %s78
      %s81 = sphi 0, %s80
      %s95 = sphi 0, %s81
      %s99 = sphi 0, %s99
      %s101 = sphi 0, %s99
      %s102 = sphi 0, %s101
      %s116 = sphi 0, %s102
      %s120 = sphi 0, %s120
      %s122 = sphi 0, %s120
      %s123 = sphi 0, %s122
      %s137 = sphi 0, %s123
      %s141 = sphi 0, %s141
      %s143 = sphi 0, %s141
      %s144 = sphi 0, %s143
      %s158 = sphi 0, %s144
      %s162 = sphi 0, %s162
      %s164 = sphi 0, %s162
      %s165 = sphi 0, %s164
      %s179 = sphi 0, %s165
      %s183 = sphi 0, %s183
      %s185 = sphi 0, %s183
      %s186 = sphi 0, %s185
      %s200 = sphi 0, %s186
      %s204 = sphi 0, %s204
      %s206 = sphi 0, %s204
      %s207 = sphi 0, %s206
      %s221 = sphi 0, %s207
      %s227 = sphi 0, %s229
      %s230 = sphi 0, %s227
      %s231 = sphi 0, %s230
      %s247 = sphi 0, %s231
    $region4: #{tpu_custom_call.1} parent=1 // loop_header_branch
      %26 = sbr.rel (%p24) target = $region8
    $region5: #{tpu_custom_call.1} parent=1 // loop_body
      %s28 = ssub.s32 %s23, 1
      %s29 = ssub.s32 %s23, 2
      %s30 = sadd.s32 %s23, 1
      %s31 = ssub.s32 %s23, %s30
      %p32 = scmp.eq.s32.totalorder %s31, 0
      %s34 = sadd.s32 %s33, 1
      %s35 = scalar_select %p32, %s33, %s34
      %p38 = pneg %p32
      %p39 = scmp.eq.s32.totalorder %s23, 1
      %p40 = por %p38, %p39
      %p41 = scmp.ne.s32.totalorder %s33, %s36
      %p42 = scmp.eq.s32.totalorder %s23, 0
      %p43 = por %p41, %p42
      %p44 = scmp.ne.s32.totalorder %s33, %s36
      %p45 = scmp.eq.s32.totalorder %s28, 1
      %p46 = por %p44, %p45
      %p47 = scmp.ne.s32.totalorder %s36, %s37
      %p48 = scmp.eq.s32.totalorder %s28, 0
      %p49 = por %p47, %p48
      %p50 = scmp.ne.s32.totalorder %s36, %s37
      %p51 = scmp.eq.s32.totalorder %s29, 1
      %p52 = por %p50, %p51
      %p54 = scmp.ne.s32.totalorder %s37, %s53
      %p55 = scmp.eq.s32.totalorder %s29, 0
      %p56 = por %p54, %p55
      %s58 = sadd.s32 %s57, 1
      %p61 = scmp.eq.s32.totalorder %s23, 1
      %p62 = scmp.ne.s32.totalorder %s57, %s59
      %p63 = scmp.eq.s32.totalorder %s23, 0
      %p64 = por %p62, %p63
      %p65 = scmp.ne.s32.totalorder %s57, %s59
      %p66 = scmp.eq.s32.totalorder %s28, 1
      %p67 = por %p65, %p66
      %p68 = scmp.ne.s32.totalorder %s59, %s60
      %p69 = scmp.eq.s32.totalorder %s28, 0
      %p70 = por %p68, %p69
      %p71 = scmp.ne.s32.totalorder %s59, %s60
      %p72 = scmp.eq.s32.totalorder %s29, 1
      %p73 = por %p71, %p72
      %p75 = scmp.ne.s32.totalorder %s60, %s74
      %p76 = scmp.eq.s32.totalorder %s29, 0
      %p77 = por %p75, %p76
      %s79 = sadd.s32 %s78, 1
      %p82 = scmp.eq.s32.totalorder %s23, 1
      %p83 = scmp.ne.s32.totalorder %s78, %s80
      %p84 = scmp.eq.s32.totalorder %s23, 0
      %p85 = por %p83, %p84
      %p86 = scmp.ne.s32.totalorder %s78, %s80
      %p87 = scmp.eq.s32.totalorder %s28, 1
      %p88 = por %p86, %p87
      %p89 = scmp.ne.s32.totalorder %s80, %s81
      %p90 = scmp.eq.s32.totalorder %s28, 0
      %p91 = por %p89, %p90
      %p92 = scmp.ne.s32.totalorder %s80, %s81
      %p93 = scmp.eq.s32.totalorder %s29, 1
      %p94 = por %p92, %p93
      %p96 = scmp.ne.s32.totalorder %s81, %s95
      %p97 = scmp.eq.s32.totalorder %s29, 0
      %p98 = por %p96, %p97
      %s100 = sadd.s32 %s99, 1
      %p103 = scmp.eq.s32.totalorder %s23, 1
      %p104 = scmp.ne.s32.totalorder %s99, %s101
      %p105 = scmp.eq.s32.totalorder %s23, 0
      %p106 = por %p104, %p105
      %p107 = scmp.ne.s32.totalorder %s99, %s101
      %p108 = scmp.eq.s32.totalorder %s28, 1
      %p109 = por %p107, %p108
      %p110 = scmp.ne.s32.totalorder %s101, %s102
      %p111 = scmp.eq.s32.totalorder %s28, 0
      %p112 = por %p110, %p111
      %p113 = scmp.ne.s32.totalorder %s101, %s102
      %p114 = scmp.eq.s32.totalorder %s29, 1
      %p115 = por %p113, %p114
      %p117 = scmp.ne.s32.totalorder %s102, %s116
      %p118 = scmp.eq.s32.totalorder %s29, 0
      %p119 = por %p117, %p118
      %s121 = sadd.s32 %s120, 1
      %p124 = scmp.eq.s32.totalorder %s23, 1
      %p125 = scmp.ne.s32.totalorder %s120, %s122
      %p126 = scmp.eq.s32.totalorder %s23, 0
      %p127 = por %p125, %p126
      %p128 = scmp.ne.s32.totalorder %s120, %s122
      %p129 = scmp.eq.s32.totalorder %s28, 1
      %p130 = por %p128, %p129
      %p131 = scmp.ne.s32.totalorder %s122, %s123
      %p132 = scmp.eq.s32.totalorder %s28, 0
      %p133 = por %p131, %p132
      %p134 = scmp.ne.s32.totalorder %s122, %s123
      %p135 = scmp.eq.s32.totalorder %s29, 1
      %p136 = por %p134, %p135
      %p138 = scmp.ne.s32.totalorder %s123, %s137
      %p139 = scmp.eq.s32.totalorder %s29, 0
      %p140 = por %p138, %p139
      %s142 = sadd.s32 %s141, 1
      %p145 = scmp.eq.s32.totalorder %s23, 1
      %p146 = scmp.ne.s32.totalorder %s141, %s143
      %p147 = scmp.eq.s32.totalorder %s23, 0
      %p148 = por %p146, %p147
      %p149 = scmp.ne.s32.totalorder %s141, %s143
      %p150 = scmp.eq.s32.totalorder %s28, 1
      %p151 = por %p149, %p150
      %p152 = scmp.ne.s32.totalorder %s143, %s144
      %p153 = scmp.eq.s32.totalorder %s28, 0
      %p154 = por %p152, %p153
      %p155 = scmp.ne.s32.totalorder %s143, %s144
      %p156 = scmp.eq.s32.totalorder %s29, 1
      %p157 = por %p155, %p156
      %p159 = scmp.ne.s32.totalorder %s144, %s158
      %p160 = scmp.eq.s32.totalorder %s29, 0
      %p161 = por %p159, %p160
      %s163 = sadd.s32 %s162, 1
      %p166 = scmp.eq.s32.totalorder %s23, 1
      %p167 = scmp.ne.s32.totalorder %s162, %s164
      %p168 = scmp.eq.s32.totalorder %s23, 0
      %p169 = por %p167, %p168
      %p170 = scmp.ne.s32.totalorder %s162, %s164
      %p171 = scmp.eq.s32.totalorder %s28, 1
      %p172 = por %p170, %p171
      %p173 = scmp.ne.s32.totalorder %s164, %s165
      %p174 = scmp.eq.s32.totalorder %s28, 0
      %p175 = por %p173, %p174
      %p176 = scmp.ne.s32.totalorder %s164, %s165
      %p177 = scmp.eq.s32.totalorder %s29, 1
      %p178 = por %p176, %p177
      %p180 = scmp.ne.s32.totalorder %s165, %s179
      %p181 = scmp.eq.s32.totalorder %s29, 0
      %p182 = por %p180, %p181
      %s184 = sadd.s32 %s183, 1
      %p187 = scmp.eq.s32.totalorder %s23, 1
      %p188 = scmp.ne.s32.totalorder %s183, %s185
      %p189 = scmp.eq.s32.totalorder %s23, 0
      %p190 = por %p188, %p189
      %p191 = scmp.ne.s32.totalorder %s183, %s185
      %p192 = scmp.eq.s32.totalorder %s28, 1
      %p193 = por %p191, %p192
      %p194 = scmp.ne.s32.totalorder %s185, %s186
      %p195 = scmp.eq.s32.totalorder %s28, 0
      %p196 = por %p194, %p195
      %p197 = scmp.ne.s32.totalorder %s185, %s186
      %p198 = scmp.eq.s32.totalorder %s29, 1
      %p199 = por %p197, %p198
      %p201 = scmp.ne.s32.totalorder %s186, %s200
      %p202 = scmp.eq.s32.totalorder %s29, 0
      %p203 = por %p201, %p202
      %s205 = sadd.s32 %s204, 1
      %p208 = scmp.eq.s32.totalorder %s23, 1
      %p209 = scmp.ne.s32.totalorder %s204, %s206
      %p210 = scmp.eq.s32.totalorder %s23, 0
      %p211 = por %p209, %p210
      %p212 = scmp.ne.s32.totalorder %s204, %s206
      %p213 = scmp.eq.s32.totalorder %s28, 1
      %p214 = por %p212, %p213
      %p215 = scmp.ne.s32.totalorder %s206, %s207
      %p216 = scmp.eq.s32.totalorder %s28, 0
      %p217 = por %p215, %p216
      %p218 = scmp.ne.s32.totalorder %s206, %s207
      %p219 = scmp.eq.s32.totalorder %s29, 1
      %p220 = por %p218, %p219
      %p222 = scmp.ne.s32.totalorder %s207, %s221
      %p223 = scmp.eq.s32.totalorder %s29, 0
      %p224 = por %p222, %p223
      %s225 = ssub.s32 %s23, %s30
      %p226 = scmp.eq.s32.totalorder %s225, 0
      %s228 = sadd.s32 %s227, 1
      %s229 = scalar_select %p226, %s227, %s228
      %p232 = pneg %p226
      %p233 = scmp.eq.s32.totalorder %s23, 1
      %p234 = por %p232, %p233
      %p235 = scmp.ne.s32.totalorder %s227, %s230
      %p236 = scmp.eq.s32.totalorder %s23, 0
      %p237 = por %p235, %p236
      %p238 = scmp.ne.s32.totalorder %s227, %s230
      %p239 = scmp.eq.s32.totalorder %s28, 1
      %p240 = por %p238, %p239
      %p241 = scmp.ne.s32.totalorder %s230, %s231
      %p242 = scmp.eq.s32.totalorder %s28, 0
      %p243 = por %p241, %p242
      %p244 = scmp.ne.s32.totalorder %s230, %s231
      %p245 = scmp.eq.s32.totalorder %s29, 1
      %p246 = por %p244, %p245
      %p248 = scmp.ne.s32.totalorder %s231, %s247
      %p249 = scmp.eq.s32.totalorder %s29, 0
      %p250 = por %p248, %p249
      %p251 = scmp.le.s32.totalorder 1, %s23
      %p252 = scmp.lt.s32.totalorder %s23, 3
      %p253 = pnand %p251, %p252
      %p254 = pneg %p253
      // Predicated region
      $region9: #{tpu_custom_call.1} parent=5 // pred_check
        _
      $region10: #{tpu_custom_call.1} parent=5 // pred_check_branch
        %256 = sbr.rel (%p253) target = $region12
      $region11: #{tpu_custom_call.1} parent=5 // pred_region
        %s257 = ssub.s32 %s23, 1
        // Predicated region
        $region13: #{tpu_custom_call.1} parent=11 // pred_check
          %p258 = pneg %p70
        $region14: #{tpu_custom_call.1} parent=11 // pred_check_branch
          %260 = sbr.rel (%p258) target = $region16
        $region15: #{tpu_custom_call.1} parent=11 // pred_region
          %s262 = ssub.s32 4096, 4096
          %263 = vsyncadd [#allocation7], %s262
          %s264 = sshll.u32 [#allocation6], 4
          %s265 = int_to_ptr.vmem [resolvable:$true] %s264
          %270 = dma.hbm_to_vmem [thread:$0]  %s1, 4096, %s265, [#allocation7], 128, 128, 8
        $region16: #{tpu_custom_call.1} parent=11 // pred_fallthru
          _
        // Predicated region
        $region17: #{tpu_custom_call.1} parent=11 // pred_check
          %p271 = pneg %p91
        $region18: #{tpu_custom_call.1} parent=11 // pred_check_branch
          %273 = sbr.rel (%p271) target = $region20
        $region19: #{tpu_custom_call.1} parent=11 // pred_region
          %s275 = ssub.s32 4096, 4096
          %276 = vsyncadd [#allocation7], %s275
          %s277 = sshll.u32 [#allocation8], 4
          %s278 = int_to_ptr.vmem [resolvable:$true] %s277
          %283 = dma.hbm_to_vmem [thread:$0]  %s2, 4096, %s278, [#allocation7], 128, 128, 8
        $region20: #{tpu_custom_call.1} parent=11 // pred_fallthru
          _
        // Predicated region
        $region21: #{tpu_custom_call.1} parent=11 // pred_check
          %p284 = pneg %p112
        $region22: #{tpu_custom_call.1} parent=11 // pred_check_branch
          %286 = sbr.rel (%p284) target = $region24
        $region23: #{tpu_custom_call.1} parent=11 // pred_region
          %s288 = ssub.s32 4096, 4096
          %289 = vsyncadd [#allocation10], %s288
          %s290 = sshll.u32 [#allocation9], 4
          %s291 = int_to_ptr.vmem [resolvable:$true] %s290
          %296 = dma.hbm_to_vmem [thread:$0]  %s3, 4096, %s291, [#allocation10], 128, 128, 8
        $region24: #{tpu_custom_call.1} parent=11 // pred_fallthru
          _
        // Predicated region
        $region25: #{tpu_custom_call.1} parent=11 // pred_check
          %p297 = pneg %p133
        $region26: #{tpu_custom_call.1} parent=11 // pred_check_branch
          %299 = sbr.rel (%p297) target = $region28
        $region27: #{tpu_custom_call.1} parent=11 // pred_region
          _
        $region28: #{tpu_custom_call.1} parent=11 // pred_fallthru
          _
        // Predicated region
        $region29: #{tpu_custom_call.1} parent=11 // pred_check
          %p300 = pneg %p154
        $region30: #{tpu_custom_call.1} parent=11 // pred_check_branch
          %302 = sbr.rel (%p300) target = $region32
        $region31: #{tpu_custom_call.1} parent=11 // pred_region
          _
        $region32: #{tpu_custom_call.1} parent=11 // pred_fallthru
          _
        // Predicated region
        $region33: #{tpu_custom_call.1} parent=11 // pred_check
          %p303 = pneg %p175
        $region34: #{tpu_custom_call.1} parent=11 // pred_check_branch
          %305 = sbr.rel (%p303) target = $region36
        $region35: #{tpu_custom_call.1} parent=11 // pred_region
          _
        $region36: #{tpu_custom_call.1} parent=11 // pred_fallthru
          _
        // Predicated region
        $region37: #{tpu_custom_call.1} parent=11 // pred_check
          %p306 = pneg %p196
        $region38: #{tpu_custom_call.1} parent=11 // pred_check_branch
          %308 = sbr.rel (%p306) target = $region40
        $region39: #{tpu_custom_call.1} parent=11 // pred_region
          %s310 = ssub.s32 4096, 4096
          %311 = vsyncadd [#allocation10], %s310
          %s312 = sshll.u32 [#allocation11], 4
          %s313 = int_to_ptr.vmem [resolvable:$true] %s312
          %318 = dma.hbm_to_vmem [thread:$0]  %s7, 4096, %s313, [#allocation10], 128, 128, 8
        $region40: #{tpu_custom_call.1} parent=11 // pred_fallthru
          _
        // Predicated region
        $region41: #{tpu_custom_call.1} parent=11 // pred_check
          %p319 = pneg %p217
        $region42: #{tpu_custom_call.1} parent=11 // pred_check_branch
          %321 = sbr.rel (%p319) target = $region44
        $region43: #{tpu_custom_call.1} parent=11 // pred_region
          _
        $region44: #{tpu_custom_call.1} parent=11 // pred_fallthru
          _
      $region12: #{tpu_custom_call.1} parent=5 // pred_fallthru
        _
      %p322 = scmp.lt.s32.totalorder %s23, 2
      // Predicated region
      $region45: #{tpu_custom_call.1} parent=5 // pred_check
        %p323 = pneg %p322
      $region46: #{tpu_custom_call.1} parent=5 // pred_check_branch
        %325 = sbr.rel (%p323) target = $region48
      $region47: #{tpu_custom_call.1} parent=5 // pred_region
        // Predicated region
        $region49: #{tpu_custom_call.1} parent=47 // pred_check
          %p326 = pneg %p43
        $region50: #{tpu_custom_call.1} parent=47 // pred_check_branch
          %328 = sbr.rel (%p326) target = $region52
        $region51: #{tpu_custom_call.1} parent=47 // pred_region
          %s329 = sand.u32 %s33, 1
          %s330 = scalar_lea.sflag [#allocation4], %s329
          %s331 = sand.u32 %s33, 1
          %s332 = smul.addr %s331, 256
          %s333 = scalar_lea.vmem [#allocation3], %s332
          %s334 = smul.u32 2, %s23
          %s336 = ssub.s32 4096, 4096
          %337 = vsyncadd %s330, %s336
          %s338 = smul.addr %s334, 32
          %s339 = smul.addr %s338, 64
          %s340 = scalar_lea.hbm %s0, %s339
          %s341 = sshll.u32 %s333, 4
          %s342 = int_to_ptr.vmem [resolvable:$true] %s341
          %347 = dma.hbm_to_vmem [thread:$0]  %s340, 4096, %s342, %s330, 128, 128, 8
        $region52: #{tpu_custom_call.1} parent=47 // pred_fallthru
          _
      $region48: #{tpu_custom_call.1} parent=5 // pred_fallthru
        _
      %p348 = scmp.le.s32.totalorder 1, %s23
      %p349 = scmp.lt.s32.totalorder %s23, 3
      %p350 = pnand %p348, %p349
      %p351 = pneg %p350
      // Predicated region
      $region53: #{tpu_custom_call.1} parent=5 // pred_check
        _
      $region54: #{tpu_custom_call.1} parent=5 // pred_check_branch
        %353 = sbr.rel (%p350) target = $region56
      $region55: #{tpu_custom_call.1} parent=5 // pred_region
        %s354 = ssub.s32 %s23, 1
        %s355 = sand.u32 %s36, 1
        %s356 = scalar_lea.sflag [#allocation4], %s355
        %s357 = sand.u32 %s36, 1
        %s358 = smul.addr %s357, 256
        %s359 = scalar_lea.vmem [#allocation3], %s358
        // Predicated region
        $region57: #{tpu_custom_call.1} parent=55 // pred_check
          %p360 = pneg %p49
        $region58: #{tpu_custom_call.1} parent=55 // pred_check_branch
          %362 = sbr.rel (%p360) target = $region60
        $region59: #{tpu_custom_call.1} parent=55 // pred_region
          %363 = dma.done %s356, 4096
        $region60: #{tpu_custom_call.1} parent=55 // pred_fallthru
          _
        // Predicated region
        $region61: #{tpu_custom_call.1} parent=55 // pred_check
          %p364 = pneg %p70
        $region62: #{tpu_custom_call.1} parent=55 // pred_check_branch
          %366 = sbr.rel (%p364) target = $region64
        $region63: #{tpu_custom_call.1} parent=55 // pred_region
          %367 = dma.done [#allocation7], 4096
        $region64: #{tpu_custom_call.1} parent=55 // pred_fallthru
          _
        // Predicated region
        $region65: #{tpu_custom_call.1} parent=55 // pred_check
          %p368 = pneg %p91
        $region66: #{tpu_custom_call.1} parent=55 // pred_check_branch
          %370 = sbr.rel (%p368) target = $region68
        $region67: #{tpu_custom_call.1} parent=55 // pred_region
          %371 = dma.done [#allocation7], 4096
        $region68: #{tpu_custom_call.1} parent=55 // pred_fallthru
          _
        // Predicated region
        $region69: #{tpu_custom_call.1} parent=55 // pred_check
          %p372 = pneg %p112
        $region70: #{tpu_custom_call.1} parent=55 // pred_check_branch
          %374 = sbr.rel (%p372) target = $region72
        $region71: #{tpu_custom_call.1} parent=55 // pred_region
          %375 = dma.done [#allocation10], 4096
        $region72: #{tpu_custom_call.1} parent=55 // pred_fallthru
          _
        // Predicated region
        $region73: #{tpu_custom_call.1} parent=55 // pred_check
          %p376 = pneg %p196
        $region74: #{tpu_custom_call.1} parent=55 // pred_check_branch
          %378 = sbr.rel (%p376) target = $region76
        $region75: #{tpu_custom_call.1} parent=55 // pred_region
          %379 = dma.done [#allocation10], 4096
        $region76: #{tpu_custom_call.1} parent=55 // pred_fallthru
          _
        %s380 = sand.u32 %s36, 1
        %s381 = scalar_lea.sflag [#allocation4], %s380
        %s382 = sand.u32 %s36, 1
        %s383 = smul.addr %s382, 256
        %s384 = scalar_lea.vmem [#allocation3], %s383
        %p385 = pneg %p49
        %p386 = pneg %p46
        %p387 = pneg %p70
        %p388 = pneg %p67
        %p389 = pneg %p91
        %p390 = pneg %p88
        %p391 = pneg %p112
        %p392 = pneg %p109
        %p393 = pneg %p133
        %p394 = pneg %p130
        %p395 = pneg %p154
        %p396 = pneg %p151
        %p397 = pneg %p175
        %p398 = pneg %p172
        %p399 = pneg %p196
        %p400 = pneg %p193
        %p401 = pneg %p217
        %p402 = pneg %p214
        %p403 = pneg %p243
        %p404 = pneg %p240
        %s405 = sand.u32 %s230, 1
        %s406 = scalar_lea.sflag [#allocation5], %s405
        %s407 = sand.u32 %s230, 1
        %s408 = smul.addr %s407, 512
        %s409 = scalar_lea.vmem [#allocation12], %s408
        %s410 = smul.u32 2, %s28
        %s411 = smul.u32 2, %s28
        %v413 = vld [vmem:[%s359] sm:$0xff]
        %v414 = vld [vmem:[%s359 + $0x8] sm:$0xff]
        %v415 = vld [vmem:[%s359 + $0x10] sm:$0xff]
        %v416 = vld [vmem:[%s359 + $0x18] sm:$0xff]
        %v417 = vld [vmem:[%s359 + $0x20] sm:$0xff]
        %v418 = vld [vmem:[%s359 + $0x28] sm:$0xff]
        %v419 = vld [vmem:[%s359 + $0x30] sm:$0xff]
        %v420 = vld [vmem:[%s359 + $0x38] sm:$0xff]
        %v421 = vld [vmem:[%s359 + $0x40] sm:$0xff]
        %v422 = vld [vmem:[%s359 + $0x48] sm:$0xff]
        %v423 = vld [vmem:[%s359 + $0x50] sm:$0xff]
        %v424 = vld [vmem:[%s359 + $0x58] sm:$0xff]
        %v425 = vld [vmem:[%s359 + $0x60] sm:$0xff]
        %v426 = vld [vmem:[%s359 + $0x68] sm:$0xff]
        %v427 = vld [vmem:[%s359 + $0x70] sm:$0xff]
        %v428 = vld [vmem:[%s359 + $0x78] sm:$0xff]
        %v429 = vld [vmem:[%s359 + $0x80] sm:$0xff]
        %v430 = vld [vmem:[%s359 + $0x88] sm:$0xff]
        %v431 = vld [vmem:[%s359 + $0x90] sm:$0xff]
        %v432 = vld [vmem:[%s359 + $0x98] sm:$0xff]
        %v433 = vld [vmem:[%s359 + $0xa0] sm:$0xff]
        %v434 = vld [vmem:[%s359 + $0xa8] sm:$0xff]
        %v435 = vld [vmem:[%s359 + $0xb0] sm:$0xff]
        %v436 = vld [vmem:[%s359 + $0xb8] sm:$0xff]
        %v437 = vld [vmem:[%s359 + $0xc0] sm:$0xff]
        %v438 = vld [vmem:[%s359 + $0xc8] sm:$0xff]
        %v439 = vld [vmem:[%s359 + $0xd0] sm:$0xff]
        %v440 = vld [vmem:[%s359 + $0xd8] sm:$0xff]
        %v441 = vld [vmem:[%s359 + $0xe0] sm:$0xff]
        %v442 = vld [vmem:[%s359 + $0xe8] sm:$0xff]
        %v443 = vld [vmem:[%s359 + $0xf0] sm:$0xff]
        %v444 = vld [vmem:[%s359 + $0xf8] sm:$0xff]
        %v445 = vld [vmem:[#allocation6] sm:$0xff]
        %v446 = vld [vmem:[#allocation6 + $0x8] sm:$0xff]
        %v447 = vld [vmem:[#allocation6 + $0x10] sm:$0xff]
        %v448 = vld [vmem:[#allocation6 + $0x18] sm:$0xff]
        %v449 = vld [vmem:[#allocation6 + $0x20] sm:$0xff]
        %v450 = vld [vmem:[#allocation6 + $0x28] sm:$0xff]
        %v451 = vld [vmem:[#allocation6 + $0x30] sm:$0xff]
        %v452 = vld [vmem:[#allocation6 + $0x38] sm:$0xff]
        %v453 = vld [vmem:[#allocation6 + $0x40] sm:$0xff]
        %v454 = vld [vmem:[#allocation6 + $0x48] sm:$0xff]
        %v455 = vld [vmem:[#allocation6 + $0x50] sm:$0xff]
        %v456 = vld [vmem:[#allocation6 + $0x58] sm:$0xff]
        %v457 = vld [vmem:[#allocation6 + $0x60] sm:$0xff]
        %v458 = vld [vmem:[#allocation6 + $0x68] sm:$0xff]
        %v459 = vld [vmem:[#allocation6 + $0x70] sm:$0xff]
        %v460 = vld [vmem:[#allocation6 + $0x78] sm:$0xff]
        %v461 = vld [vmem:[#allocation6 + $0x80] sm:$0xff]
        %v462 = vld [vmem:[#allocation6 + $0x88] sm:$0xff]
        %v463 = vld [vmem:[#allocation6 + $0x90] sm:$0xff]
        %v464 = vld [vmem:[#allocation6 + $0x98] sm:$0xff]
        %v465 = vld [vmem:[#allocation6 + $0xa0] sm:$0xff]
        %v466 = vld [vmem:[#allocation6 + $0xa8] sm:$0xff]
        %v467 = vld [vmem:[#allocation6 + $0xb0] sm:$0xff]
        %v468 = vld [vmem:[#allocation6 + $0xb8] sm:$0xff]
        %v469 = vld [vmem:[#allocation6 + $0xc0] sm:$0xff]
        %v470 = vld [vmem:[#allocation6 + $0xc8] sm:$0xff]
        %v471 = vld [vmem:[#allocation6 + $0xd0] sm:$0xff]
        %v472 = vld [vmem:[#allocation6 + $0xd8] sm:$0xff]
        %v473 = vld [vmem:[#allocation6 + $0xe0] sm:$0xff]
        %v474 = vld [vmem:[#allocation6 + $0xe8] sm:$0xff]
        %v475 = vld [vmem:[#allocation6 + $0xf0] sm:$0xff]
        %v476 = vld [vmem:[#allocation6 + $0xf8] sm:$0xff]
        %v477 = vld [vmem:[%s4] sm:$0x3]
        %v479 = vlaneseq
        %v480 = vshrl.u32 %v479, 7
        %v481 = vsub.s32 0, %v480
        %v482 = vrot.slane %v477, %v481
        %v483 = vlaneseq
        %v484 = vshrl.u32 %v483, 7
        %v485 = vsub.s32 1, %v484
        %v486 = vrot.slane %v477, %v485
        %v521 = vunpack.c.l.b16 %v413
        %v522 = vunpack.c.h.b16 %v413
        %v523 = vunpack.c.l.b16 %v414
        %v524 = vunpack.c.h.b16 %v414
        %v525 = vunpack.c.l.b16 %v415
        %v526 = vunpack.c.h.b16 %v415
        %v527 = vunpack.c.l.b16 %v416
        %v528 = vunpack.c.h.b16 %v416
        %v529 = vunpack.c.l.b16 %v417
        %v530 = vunpack.c.h.b16 %v417
        %v531 = vunpack.c.l.b16 %v418
        %v532 = vunpack.c.h.b16 %v418
        %v533 = vunpack.c.l.b16 %v419
        %v534 = vunpack.c.h.b16 %v419
        %v535 = vunpack.c.l.b16 %v420
        %v536 = vunpack.c.h.b16 %v420
        %v537 = vunpack.c.l.b16 %v421
        %v538 = vunpack.c.h.b16 %v421
        %v539 = vunpack.c.l.b16 %v422
        %v540 = vunpack.c.h.b16 %v422
        %v541 = vunpack.c.l.b16 %v423
        %v542 = vunpack.c.h.b16 %v423
        %v543 = vunpack.c.l.b16 %v424
        %v544 = vunpack.c.h.b16 %v424
        %v545 = vunpack.c.l.b16 %v425
        %v546 = vunpack.c.h.b16 %v425
        %v547 = vunpack.c.l.b16 %v426
        %v548 = vunpack.c.h.b16 %v426
        %v549 = vunpack.c.l.b16 %v427
        %v550 = vunpack.c.h.b16 %v427
        %v551 = vunpack.c.l.b16 %v428
        %v552 = vunpack.c.h.b16 %v428
        %v553 = vunpack.c.l.b16 %v429
        %v554 = vunpack.c.h.b16 %v429
        %v555 = vunpack.c.l.b16 %v430
        %v556 = vunpack.c.h.b16 %v430
        %v557 = vunpack.c.l.b16 %v431
        %v558 = vunpack.c.h.b16 %v431
        %v559 = vunpack.c.l.b16 %v432
        %v560 = vunpack.c.h.b16 %v432
        %v561 = vunpack.c.l.b16 %v433
        %v562 = vunpack.c.h.b16 %v433
        %v563 = vunpack.c.l.b16 %v434
        %v564 = vunpack.c.h.b16 %v434
        %v565 = vunpack.c.l.b16 %v435
        %v566 = vunpack.c.h.b16 %v435
        %v567 = vunpack.c.l.b16 %v436
        %v568 = vunpack.c.h.b16 %v436
        %v569 = vunpack.c.l.b16 %v437
        %v570 = vunpack.c.h.b16 %v437
        %v571 = vunpack.c.l.b16 %v438
        %v572 = vunpack.c.h.b16 %v438
        %v573 = vunpack.c.l.b16 %v439
        %v574 = vunpack.c.h.b16 %v439
        %v575 = vunpack.c.l.b16 %v440
        %v576 = vunpack.c.h.b16 %v440
        %v577 = vunpack.c.l.b16 %v441
        %v578 = vunpack.c.h.b16 %v441
        %v579 = vunpack.c.l.b16 %v442
        %v580 = vunpack.c.h.b16 %v442
        %v581 = vunpack.c.l.b16 %v443
        %v582 = vunpack.c.h.b16 %v443
        %v583 = vunpack.c.l.b16 %v444
        %v584 = vunpack.c.h.b16 %v444
        %v585 = vpack.c.b16 %v523, %v521
        %v586 = vpack.c.b16 %v524, %v522
        %v587 = vpack.c.b16 %v527, %v525
        %v588 = vpack.c.b16 %v528, %v526
        %v589 = vpack.c.b16 %v531, %v529
        %v590 = vpack.c.b16 %v532, %v530
        %v591 = vpack.c.b16 %v535, %v533
        %v592 = vpack.c.b16 %v536, %v534
        %v593 = vpack.c.b16 %v539, %v537
        %v594 = vpack.c.b16 %v540, %v538
        %v595 = vpack.c.b16 %v543, %v541
        %v596 = vpack.c.b16 %v544, %v542
        %v597 = vpack.c.b16 %v547, %v545
        %v598 = vpack.c.b16 %v548, %v546
        %v599 = vpack.c.b16 %v551, %v549
        %v600 = vpack.c.b16 %v552, %v550
        %v601 = vpack.c.b16 %v555, %v553
        %v602 = vpack.c.b16 %v556, %v554
        %v603 = vpack.c.b16 %v559, %v557
        %v604 = vpack.c.b16 %v560, %v558
        %v605 = vpack.c.b16 %v563, %v561
        %v606 = vpack.c.b16 %v564, %v562
        %v607 = vpack.c.b16 %v567, %v565
        %v608 = vpack.c.b16 %v568, %v566
        %v609 = vpack.c.b16 %v571, %v569
        %v610 = vpack.c.b16 %v572, %v570
        %v611 = vpack.c.b16 %v575, %v573
        %v612 = vpack.c.b16 %v576, %v574
        %v613 = vpack.c.b16 %v579, %v577
        %v614 = vpack.c.b16 %v580, %v578
        %v615 = vpack.c.b16 %v583, %v581
        %v616 = vpack.c.b16 %v584, %v582
        %v681 = vunpack.c.l.b16 %v445
        %v682 = vunpack.c.h.b16 %v445
        %v683 = vunpack.c.l.b16 %v446
        %v684 = vunpack.c.h.b16 %v446
        %v685 = vunpack.c.l.b16 %v447
        %v686 = vunpack.c.h.b16 %v447
        %v687 = vunpack.c.l.b16 %v448
        %v688 = vunpack.c.h.b16 %v448
        %v689 = vunpack.c.l.b16 %v449
        %v690 = vunpack.c.h.b16 %v449
        %v691 = vunpack.c.l.b16 %v450
        %v692 = vunpack.c.h.b16 %v450
        %v693 = vunpack.c.l.b16 %v451
        %v694 = vunpack.c.h.b16 %v451
        %v695 = vunpack.c.l.b16 %v452
        %v696 = vunpack.c.h.b16 %v452
        %v697 = vunpack.c.l.b16 %v453
        %v698 = vunpack.c.h.b16 %v453
        %v699 = vunpack.c.l.b16 %v454
        %v700 = vunpack.c.h.b16 %v454
        %v701 = vunpack.c.l.b16 %v455
        %v702 = vunpack.c.h.b16 %v455
        %v703 = vunpack.c.l.b16 %v456
        %v704 = vunpack.c.h.b16 %v456
        %v705 = vunpack.c.l.b16 %v457
        %v706 = vunpack.c.h.b16 %v457
        %v707 = vunpack.c.l.b16 %v458
        %v708 = vunpack.c.h.b16 %v458
        %v709 = vunpack.c.l.b16 %v459
        %v710 = vunpack.c.h.b16 %v459
        %v711 = vunpack.c.l.b16 %v460
        %v712 = vunpack.c.h.b16 %v460
        %v713 = vunpack.c.l.b16 %v461
        %v714 = vunpack.c.h.b16 %v461
        %v715 = vunpack.c.l.b16 %v462
        %v716 = vunpack.c.h.b16 %v462
        %v717 = vunpack.c.l.b16 %v463
        %v718 = vunpack.c.h.b16 %v463
        %v719 = vunpack.c.l.b16 %v464
        %v720 = vunpack.c.h.b16 %v464
        %v721 = vunpack.c.l.b16 %v465
        %v722 = vunpack.c.h.b16 %v465
        %v723 = vunpack.c.l.b16 %v466
        %v724 = vunpack.c.h.b16 %v466
        %v725 = vunpack.c.l.b16 %v467
        %v726 = vunpack.c.h.b16 %v467
        %v727 = vunpack.c.l.b16 %v468
        %v728 = vunpack.c.h.b16 %v468
        %v729 = vunpack.c.l.b16 %v469
        %v730 = vunpack.c.h.b16 %v469
        %v731 = vunpack.c.l.b16 %v470
        %v732 = vunpack.c.h.b16 %v470
        %v733 = vunpack.c.l.b16 %v471
        %v734 = vunpack.c.h.b16 %v471
        %v735 = vunpack.c.l.b16 %v472
        %v736 = vunpack.c.h.b16 %v472
        %v737 = vunpack.c.l.b16 %v473
        %v738 = vunpack.c.h.b16 %v473
        %v739 = vunpack.c.l.b16 %v474
        %v740 = vunpack.c.h.b16 %v474
        %v741 = vunpack.c.l.b16 %v475
        %v742 = vunpack.c.h.b16 %v475
        %v743 = vunpack.c.l.b16 %v476
        %v744 = vunpack.c.h.b16 %v476
        %v745 = vpack.c.b16 %v683, %v681
        %v746 = vpack.c.b16 %v684, %v682
        %v747 = vpack.c.b16 %v687, %v685
        %v748 = vpack.c.b16 %v688, %v686
        %v749 = vpack.c.b16 %v691, %v689
        %v750 = vpack.c.b16 %v692, %v690
        %v751 = vpack.c.b16 %v695, %v693
        %v752 = vpack.c.b16 %v696, %v694
        %v753 = vpack.c.b16 %v699, %v697
        %v754 = vpack.c.b16 %v700, %v698
        %v755 = vpack.c.b16 %v703, %v701
        %v756 = vpack.c.b16 %v704, %v702
        %v757 = vpack.c.b16 %v707, %v705
        %v758 = vpack.c.b16 %v708, %v706
        %v759 = vpack.c.b16 %v711, %v709
        %v760 = vpack.c.b16 %v712, %v710
        %v761 = vpack.c.b16 %v715, %v713
        %v762 = vpack.c.b16 %v716, %v714
        %v763 = vpack.c.b16 %v719, %v717
        %v764 = vpack.c.b16 %v720, %v718
        %v765 = vpack.c.b16 %v723, %v721
        %v766 = vpack.c.b16 %v724, %v722
        %v767 = vpack.c.b16 %v727, %v725
        %v768 = vpack.c.b16 %v728, %v726
        %v769 = vpack.c.b16 %v731, %v729
        %v770 = vpack.c.b16 %v732, %v730
        %v771 = vpack.c.b16 %v735, %v733
        %v772 = vpack.c.b16 %v736, %v734
        %v773 = vpack.c.b16 %v739, %v737
        %v774 = vpack.c.b16 %v740, %v738
        %v775 = vpack.c.b16 %v743, %v741
        %v776 = vpack.c.b16 %v744, %v742
        %809 = vmatprep.subr.bf16.mxu0 %v760
        %810 = vmatpush1.bf16.msra.mxu0 %v759
        %811 = vmatprep.subr.bf16.mxu0 %v758
        %812 = vmatpush1.bf16.msra.mxu0 %v757
        %813 = vmatprep.subr.bf16.mxu0 %v756
        %814 = vmatpush1.bf16.msra.mxu0 %v755
        %815 = vmatprep.subr.bf16.mxu0 %v754
        %816 = vmatpush1.bf16.msra.mxu0 %v753
        %817 = vmatprep.subr.bf16.mxu0 %v752
        %818 = vmatpush1.bf16.msra.mxu0 %v751
        %819 = vmatprep.subr.bf16.mxu0 %v750
        %820 = vmatpush1.bf16.msra.mxu0 %v749
        %821 = vmatprep.subr.bf16.mxu0 %v748
        %822 = vmatpush1.bf16.msra.mxu0 %v747
        %823 = vmatprep.subr.bf16.mxu0 %v746
        %824 = vmatpush1.bf16.msra.mxu0 %v745
        %825 = vmatprep.subr.bf16.mxu0 %v776
        %826 = vmatpush2.bf16.msra.mxu0 %v775
        %827 = vmatprep.subr.bf16.mxu0 %v774
        %828 = vmatpush2.bf16.msra.mxu0 %v773
        %829 = vmatprep.subr.bf16.mxu0 %v772
        %830 = vmatpush2.bf16.msra.mxu0 %v771
        %831 = vmatprep.subr.bf16.mxu0 %v770
        %832 = vmatpush2.bf16.msra.mxu0 %v769
        %833 = vmatprep.subr.bf16.mxu0 %v768
        %834 = vmatpush2.bf16.msra.mxu0 %v767
        %835 = vmatprep.subr.bf16.mxu0 %v766
        %836 = vmatpush2.bf16.msra.mxu0 %v765
        %837 = vmatprep.subr.bf16.mxu0 %v764
        %838 = vmatpush2.bf16.msra.mxu0 %v763
        %839 = vmatprep.subr.bf16.mxu0 %v762
        %840 = vmatpush2.bf16.msra.mxu0 %v761
        %841 = vmatprep.mubr.bf16.mxu0 %v586
        %842 = vmatmul.mubr.bf16.gmra.mxu0 %v585
        %v843 = vpop.f32.mrf.mxu0
        %v844 = vadd.f32 %v482, %v843
        %v845 = vpop.f32.mrf.mxu0
        %v846 = vadd.f32 %v486, %v845
        %v847 = vpop.f32.mrf.mxu0
        %v848 = vadd.f32 %v482, %v847
        %v849 = vpop.f32.mrf.mxu0
        %v850 = vadd.f32 %v486, %v849
        %851 = vmatprep.mubr.bf16.mxu0 %v588
        %852 = vmatmul.mubr.bf16.gmra.mxu0 %v587
        %v853 = vpop.f32.mrf.mxu0
        %v854 = vadd.f32 %v482, %v853
        %v855 = vpop.f32.mrf.mxu0
        %v856 = vadd.f32 %v486, %v855
        %v857 = vpop.f32.mrf.mxu0
        %v858 = vadd.f32 %v482, %v857
        %v859 = vpop.f32.mrf.mxu0
        %v860 = vadd.f32 %v486, %v859
        %861 = vmatprep.mubr.bf16.mxu0 %v590
        %862 = vmatmul.mubr.bf16.gmra.mxu0 %v589
        %v863 = vpop.f32.mrf.mxu0
        %v864 = vadd.f32 %v482, %v863
        %v865 = vpop.f32.mrf.mxu0
        %v866 = vadd.f32 %v486, %v865
        %v867 = vpop.f32.mrf.mxu0
        %v868 = vadd.f32 %v482, %v867
        %v869 = vpop.f32.mrf.mxu0
        %v870 = vadd.f32 %v486, %v869
        %871 = vmatprep.mubr.bf16.mxu0 %v592
        %872 = vmatmul.mubr.bf16.gmra.mxu0 %v591
        %v873 = vpop.f32.mrf.mxu0
        %v874 = vadd.f32 %v482, %v873
        %v875 = vpop.f32.mrf.mxu0
        %v876 = vadd.f32 %v486, %v875
        %v877 = vpop.f32.mrf.mxu0
        %v878 = vadd.f32 %v482, %v877
        %v879 = vpop.f32.mrf.mxu0
        %v880 = vadd.f32 %v486, %v879
        %881 = vmatprep.mubr.bf16.mxu0 %v594
        %882 = vmatmul.mubr.bf16.gmra.mxu0 %v593
        %v883 = vpop.f32.mrf.mxu0
        %v884 = vadd.f32 %v482, %v883
        %v885 = vpop.f32.mrf.mxu0
        %v886 = vadd.f32 %v486, %v885
        %v887 = vpop.f32.mrf.mxu0
        %v888 = vadd.f32 %v482, %v887
        %v889 = vpop.f32.mrf.mxu0
        %v890 = vadd.f32 %v486, %v889
        %891 = vmatprep.mubr.bf16.mxu0 %v596
        %892 = vmatmul.mubr.bf16.gmra.mxu0 %v595
        %v893 = vpop.f32.mrf.mxu0
        %v894 = vadd.f32 %v482, %v893
        %v895 = vpop.f32.mrf.mxu0
        %v896 = vadd.f32 %v486, %v895
        %v897 = vpop.f32.mrf.mxu0
        %v898 = vadd.f32 %v482, %v897
        %v899 = vpop.f32.mrf.mxu0
        %v900 = vadd.f32 %v486, %v899
        %901 = vmatprep.mubr.bf16.mxu0 %v598
        %902 = vmatmul.mubr.bf16.gmra.mxu0 %v597
        %v903 = vpop.f32.mrf.mxu0
        %v904 = vadd.f32 %v482, %v903
        %v905 = vpop.f32.mrf.mxu0
        %v906 = vadd.f32 %v486, %v905
        %v907 = vpop.f32.mrf.mxu0
        %v908 = vadd.f32 %v482, %v907
        %v909 = vpop.f32.mrf.mxu0
        %v910 = vadd.f32 %v486, %v909
        %911 = vmatprep.mubr.bf16.mxu0 %v600
        %912 = vmatmul.mubr.bf16.gmra.mxu0 %v599
        %v913 = vpop.f32.mrf.mxu0
        %v914 = vadd.f32 %v482, %v913
        %v915 = vpop.f32.mrf.mxu0
        %v916 = vadd.f32 %v486, %v915
        %v917 = vpop.f32.mrf.mxu0
        %v918 = vadd.f32 %v482, %v917
        %v919 = vpop.f32.mrf.mxu0
        %v920 = vadd.f32 %v486, %v919
        %921 = vmatprep.mubr.bf16.mxu0 %v602
        %922 = vmatmul.mubr.bf16.gmra.mxu0 %v601
        %v923 = vpop.f32.mrf.mxu0
        %v924 = vadd.f32 %v482, %v923
        %v925 = vpop.f32.mrf.mxu0
        %v926 = vadd.f32 %v486, %v925
        %v927 = vpop.f32.mrf.mxu0
        %v928 = vadd.f32 %v482, %v927
        %v929 = vpop.f32.mrf.mxu0
        %v930 = vadd.f32 %v486, %v929
        %931 = vmatprep.mubr.bf16.mxu0 %v604
        %932 = vmatmul.mubr.bf16.gmra.mxu0 %v603
        %v933 = vpop.f32.mrf.mxu0
        %v934 = vadd.f32 %v482, %v933
        %v935 = vpop.f32.mrf.mxu0
        %v936 = vadd.f32 %v486, %v935
        %v937 = vpop.f32.mrf.mxu0
        %v938 = vadd.f32 %v482, %v937
        %v939 = vpop.f32.mrf.mxu0
        %v940 = vadd.f32 %v486, %v939
        %941 = vmatprep.mubr.bf16.mxu0 %v606
        %942 = vmatmul.mubr.bf16.gmra.mxu0 %v605
        %v943 = vpop.f32.mrf.mxu0
        %v944 = vadd.f32 %v482, %v943
        %v945 = vpop.f32.mrf.mxu0
        %v946 = vadd.f32 %v486, %v945
        %v947 = vpop.f32.mrf.mxu0
        %v948 = vadd.f32 %v482, %v947
        %v949 = vpop.f32.mrf.mxu0
        %v950 = vadd.f32 %v486, %v949
        %951 = vmatprep.mubr.bf16.mxu0 %v608
        %952 = vmatmul.mubr.bf16.gmra.mxu0 %v607
        %v953 = vpop.f32.mrf.mxu0
        %v954 = vadd.f32 %v482, %v953
        %v955 = vpop.f32.mrf.mxu0
        %v956 = vadd.f32 %v486, %v955
        %v957 = vpop.f32.mrf.mxu0
        %v958 = vadd.f32 %v482, %v957
        %v959 = vpop.f32.mrf.mxu0
        %v960 = vadd.f32 %v486, %v959
        %961 = vmatprep.mubr.bf16.mxu0 %v610
        %962 = vmatmul.mubr.bf16.gmra.mxu0 %v609
        %v963 = vpop.f32.mrf.mxu0
        %v964 = vadd.f32 %v482, %v963
        %v965 = vpop.f32.mrf.mxu0
        %v966 = vadd.f32 %v486, %v965
        %v967 = vpop.f32.mrf.mxu0
        %v968 = vadd.f32 %v482, %v967
        %v969 = vpop.f32.mrf.mxu0
        %v970 = vadd.f32 %v486, %v969
        %971 = vmatprep.mubr.bf16.mxu0 %v612
        %972 = vmatmul.mubr.bf16.gmra.mxu0 %v611
        %v973 = vpop.f32.mrf.mxu0
        %v974 = vadd.f32 %v482, %v973
        %v975 = vpop.f32.mrf.mxu0
        %v976 = vadd.f32 %v486, %v975
        %v977 = vpop.f32.mrf.mxu0
        %v978 = vadd.f32 %v482, %v977
        %v979 = vpop.f32.mrf.mxu0
        %v980 = vadd.f32 %v486, %v979
        %981 = vmatprep.mubr.bf16.mxu0 %v614
        %982 = vmatmul.mubr.bf16.gmra.mxu0 %v613
        %v983 = vpop.f32.mrf.mxu0
        %v984 = vadd.f32 %v482, %v983
        %v985 = vpop.f32.mrf.mxu0
        %v986 = vadd.f32 %v486, %v985
        %v987 = vpop.f32.mrf.mxu0
        %v988 = vadd.f32 %v482, %v987
        %v989 = vpop.f32.mrf.mxu0
        %v990 = vadd.f32 %v486, %v989
        %991 = vmatprep.mubr.bf16.mxu0 %v616
        %992 = vmatmul.mubr.bf16.gmra.mxu0 %v615
        %v993 = vpop.f32.mrf.mxu0
        %v994 = vadd.f32 %v482, %v993
        %v995 = vpop.f32.mrf.mxu0
        %v996 = vadd.f32 %v486, %v995
        %v997 = vpop.f32.mrf.mxu0
        %v998 = vadd.f32 %v482, %v997
        %v999 = vpop.f32.mrf.mxu0
        %v1000 = vadd.f32 %v486, %v999
        %1001 = vdwg.mxu0
        %v1002 = vld [vmem:[#allocation8] sm:$0xff]
        %v1003 = vld [vmem:[#allocation8 + $0x8] sm:$0xff]
        %v1004 = vld [vmem:[#allocation8 + $0x10] sm:$0xff]
        %v1005 = vld [vmem:[#allocation8 + $0x18] sm:$0xff]
        %v1006 = vld [vmem:[#allocation8 + $0x20] sm:$0xff]
        %v1007 = vld [vmem:[#allocation8 + $0x28] sm:$0xff]
        %v1008 = vld [vmem:[#allocation8 + $0x30] sm:$0xff]
        %v1009 = vld [vmem:[#allocation8 + $0x38] sm:$0xff]
        %v1010 = vld [vmem:[#allocation8 + $0x40] sm:$0xff]
        %v1011 = vld [vmem:[#allocation8 + $0x48] sm:$0xff]
        %v1012 = vld [vmem:[#allocation8 + $0x50] sm:$0xff]
        %v1013 = vld [vmem:[#allocation8 + $0x58] sm:$0xff]
        %v1014 = vld [vmem:[#allocation8 + $0x60] sm:$0xff]
        %v1015 = vld [vmem:[#allocation8 + $0x68] sm:$0xff]
        %v1016 = vld [vmem:[#allocation8 + $0x70] sm:$0xff]
        %v1017 = vld [vmem:[#allocation8 + $0x78] sm:$0xff]
        %v1018 = vld [vmem:[#allocation8 + $0x80] sm:$0xff]
        %v1019 = vld [vmem:[#allocation8 + $0x88] sm:$0xff]
        %v1020 = vld [vmem:[#allocation8 + $0x90] sm:$0xff]
        %v1021 = vld [vmem:[#allocation8 + $0x98] sm:$0xff]
        %v1022 = vld [vmem:[#allocation8 + $0xa0] sm:$0xff]
        %v1023 = vld [vmem:[#allocation8 + $0xa8] sm:$0xff]
        %v1024 = vld [vmem:[#allocation8 + $0xb0] sm:$0xff]
        %v1025 = vld [vmem:[#allocation8 + $0xb8] sm:$0xff]
        %v1026 = vld [vmem:[#allocation8 + $0xc0] sm:$0xff]
        %v1027 = vld [vmem:[#allocation8 + $0xc8] sm:$0xff]
        %v1028 = vld [vmem:[#allocation8 + $0xd0] sm:$0xff]
        %v1029 = vld [vmem:[#allocation8 + $0xd8] sm:$0xff]
        %v1030 = vld [vmem:[#allocation8 + $0xe0] sm:$0xff]
        %v1031 = vld [vmem:[#allocation8 + $0xe8] sm:$0xff]
        %v1032 = vld [vmem:[#allocation8 + $0xf0] sm:$0xff]
        %v1033 = vld [vmem:[#allocation8 + $0xf8] sm:$0xff]
        %v1034 = vld [vmem:[%s5] sm:$0x3]
        %v1036 = vlaneseq
        %v1037 = vshrl.u32 %v1036, 7
        %v1038 = vsub.s32 0, %v1037
        %v1039 = vrot.slane %v1034, %v1038
        %v1040 = vlaneseq
        %v1041 = vshrl.u32 %v1040, 7
        %v1042 = vsub.s32 1, %v1041
        %v1043 = vrot.slane %v1034, %v1042
        %v1078 = vunpack.c.l.b16 %v1002
        %v1079 = vunpack.c.h.b16 %v1002
        %v1080 = vunpack.c.l.b16 %v1003
        %v1081 = vunpack.c.h.b16 %v1003
        %v1082 = vunpack.c.l.b16 %v1004
        %v1083 = vunpack.c.h.b16 %v1004
        %v1084 = vunpack.c.l.b16 %v1005
        %v1085 = vunpack.c.h.b16 %v1005
        %v1086 = vunpack.c.l.b16 %v1006
        %v1087 = vunpack.c.h.b16 %v1006
        %v1088 = vunpack.c.l.b16 %v1007
        %v1089 = vunpack.c.h.b16 %v1007
        %v1090 = vunpack.c.l.b16 %v1008
        %v1091 = vunpack.c.h.b16 %v1008
        %v1092 = vunpack.c.l.b16 %v1009
        %v1093 = vunpack.c.h.b16 %v1009
        %v1094 = vunpack.c.l.b16 %v1010
        %v1095 = vunpack.c.h.b16 %v1010
        %v1096 = vunpack.c.l.b16 %v1011
        %v1097 = vunpack.c.h.b16 %v1011
        %v1098 = vunpack.c.l.b16 %v1012
        %v1099 = vunpack.c.h.b16 %v1012
        %v1100 = vunpack.c.l.b16 %v1013
        %v1101 = vunpack.c.h.b16 %v1013
        %v1102 = vunpack.c.l.b16 %v1014
        %v1103 = vunpack.c.h.b16 %v1014
        %v1104 = vunpack.c.l.b16 %v1015
        %v1105 = vunpack.c.h.b16 %v1015
        %v1106 = vunpack.c.l.b16 %v1016
        %v1107 = vunpack.c.h.b16 %v1016
        %v1108 = vunpack.c.l.b16 %v1017
        %v1109 = vunpack.c.h.b16 %v1017
        %v1110 = vunpack.c.l.b16 %v1018
        %v1111 = vunpack.c.h.b16 %v1018
        %v1112 = vunpack.c.l.b16 %v1019
        %v1113 = vunpack.c.h.b16 %v1019
        %v1114 = vunpack.c.l.b16 %v1020
        %v1115 = vunpack.c.h.b16 %v1020
        %v1116 = vunpack.c.l.b16 %v1021
        %v1117 = vunpack.c.h.b16 %v1021
        %v1118 = vunpack.c.l.b16 %v1022
        %v1119 = vunpack.c.h.b16 %v1022
        %v1120 = vunpack.c.l.b16 %v1023
        %v1121 = vunpack.c.h.b16 %v1023
        %v1122 = vunpack.c.l.b16 %v1024
        %v1123 = vunpack.c.h.b16 %v1024
        %v1124 = vunpack.c.l.b16 %v1025
        %v1125 = vunpack.c.h.b16 %v1025
        %v1126 = vunpack.c.l.b16 %v1026
        %v1127 = vunpack.c.h.b16 %v1026
        %v1128 = vunpack.c.l.b16 %v1027
        %v1129 = vunpack.c.h.b16 %v1027
        %v1130 = vunpack.c.l.b16 %v1028
        %v1131 = vunpack.c.h.b16 %v1028
        %v1132 = vunpack.c.l.b16 %v1029
        %v1133 = vunpack.c.h.b16 %v1029
        %v1134 = vunpack.c.l.b16 %v1030
        %v1135 = vunpack.c.h.b16 %v1030
        %v1136 = vunpack.c.l.b16 %v1031
        %v1137 = vunpack.c.h.b16 %v1031
        %v1138 = vunpack.c.l.b16 %v1032
        %v1139 = vunpack.c.h.b16 %v1032
        %v1140 = vunpack.c.l.b16 %v1033
        %v1141 = vunpack.c.h.b16 %v1033
        %v1142 = vpack.c.b16 %v1080, %v1078
        %v1143 = vpack.c.b16 %v1081, %v1079
        %v1144 = vpack.c.b16 %v1084, %v1082
        %v1145 = vpack.c.b16 %v1085, %v1083
        %v1146 = vpack.c.b16 %v1088, %v1086
        %v1147 = vpack.c.b16 %v1089, %v1087
        %v1148 = vpack.c.b16 %v1092, %v1090
        %v1149 = vpack.c.b16 %v1093, %v1091
        %v1150 = vpack.c.b16 %v1096, %v1094
        %v1151 = vpack.c.b16 %v1097, %v1095
        %v1152 = vpack.c.b16 %v1100, %v1098
        %v1153 = vpack.c.b16 %v1101, %v1099
        %v1154 = vpack.c.b16 %v1104, %v1102
        %v1155 = vpack.c.b16 %v1105, %v1103
        %v1156 = vpack.c.b16 %v1108, %v1106
        %v1157 = vpack.c.b16 %v1109, %v1107
        %v1158 = vpack.c.b16 %v1112, %v1110
        %v1159 = vpack.c.b16 %v1113, %v1111
        %v1160 = vpack.c.b16 %v1116, %v1114
        %v1161 = vpack.c.b16 %v1117, %v1115
        %v1162 = vpack.c.b16 %v1120, %v1118
        %v1163 = vpack.c.b16 %v1121, %v1119
        %v1164 = vpack.c.b16 %v1124, %v1122
        %v1165 = vpack.c.b16 %v1125, %v1123
        %v1166 = vpack.c.b16 %v1128, %v1126
        %v1167 = vpack.c.b16 %v1129, %v1127
        %v1168 = vpack.c.b16 %v1132, %v1130
        %v1169 = vpack.c.b16 %v1133, %v1131
        %v1170 = vpack.c.b16 %v1136, %v1134
        %v1171 = vpack.c.b16 %v1137, %v1135
        %v1172 = vpack.c.b16 %v1140, %v1138
        %v1173 = vpack.c.b16 %v1141, %v1139
        %1206 = vmatprep.subr.bf16.mxu0 %v1157
        %1207 = vmatpush1.bf16.msra.mxu0 %v1156
        %1208 = vmatprep.subr.bf16.mxu0 %v1155
        %1209 = vmatpush1.bf16.msra.mxu0 %v1154
        %1210 = vmatprep.subr.bf16.mxu0 %v1153
        %1211 = vmatpush1.bf16.msra.mxu0 %v1152
        %1212 = vmatprep.subr.bf16.mxu0 %v1151
        %1213 = vmatpush1.bf16.msra.mxu0 %v1150
        %1214 = vmatprep.subr.bf16.mxu0 %v1149
        %1215 = vmatpush1.bf16.msra.mxu0 %v1148
        %1216 = vmatprep.subr.bf16.mxu0 %v1147
        %1217 = vmatpush1.bf16.msra.mxu0 %v1146
        %1218 = vmatprep.subr.bf16.mxu0 %v1145
        %1219 = vmatpush1.bf16.msra.mxu0 %v1144
        %1220 = vmatprep.subr.bf16.mxu0 %v1143
        %1221 = vmatpush1.bf16.msra.mxu0 %v1142
        %1222 = vmatprep.subr.bf16.mxu0 %v1173
        %1223 = vmatpush2.bf16.msra.mxu0 %v1172
        %1224 = vmatprep.subr.bf16.mxu0 %v1171
        %1225 = vmatpush2.bf16.msra.mxu0 %v1170
        %1226 = vmatprep.subr.bf16.mxu0 %v1169
        %1227 = vmatpush2.bf16.msra.mxu0 %v1168
        %1228 = vmatprep.subr.bf16.mxu0 %v1167
        %1229 = vmatpush2.bf16.msra.mxu0 %v1166
        %1230 = vmatprep.subr.bf16.mxu0 %v1165
        %1231 = vmatpush2.bf16.msra.mxu0 %v1164
        %1232 = vmatprep.subr.bf16.mxu0 %v1163
        %1233 = vmatpush2.bf16.msra.mxu0 %v1162
        %1234 = vmatprep.subr.bf16.mxu0 %v1161
        %1235 = vmatpush2.bf16.msra.mxu0 %v1160
        %1236 = vmatprep.subr.bf16.mxu0 %v1159
        %1237 = vmatpush2.bf16.msra.mxu0 %v1158
        %1238 = vmatprep.mubr.bf16.mxu0 %v586
        %1239 = vmatmul.mubr.bf16.gmra.mxu0 %v585
        %v1240 = vpop.f32.mrf.mxu0
        %v1241 = vadd.f32 %v1039, %v1240
        %v1242 = vpop.f32.mrf.mxu0
        %v1243 = vadd.f32 %v1043, %v1242
        %v1244 = vpop.f32.mrf.mxu0
        %v1245 = vadd.f32 %v1039, %v1244
        %v1246 = vpop.f32.mrf.mxu0
        %v1247 = vadd.f32 %v1043, %v1246
        %1248 = vmatprep.mubr.bf16.mxu0 %v588
        %1249 = vmatmul.mubr.bf16.gmra.mxu0 %v587
        %v1250 = vpop.f32.mrf.mxu0
        %v1251 = vadd.f32 %v1039, %v1250
        %v1252 = vpop.f32.mrf.mxu0
        %v1253 = vadd.f32 %v1043, %v1252
        %v1254 = vpop.f32.mrf.mxu0
        %v1255 = vadd.f32 %v1039, %v1254
        %v1256 = vpop.f32.mrf.mxu0
        %v1257 = vadd.f32 %v1043, %v1256
        %1258 = vmatprep.mubr.bf16.mxu0 %v590
        %1259 = vmatmul.mubr.bf16.gmra.mxu0 %v589
        %v1260 = vpop.f32.mrf.mxu0
        %v1261 = vadd.f32 %v1039, %v1260
        %v1262 = vpop.f32.mrf.mxu0
        %v1263 = vadd.f32 %v1043, %v1262
        %v1264 = vpop.f32.mrf.mxu0
        %v1265 = vadd.f32 %v1039, %v1264
        %v1266 = vpop.f32.mrf.mxu0
        %v1267 = vadd.f32 %v1043, %v1266
        %1268 = vmatprep.mubr.bf16.mxu0 %v592
        %1269 = vmatmul.mubr.bf16.gmra.mxu0 %v591
        %v1270 = vpop.f32.mrf.mxu0
        %v1271 = vadd.f32 %v1039, %v1270
        %v1272 = vpop.f32.mrf.mxu0
        %v1273 = vadd.f32 %v1043, %v1272
        %v1274 = vpop.f32.mrf.mxu0
        %v1275 = vadd.f32 %v1039, %v1274
        %v1276 = vpop.f32.mrf.mxu0
        %v1277 = vadd.f32 %v1043, %v1276
        %1278 = vmatprep.mubr.bf16.mxu0 %v594
        %1279 = vmatmul.mubr.bf16.gmra.mxu0 %v593
        %v1280 = vpop.f32.mrf.mxu0
        %v1281 = vadd.f32 %v1039, %v1280
        %v1282 = vpop.f32.mrf.mxu0
        %v1283 = vadd.f32 %v1043, %v1282
        %v1284 = vpop.f32.mrf.mxu0
        %v1285 = vadd.f32 %v1039, %v1284
        %v1286 = vpop.f32.mrf.mxu0
        %v1287 = vadd.f32 %v1043, %v1286
        %1288 = vmatprep.mubr.bf16.mxu0 %v596
        %1289 = vmatmul.mubr.bf16.gmra.mxu0 %v595
        %v1290 = vpop.f32.mrf.mxu0
        %v1291 = vadd.f32 %v1039, %v1290
        %v1292 = vpop.f32.mrf.mxu0
        %v1293 = vadd.f32 %v1043, %v1292
        %v1294 = vpop.f32.mrf.mxu0
        %v1295 = vadd.f32 %v1039, %v1294
        %v1296 = vpop.f32.mrf.mxu0
        %v1297 = vadd.f32 %v1043, %v1296
        %1298 = vmatprep.mubr.bf16.mxu0 %v598
        %1299 = vmatmul.mubr.bf16.gmra.mxu0 %v597
        %v1300 = vpop.f32.mrf.mxu0
        %v1301 = vadd.f32 %v1039, %v1300
        %v1302 = vpop.f32.mrf.mxu0
        %v1303 = vadd.f32 %v1043, %v1302
        %v1304 = vpop.f32.mrf.mxu0
        %v1305 = vadd.f32 %v1039, %v1304
        %v1306 = vpop.f32.mrf.mxu0
        %v1307 = vadd.f32 %v1043, %v1306
        %1308 = vmatprep.mubr.bf16.mxu0 %v600
        %1309 = vmatmul.mubr.bf16.gmra.mxu0 %v599
        %v1310 = vpop.f32.mrf.mxu0
        %v1311 = vadd.f32 %v1039, %v1310
        %v1312 = vpop.f32.mrf.mxu0
        %v1313 = vadd.f32 %v1043, %v1312
        %v1314 = vpop.f32.mrf.mxu0
        %v1315 = vadd.f32 %v1039, %v1314
        %v1316 = vpop.f32.mrf.mxu0
        %v1317 = vadd.f32 %v1043, %v1316
        %1318 = vmatprep.mubr.bf16.mxu0 %v602
        %1319 = vmatmul.mubr.bf16.gmra.mxu0 %v601
        %v1320 = vpop.f32.mrf.mxu0
        %v1321 = vadd.f32 %v1039, %v1320
        %v1322 = vpop.f32.mrf.mxu0
        %v1323 = vadd.f32 %v1043, %v1322
        %v1324 = vpop.f32.mrf.mxu0
        %v1325 = vadd.f32 %v1039, %v1324
        %v1326 = vpop.f32.mrf.mxu0
        %v1327 = vadd.f32 %v1043, %v1326
        %1328 = vmatprep.mubr.bf16.mxu0 %v604
        %1329 = vmatmul.mubr.bf16.gmra.mxu0 %v603
        %v1330 = vpop.f32.mrf.mxu0
        %v1331 = vadd.f32 %v1039, %v1330
        %v1332 = vpop.f32.mrf.mxu0
        %v1333 = vadd.f32 %v1043, %v1332
        %v1334 = vpop.f32.mrf.mxu0
        %v1335 = vadd.f32 %v1039, %v1334
        %v1336 = vpop.f32.mrf.mxu0
        %v1337 = vadd.f32 %v1043, %v1336
        %1338 = vmatprep.mubr.bf16.mxu0 %v606
        %1339 = vmatmul.mubr.bf16.gmra.mxu0 %v605
        %v1340 = vpop.f32.mrf.mxu0
        %v1341 = vadd.f32 %v1039, %v1340
        %v1342 = vpop.f32.mrf.mxu0
        %v1343 = vadd.f32 %v1043, %v1342
        %v1344 = vpop.f32.mrf.mxu0
        %v1345 = vadd.f32 %v1039, %v1344
        %v1346 = vpop.f32.mrf.mxu0
        %v1347 = vadd.f32 %v1043, %v1346
        %1348 = vmatprep.mubr.bf16.mxu0 %v608
        %1349 = vmatmul.mubr.bf16.gmra.mxu0 %v607
        %v1350 = vpop.f32.mrf.mxu0
        %v1351 = vadd.f32 %v1039, %v1350
        %v1352 = vpop.f32.mrf.mxu0
        %v1353 = vadd.f32 %v1043, %v1352
        %v1354 = vpop.f32.mrf.mxu0
        %v1355 = vadd.f32 %v1039, %v1354
        %v1356 = vpop.f32.mrf.mxu0
        %v1357 = vadd.f32 %v1043, %v1356
        %1358 = vmatprep.mubr.bf16.mxu0 %v610
        %1359 = vmatmul.mubr.bf16.gmra.mxu0 %v609
        %v1360 = vpop.f32.mrf.mxu0
        %v1361 = vadd.f32 %v1039, %v1360
        %v1362 = vpop.f32.mrf.mxu0
        %v1363 = vadd.f32 %v1043, %v1362
        %v1364 = vpop.f32.mrf.mxu0
        %v1365 = vadd.f32 %v1039, %v1364
        %v1366 = vpop.f32.mrf.mxu0
        %v1367 = vadd.f32 %v1043, %v1366
        %1368 = vmatprep.mubr.bf16.mxu0 %v612
        %1369 = vmatmul.mubr.bf16.gmra.mxu0 %v611
        %v1370 = vpop.f32.mrf.mxu0
        %v1371 = vadd.f32 %v1039, %v1370
        %v1372 = vpop.f32.mrf.mxu0
        %v1373 = vadd.f32 %v1043, %v1372
        %v1374 = vpop.f32.mrf.mxu0
        %v1375 = vadd.f32 %v1039, %v1374
        %v1376 = vpop.f32.mrf.mxu0
        %v1377 = vadd.f32 %v1043, %v1376
        %1378 = vmatprep.mubr.bf16.mxu0 %v614
        %1379 = vmatmul.mubr.bf16.gmra.mxu0 %v613
        %v1380 = vpop.f32.mrf.mxu0
        %v1381 = vadd.f32 %v1039, %v1380
        %v1382 = vpop.f32.mrf.mxu0
        %v1383 = vadd.f32 %v1043, %v1382
        %v1384 = vpop.f32.mrf.mxu0
        %v1385 = vadd.f32 %v1039, %v1384
        %v1386 = vpop.f32.mrf.mxu0
        %v1387 = vadd.f32 %v1043, %v1386
        %1388 = vmatprep.mubr.bf16.mxu0 %v616
        %1389 = vmatmul.mubr.bf16.gmra.mxu0 %v615
        %v1390 = vpop.f32.mrf.mxu0
        %v1391 = vadd.f32 %v1039, %v1390
        %v1392 = vpop.f32.mrf.mxu0
        %v1393 = vadd.f32 %v1043, %v1392
        %v1394 = vpop.f32.mrf.mxu0
        %v1395 = vadd.f32 %v1039, %v1394
        %v1396 = vpop.f32.mrf.mxu0
        %v1397 = vadd.f32 %v1043, %v1396
        %1398 = vdwg.mxu0
        %v1399 = vld [vmem:[#allocation9] sm:$0xff]
        %v1400 = vld [vmem:[#allocation9 + $0x8] sm:$0xff]
        %v1401 = vld [vmem:[#allocation9 + $0x10] sm:$0xff]
        %v1402 = vld [vmem:[#allocation9 + $0x18] sm:$0xff]
        %v1403 = vld [vmem:[#allocation9 + $0x20] sm:$0xff]
        %v1404 = vld [vmem:[#allocation9 + $0x28] sm:$0xff]
        %v1405 = vld [vmem:[#allocation9 + $0x30] sm:$0xff]
        %v1406 = vld [vmem:[#allocation9 + $0x38] sm:$0xff]
        %v1407 = vld [vmem:[#allocation9 + $0x40] sm:$0xff]
        %v1408 = vld [vmem:[#allocation9 + $0x48] sm:$0xff]
        %v1409 = vld [vmem:[#allocation9 + $0x50] sm:$0xff]
        %v1410 = vld [vmem:[#allocation9 + $0x58] sm:$0xff]
        %v1411 = vld [vmem:[#allocation9 + $0x60] sm:$0xff]
        %v1412 = vld [vmem:[#allocation9 + $0x68] sm:$0xff]
        %v1413 = vld [vmem:[#allocation9 + $0x70] sm:$0xff]
        %v1414 = vld [vmem:[#allocation9 + $0x78] sm:$0xff]
        %v1415 = vld [vmem:[#allocation9 + $0x80] sm:$0xff]
        %v1416 = vld [vmem:[#allocation9 + $0x88] sm:$0xff]
        %v1417 = vld [vmem:[#allocation9 + $0x90] sm:$0xff]
        %v1418 = vld [vmem:[#allocation9 + $0x98] sm:$0xff]
        %v1419 = vld [vmem:[#allocation9 + $0xa0] sm:$0xff]
        %v1420 = vld [vmem:[#allocation9 + $0xa8] sm:$0xff]
        %v1421 = vld [vmem:[#allocation9 + $0xb0] sm:$0xff]
        %v1422 = vld [vmem:[#allocation9 + $0xb8] sm:$0xff]
        %v1423 = vld [vmem:[#allocation9 + $0xc0] sm:$0xff]
        %v1424 = vld [vmem:[#allocation9 + $0xc8] sm:$0xff]
        %v1425 = vld [vmem:[#allocation9 + $0xd0] sm:$0xff]
        %v1426 = vld [vmem:[#allocation9 + $0xd8] sm:$0xff]
        %v1427 = vld [vmem:[#allocation9 + $0xe0] sm:$0xff]
        %v1428 = vld [vmem:[#allocation9 + $0xe8] sm:$0xff]
        %v1429 = vld [vmem:[#allocation9 + $0xf0] sm:$0xff]
        %v1430 = vld [vmem:[#allocation9 + $0xf8] sm:$0xff]
        %v1431 = vld [vmem:[%s6] sm:$0x3]
        %v1433 = vlaneseq
        %v1434 = vshrl.u32 %v1433, 7
        %v1435 = vsub.s32 0, %v1434
        %v1436 = vrot.slane %v1431, %v1435
        %v1437 = vlaneseq
        %v1438 = vshrl.u32 %v1437, 7
        %v1439 = vsub.s32 1, %v1438
        %v1440 = vrot.slane %v1431, %v1439
        %v1475 = vunpack.c.l.b16 %v1399
        %v1476 = vunpack.c.h.b16 %v1399
        %v1477 = vunpack.c.l.b16 %v1400
        %v1478 = vunpack.c.h.b16 %v1400
        %v1479 = vunpack.c.l.b16 %v1401
        %v1480 = vunpack.c.h.b16 %v1401
        %v1481 = vunpack.c.l.b16 %v1402
        %v1482 = vunpack.c.h.b16 %v1402
        %v1483 = vunpack.c.l.b16 %v1403
        %v1484 = vunpack.c.h.b16 %v1403
        %v1485 = vunpack.c.l.b16 %v1404
        %v1486 = vunpack.c.h.b16 %v1404
        %v1487 = vunpack.c.l.b16 %v1405
        %v1488 = vunpack.c.h.b16 %v1405
        %v1489 = vunpack.c.l.b16 %v1406
        %v1490 = vunpack.c.h.b16 %v1406
        %v1491 = vunpack.c.l.b16 %v1407
        %v1492 = vunpack.c.h.b16 %v1407
        %v1493 = vunpack.c.l.b16 %v1408
        %v1494 = vunpack.c.h.b16 %v1408
        %v1495 = vunpack.c.l.b16 %v1409
        %v1496 = vunpack.c.h.b16 %v1409
        %v1497 = vunpack.c.l.b16 %v1410
        %v1498 = vunpack.c.h.b16 %v1410
        %v1499 = vunpack.c.l.b16 %v1411
        %v1500 = vunpack.c.h.b16 %v1411
        %v1501 = vunpack.c.l.b16 %v1412
        %v1502 = vunpack.c.h.b16 %v1412
        %v1503 = vunpack.c.l.b16 %v1413
        %v1504 = vunpack.c.h.b16 %v1413
        %v1505 = vunpack.c.l.b16 %v1414
        %v1506 = vunpack.c.h.b16 %v1414
        %v1507 = vunpack.c.l.b16 %v1415
        %v1508 = vunpack.c.h.b16 %v1415
        %v1509 = vunpack.c.l.b16 %v1416
        %v1510 = vunpack.c.h.b16 %v1416
        %v1511 = vunpack.c.l.b16 %v1417
        %v1512 = vunpack.c.h.b16 %v1417
        %v1513 = vunpack.c.l.b16 %v1418
        %v1514 = vunpack.c.h.b16 %v1418
        %v1515 = vunpack.c.l.b16 %v1419
        %v1516 = vunpack.c.h.b16 %v1419
        %v1517 = vunpack.c.l.b16 %v1420
        %v1518 = vunpack.c.h.b16 %v1420
        %v1519 = vunpack.c.l.b16 %v1421
        %v1520 = vunpack.c.h.b16 %v1421
        %v1521 = vunpack.c.l.b16 %v1422
        %v1522 = vunpack.c.h.b16 %v1422
        %v1523 = vunpack.c.l.b16 %v1423
        %v1524 = vunpack.c.h.b16 %v1423
        %v1525 = vunpack.c.l.b16 %v1424
        %v1526 = vunpack.c.h.b16 %v1424
        %v1527 = vunpack.c.l.b16 %v1425
        %v1528 = vunpack.c.h.b16 %v1425
        %v1529 = vunpack.c.l.b16 %v1426
        %v1530 = vunpack.c.h.b16 %v1426
        %v1531 = vunpack.c.l.b16 %v1427
        %v1532 = vunpack.c.h.b16 %v1427
        %v1533 = vunpack.c.l.b16 %v1428
        %v1534 = vunpack.c.h.b16 %v1428
        %v1535 = vunpack.c.l.b16 %v1429
        %v1536 = vunpack.c.h.b16 %v1429
        %v1537 = vunpack.c.l.b16 %v1430
        %v1538 = vunpack.c.h.b16 %v1430
        %v1539 = vpack.c.b16 %v1477, %v1475
        %v1540 = vpack.c.b16 %v1478, %v1476
        %v1541 = vpack.c.b16 %v1481, %v1479
        %v1542 = vpack.c.b16 %v1482, %v1480
        %v1543 = vpack.c.b16 %v1485, %v1483
        %v1544 = vpack.c.b16 %v1486, %v1484
        %v1545 = vpack.c.b16 %v1489, %v1487
        %v1546 = vpack.c.b16 %v1490, %v1488
        %v1547 = vpack.c.b16 %v1493, %v1491
        %v1548 = vpack.c.b16 %v1494, %v1492
        %v1549 = vpack.c.b16 %v1497, %v1495
        %v1550 = vpack.c.b16 %v1498, %v1496
        %v1551 = vpack.c.b16 %v1501, %v1499
        %v1552 = vpack.c.b16 %v1502, %v1500
        %v1553 = vpack.c.b16 %v1505, %v1503
        %v1554 = vpack.c.b16 %v1506, %v1504
        %v1555 = vpack.c.b16 %v1509, %v1507
        %v1556 = vpack.c.b16 %v1510, %v1508
        %v1557 = vpack.c.b16 %v1513, %v1511
        %v1558 = vpack.c.b16 %v1514, %v1512
        %v1559 = vpack.c.b16 %v1517, %v1515
        %v1560 = vpack.c.b16 %v1518, %v1516
        %v1561 = vpack.c.b16 %v1521, %v1519
        %v1562 = vpack.c.b16 %v1522, %v1520
        %v1563 = vpack.c.b16 %v1525, %v1523
        %v1564 = vpack.c.b16 %v1526, %v1524
        %v1565 = vpack.c.b16 %v1529, %v1527
        %v1566 = vpack.c.b16 %v1530, %v1528
        %v1567 = vpack.c.b16 %v1533, %v1531
        %v1568 = vpack.c.b16 %v1534, %v1532
        %v1569 = vpack.c.b16 %v1537, %v1535
        %v1570 = vpack.c.b16 %v1538, %v1536
        %1603 = vmatprep.subr.bf16.mxu0 %v1554
        %1604 = vmatpush1.bf16.msra.mxu0 %v1553
        %1605 = vmatprep.subr.bf16.mxu0 %v1552
        %1606 = vmatpush1.bf16.msra.mxu0 %v1551
        %1607 = vmatprep.subr.bf16.mxu0 %v1550
        %1608 = vmatpush1.bf16.msra.mxu0 %v1549
        %1609 = vmatprep.subr.bf16.mxu0 %v1548
        %1610 = vmatpush1.bf16.msra.mxu0 %v1547
        %1611 = vmatprep.subr.bf16.mxu0 %v1546
        %1612 = vmatpush1.bf16.msra.mxu0 %v1545
        %1613 = vmatprep.subr.bf16.mxu0 %v1544
        %1614 = vmatpush1.bf16.msra.mxu0 %v1543
        %1615 = vmatprep.subr.bf16.mxu0 %v1542
        %1616 = vmatpush1.bf16.msra.mxu0 %v1541
        %1617 = vmatprep.subr.bf16.mxu0 %v1540
        %1618 = vmatpush1.bf16.msra.mxu0 %v1539
        %1619 = vmatprep.subr.bf16.mxu0 %v1570
        %1620 = vmatpush2.bf16.msra.mxu0 %v1569
        %1621 = vmatprep.subr.bf16.mxu0 %v1568
        %1622 = vmatpush2.bf16.msra.mxu0 %v1567
        %1623 = vmatprep.subr.bf16.mxu0 %v1566
        %1624 = vmatpush2.bf16.msra.mxu0 %v1565
        %1625 = vmatprep.subr.bf16.mxu0 %v1564
        %1626 = vmatpush2.bf16.msra.mxu0 %v1563
        %1627 = vmatprep.subr.bf16.mxu0 %v1562
        %1628 = vmatpush2.bf16.msra.mxu0 %v1561
        %1629 = vmatprep.subr.bf16.mxu0 %v1560
        %1630 = vmatpush2.bf16.msra.mxu0 %v1559
        %1631 = vmatprep.subr.bf16.mxu0 %v1558
        %1632 = vmatpush2.bf16.msra.mxu0 %v1557
        %1633 = vmatprep.subr.bf16.mxu0 %v1556
        %1634 = vmatpush2.bf16.msra.mxu0 %v1555
        %1635 = vmatprep.mubr.bf16.mxu0 %v586
        %1636 = vmatmul.mubr.bf16.gmra.mxu0 %v585
        %v1637 = vpop.f32.mrf.mxu0
        %v1638 = vadd.f32 %v1436, %v1637
        %v1639 = vpop.f32.mrf.mxu0
        %v1640 = vadd.f32 %v1440, %v1639
        %v1641 = vpop.f32.mrf.mxu0
        %v1642 = vadd.f32 %v1436, %v1641
        %v1643 = vpop.f32.mrf.mxu0
        %v1644 = vadd.f32 %v1440, %v1643
        %1645 = vmatprep.mubr.bf16.mxu0 %v588
        %1646 = vmatmul.mubr.bf16.gmra.mxu0 %v587
        %v1647 = vpop.f32.mrf.mxu0
        %v1648 = vadd.f32 %v1436, %v1647
        %v1649 = vpop.f32.mrf.mxu0
        %v1650 = vadd.f32 %v1440, %v1649
        %v1651 = vpop.f32.mrf.mxu0
        %v1652 = vadd.f32 %v1436, %v1651
        %v1653 = vpop.f32.mrf.mxu0
        %v1654 = vadd.f32 %v1440, %v1653
        %1655 = vmatprep.mubr.bf16.mxu0 %v590
        %1656 = vmatmul.mubr.bf16.gmra.mxu0 %v589
        %v1657 = vpop.f32.mrf.mxu0
        %v1658 = vadd.f32 %v1436, %v1657
        %v1659 = vpop.f32.mrf.mxu0
        %v1660 = vadd.f32 %v1440, %v1659
        %v1661 = vpop.f32.mrf.mxu0
        %v1662 = vadd.f32 %v1436, %v1661
        %v1663 = vpop.f32.mrf.mxu0
        %v1664 = vadd.f32 %v1440, %v1663
        %1665 = vmatprep.mubr.bf16.mxu0 %v592
        %1666 = vmatmul.mubr.bf16.gmra.mxu0 %v591
        %v1667 = vpop.f32.mrf.mxu0
        %v1668 = vadd.f32 %v1436, %v1667
        %v1669 = vpop.f32.mrf.mxu0
        %v1670 = vadd.f32 %v1440, %v1669
        %v1671 = vpop.f32.mrf.mxu0
        %v1672 = vadd.f32 %v1436, %v1671
        %v1673 = vpop.f32.mrf.mxu0
        %v1674 = vadd.f32 %v1440, %v1673
        %1675 = vmatprep.mubr.bf16.mxu0 %v594
        %1676 = vmatmul.mubr.bf16.gmra.mxu0 %v593
        %v1677 = vpop.f32.mrf.mxu0
        %v1678 = vadd.f32 %v1436, %v1677
        %v1679 = vpop.f32.mrf.mxu0
        %v1680 = vadd.f32 %v1440, %v1679
        %v1681 = vpop.f32.mrf.mxu0
        %v1682 = vadd.f32 %v1436, %v1681
        %v1683 = vpop.f32.mrf.mxu0
        %v1684 = vadd.f32 %v1440, %v1683
        %1685 = vmatprep.mubr.bf16.mxu0 %v596
        %1686 = vmatmul.mubr.bf16.gmra.mxu0 %v595
        %v1687 = vpop.f32.mrf.mxu0
        %v1688 = vadd.f32 %v1436, %v1687
        %v1689 = vpop.f32.mrf.mxu0
        %v1690 = vadd.f32 %v1440, %v1689
        %v1691 = vpop.f32.mrf.mxu0
        %v1692 = vadd.f32 %v1436, %v1691
        %v1693 = vpop.f32.mrf.mxu0
        %v1694 = vadd.f32 %v1440, %v1693
        %1695 = vmatprep.mubr.bf16.mxu0 %v598
        %1696 = vmatmul.mubr.bf16.gmra.mxu0 %v597
        %v1697 = vpop.f32.mrf.mxu0
        %v1698 = vadd.f32 %v1436, %v1697
        %v1699 = vpop.f32.mrf.mxu0
        %v1700 = vadd.f32 %v1440, %v1699
        %v1701 = vpop.f32.mrf.mxu0
        %v1702 = vadd.f32 %v1436, %v1701
        %v1703 = vpop.f32.mrf.mxu0
        %v1704 = vadd.f32 %v1440, %v1703
        %1705 = vmatprep.mubr.bf16.mxu0 %v600
        %1706 = vmatmul.mubr.bf16.gmra.mxu0 %v599
        %v1707 = vpop.f32.mrf.mxu0
        %v1708 = vadd.f32 %v1436, %v1707
        %v1709 = vpop.f32.mrf.mxu0
        %v1710 = vadd.f32 %v1440, %v1709
        %v1711 = vpop.f32.mrf.mxu0
        %v1712 = vadd.f32 %v1436, %v1711
        %v1713 = vpop.f32.mrf.mxu0
        %v1714 = vadd.f32 %v1440, %v1713
        %1715 = vmatprep.mubr.bf16.mxu0 %v602
        %1716 = vmatmul.mubr.bf16.gmra.mxu0 %v601
        %v1717 = vpop.f32.mrf.mxu0
        %v1718 = vadd.f32 %v1436, %v1717
        %v1719 = vpop.f32.mrf.mxu0
        %v1720 = vadd.f32 %v1440, %v1719
        %v1721 = vpop.f32.mrf.mxu0
        %v1722 = vadd.f32 %v1436, %v1721
        %v1723 = vpop.f32.mrf.mxu0
        %v1724 = vadd.f32 %v1440, %v1723
        %1725 = vmatprep.mubr.bf16.mxu0 %v604
        %1726 = vmatmul.mubr.bf16.gmra.mxu0 %v603
        %v1727 = vpop.f32.mrf.mxu0
        %v1728 = vadd.f32 %v1436, %v1727
        %v1729 = vpop.f32.mrf.mxu0
        %v1730 = vadd.f32 %v1440, %v1729
        %v1731 = vpop.f32.mrf.mxu0
        %v1732 = vadd.f32 %v1436, %v1731
        %v1733 = vpop.f32.mrf.mxu0
        %v1734 = vadd.f32 %v1440, %v1733
        %1735 = vmatprep.mubr.bf16.mxu0 %v606
        %1736 = vmatmul.mubr.bf16.gmra.mxu0 %v605
        %v1737 = vpop.f32.mrf.mxu0
        %v1738 = vadd.f32 %v1436, %v1737
        %v1739 = vpop.f32.mrf.mxu0
        %v1740 = vadd.f32 %v1440, %v1739
        %v1741 = vpop.f32.mrf.mxu0
        %v1742 = vadd.f32 %v1436, %v1741
        %v1743 = vpop.f32.mrf.mxu0
        %v1744 = vadd.f32 %v1440, %v1743
        %1745 = vmatprep.mubr.bf16.mxu0 %v608
        %1746 = vmatmul.mubr.bf16.gmra.mxu0 %v607
        %v1747 = vpop.f32.mrf.mxu0
        %v1748 = vadd.f32 %v1436, %v1747
        %v1749 = vpop.f32.mrf.mxu0
        %v1750 = vadd.f32 %v1440, %v1749
        %v1751 = vpop.f32.mrf.mxu0
        %v1752 = vadd.f32 %v1436, %v1751
        %v1753 = vpop.f32.mrf.mxu0
        %v1754 = vadd.f32 %v1440, %v1753
        %1755 = vmatprep.mubr.bf16.mxu0 %v610
        %1756 = vmatmul.mubr.bf16.gmra.mxu0 %v609
        %v1757 = vpop.f32.mrf.mxu0
        %v1758 = vadd.f32 %v1436, %v1757
        %v1759 = vpop.f32.mrf.mxu0
        %v1760 = vadd.f32 %v1440, %v1759
        %v1761 = vpop.f32.mrf.mxu0
        %v1762 = vadd.f32 %v1436, %v1761
        %v1763 = vpop.f32.mrf.mxu0
        %v1764 = vadd.f32 %v1440, %v1763
        %1765 = vmatprep.mubr.bf16.mxu0 %v612
        %1766 = vmatmul.mubr.bf16.gmra.mxu0 %v611
        %v1767 = vpop.f32.mrf.mxu0
        %v1768 = vadd.f32 %v1436, %v1767
        %v1769 = vpop.f32.mrf.mxu0
        %v1770 = vadd.f32 %v1440, %v1769
        %v1771 = vpop.f32.mrf.mxu0
        %v1772 = vadd.f32 %v1436, %v1771
        %v1773 = vpop.f32.mrf.mxu0
        %v1774 = vadd.f32 %v1440, %v1773
        %1775 = vmatprep.mubr.bf16.mxu0 %v614
        %1776 = vmatmul.mubr.bf16.gmra.mxu0 %v613
        %v1777 = vpop.f32.mrf.mxu0
        %v1778 = vadd.f32 %v1436, %v1777
        %v1779 = vpop.f32.mrf.mxu0
        %v1780 = vadd.f32 %v1440, %v1779
        %v1781 = vpop.f32.mrf.mxu0
        %v1782 = vadd.f32 %v1436, %v1781
        %v1783 = vpop.f32.mrf.mxu0
        %v1784 = vadd.f32 %v1440, %v1783
        %1785 = vmatprep.mubr.bf16.mxu0 %v616
        %1786 = vmatmul.mubr.bf16.gmra.mxu0 %v615
        %v1787 = vpop.f32.mrf.mxu0
        %v1788 = vadd.f32 %v1436, %v1787
        %v1789 = vpop.f32.mrf.mxu0
        %v1790 = vadd.f32 %v1440, %v1789
        %v1791 = vpop.f32.mrf.mxu0
        %v1792 = vadd.f32 %v1436, %v1791
        %v1793 = vpop.f32.mrf.mxu0
        %v1794 = vadd.f32 %v1440, %v1793
        %1795 = vdwg.mxu0
        %v1796 = vpack.c.bf16 %v848, %v844
        %v1797 = vpack.c.bf16 %v850, %v846
        %v1798 = vpack.c.bf16 %v858, %v854
        %v1799 = vpack.c.bf16 %v860, %v856
        %v1800 = vpack.c.bf16 %v868, %v864
        %v1801 = vpack.c.bf16 %v870, %v866
        %v1802 = vpack.c.bf16 %v878, %v874
        %v1803 = vpack.c.bf16 %v880, %v876
        %v1804 = vpack.c.bf16 %v888, %v884
        %v1805 = vpack.c.bf16 %v890, %v886
        %v1806 = vpack.c.bf16 %v898, %v894
        %v1807 = vpack.c.bf16 %v900, %v896
        %v1808 = vpack.c.bf16 %v908, %v904
        %v1809 = vpack.c.bf16 %v910, %v906
        %v1810 = vpack.c.bf16 %v918, %v914
        %v1811 = vpack.c.bf16 %v920, %v916
        %v1812 = vpack.c.bf16 %v928, %v924
        %v1813 = vpack.c.bf16 %v930, %v926
        %v1814 = vpack.c.bf16 %v938, %v934
        %v1815 = vpack.c.bf16 %v940, %v936
        %v1816 = vpack.c.bf16 %v948, %v944
        %v1817 = vpack.c.bf16 %v950, %v946
        %v1818 = vpack.c.bf16 %v958, %v954
        %v1819 = vpack.c.bf16 %v960, %v956
        %v1820 = vpack.c.bf16 %v968, %v964
        %v1821 = vpack.c.bf16 %v970, %v966
        %v1822 = vpack.c.bf16 %v978, %v974
        %v1823 = vpack.c.bf16 %v980, %v976
        %v1824 = vpack.c.bf16 %v988, %v984
        %v1825 = vpack.c.bf16 %v990, %v986
        %v1826 = vpack.c.bf16 %v998, %v994
        %v1827 = vpack.c.bf16 %v1000, %v996
        %v1828 = vpack.c.bf16 %v1245, %v1241
        %v1829 = vpack.c.bf16 %v1247, %v1243
        %v1830 = vpack.c.bf16 %v1255, %v1251
        %v1831 = vpack.c.bf16 %v1257, %v1253
        %v1832 = vpack.c.bf16 %v1265, %v1261
        %v1833 = vpack.c.bf16 %v1267, %v1263
        %v1834 = vpack.c.bf16 %v1275, %v1271
        %v1835 = vpack.c.bf16 %v1277, %v1273
        %v1836 = vpack.c.bf16 %v1285, %v1281
        %v1837 = vpack.c.bf16 %v1287, %v1283
        %v1838 = vpack.c.bf16 %v1295, %v1291
        %v1839 = vpack.c.bf16 %v1297, %v1293
        %v1840 = vpack.c.bf16 %v1305, %v1301
        %v1841 = vpack.c.bf16 %v1307, %v1303
        %v1842 = vpack.c.bf16 %v1315, %v1311
        %v1843 = vpack.c.bf16 %v1317, %v1313
        %v1844 = vpack.c.bf16 %v1325, %v1321
        %v1845 = vpack.c.bf16 %v1327, %v1323
        %v1846 = vpack.c.bf16 %v1335, %v1331
        %v1847 = vpack.c.bf16 %v1337, %v1333
        %v1848 = vpack.c.bf16 %v1345, %v1341
        %v1849 = vpack.c.bf16 %v1347, %v1343
        %v1850 = vpack.c.bf16 %v1355, %v1351
        %v1851 = vpack.c.bf16 %v1357, %v1353
        %v1852 = vpack.c.bf16 %v1365, %v1361
        %v1853 = vpack.c.bf16 %v1367, %v1363
        %v1854 = vpack.c.bf16 %v1375, %v1371
        %v1855 = vpack.c.bf16 %v1377, %v1373
        %v1856 = vpack.c.bf16 %v1385, %v1381
        %v1857 = vpack.c.bf16 %v1387, %v1383
        %v1858 = vpack.c.bf16 %v1395, %v1391
        %v1859 = vpack.c.bf16 %v1397, %v1393
        %v1860 = vpack.c.bf16 %v1642, %v1638
        %v1861 = vpack.c.bf16 %v1644, %v1640
        %v1862 = vpack.c.bf16 %v1652, %v1648
        %v1863 = vpack.c.bf16 %v1654, %v1650
        %v1864 = vpack.c.bf16 %v1662, %v1658
        %v1865 = vpack.c.bf16 %v1664, %v1660
        %v1866 = vpack.c.bf16 %v1672, %v1668
        %v1867 = vpack.c.bf16 %v1674, %v1670
        %v1868 = vpack.c.bf16 %v1682, %v1678
        %v1869 = vpack.c.bf16 %v1684, %v1680
        %v1870 = vpack.c.bf16 %v1692, %v1688
        %v1871 = vpack.c.bf16 %v1694, %v1690
        %v1872 = vpack.c.bf16 %v1702, %v1698
        %v1873 = vpack.c.bf16 %v1704, %v1700
        %v1874 = vpack.c.bf16 %v1712, %v1708
        %v1875 = vpack.c.bf16 %v1714, %v1710
        %v1876 = vpack.c.bf16 %v1722, %v1718
        %v1877 = vpack.c.bf16 %v1724, %v1720
        %v1878 = vpack.c.bf16 %v1732, %v1728
        %v1879 = vpack.c.bf16 %v1734, %v1730
        %v1880 = vpack.c.bf16 %v1742, %v1738
        %v1881 = vpack.c.bf16 %v1744, %v1740
        %v1882 = vpack.c.bf16 %v1752, %v1748
        %v1883 = vpack.c.bf16 %v1754, %v1750
        %v1884 = vpack.c.bf16 %v1762, %v1758
        %v1885 = vpack.c.bf16 %v1764, %v1760
        %v1886 = vpack.c.bf16 %v1772, %v1768
        %v1887 = vpack.c.bf16 %v1774, %v1770
        %v1888 = vpack.c.bf16 %v1782, %v1778
        %v1889 = vpack.c.bf16 %v1784, %v1780
        %v1890 = vpack.c.bf16 %v1792, %v1788
        %v1891 = vpack.c.bf16 %v1794, %v1790
        %v1892 = vlaneseq
        %v1893 = vshrl.u32 %v1892, 7
        %v1894 = vadd.s32 %v1893, 8
        %v1895 = vadd.s32 %v1893, 16
        %v1896 = vadd.s32 %v1893, 24
        %v1897 = vadd.s32 %v1893, 32
        %v1898 = vadd.s32 %v1893, 40
        %v1899 = vadd.s32 %v1893, 48
        %v1900 = vadd.s32 %v1893, 56
        %v1901 = vadd.s32 %v1893, 64
        %v1902 = vadd.s32 %v1893, 72
        %v1903 = vadd.s32 %v1893, 80
        %v1904 = vadd.s32 %v1893, 88
        %v1905 = vadd.s32 %v1893, 96
        %v1906 = vadd.s32 %v1893, 104
        %v1907 = vadd.s32 %v1893, 112
        %v1908 = vadd.s32 %v1893, 120
        %v1909 = vlaneseq
        %v1910 = vand.u32 %v1909, 127
        %vm1911 = vcmp.ge.s32.totalorder %v1893, %v1910
        %vm1912 = vcmp.ge.s32.totalorder %v1894, %v1910
        %vm1913 = vcmp.ge.s32.totalorder %v1895, %v1910
        %vm1914 = vcmp.ge.s32.totalorder %v1896, %v1910
        %vm1915 = vcmp.ge.s32.totalorder %v1897, %v1910
        %vm1916 = vcmp.ge.s32.totalorder %v1898, %v1910
        %vm1917 = vcmp.ge.s32.totalorder %v1899, %v1910
        %vm1918 = vcmp.ge.s32.totalorder %v1900, %v1910
        %vm1919 = vcmp.ge.s32.totalorder %v1901, %v1910
        %vm1920 = vcmp.ge.s32.totalorder %v1902, %v1910
        %vm1921 = vcmp.ge.s32.totalorder %v1903, %v1910
        %vm1922 = vcmp.ge.s32.totalorder %v1904, %v1910
        %vm1923 = vcmp.ge.s32.totalorder %v1905, %v1910
        %vm1924 = vcmp.ge.s32.totalorder %v1906, %v1910
        %vm1925 = vcmp.ge.s32.totalorder %v1907, %v1910
        %vm1926 = vcmp.ge.s32.totalorder %v1908, %v1910
        %1927 = vmatprep.subr.bf16.mxu0 0
        %1928 = vmatpush1.bf16.xpose.msra.mxu0 %v1842
        %1929 = vmatprep.subr.bf16.mxu0 0
        %1930 = vmatpush1.bf16.xpose.msra.mxu0 %v1840
        %1931 = vmatprep.subr.bf16.mxu0 0
        %1932 = vmatpush1.bf16.xpose.msra.mxu0 %v1838
        %1933 = vmatprep.subr.bf16.mxu0 0
        %1934 = vmatpush1.bf16.xpose.msra.mxu0 %v1836
        %1935 = vmatprep.subr.bf16.mxu0 0
        %1936 = vmatpush1.bf16.xpose.msra.mxu0 %v1834
        %1937 = vmatprep.subr.bf16.mxu0 0
        %1938 = vmatpush1.bf16.xpose.msra.mxu0 %v1832
        %1939 = vmatprep.subr.bf16.mxu0 0
        %1940 = vmatpush1.bf16.xpose.msra.mxu0 %v1830
        %1941 = vmatprep.subr.bf16.mxu0 0
        %1942 = vmatpush1.bf16.xpose.msra.mxu0 %v1828
        %1943 = vmatprep.subr.bf16.mxu0 0
        %1944 = vmatpush2.bf16.xpose.msra.mxu0 0
        %1945 = vmatprep.subr.bf16.mxu0 0
        %1946 = vmatpush2.bf16.xpose.msra.mxu0 0
        %1947 = vmatprep.subr.bf16.mxu0 0
        %1948 = vmatpush2.bf16.xpose.msra.mxu0 0
        %1949 = vmatprep.subr.bf16.mxu0 0
        %1950 = vmatpush2.bf16.xpose.msra.mxu0 0
        %1951 = vmatprep.subr.bf16.mxu0 0
        %1952 = vmatpush2.bf16.xpose.msra.mxu0 0
        %1953 = vmatprep.subr.bf16.mxu0 0
        %1954 = vmatpush2.bf16.xpose.msra.mxu0 0
        %1955 = vmatprep.subr.bf16.mxu0 0
        %1956 = vmatpush2.bf16.xpose.msra.mxu0 0
        %1957 = vmatprep.subr.bf16.mxu0 0
        %1958 = vmatpush2.bf16.xpose.msra.mxu0 0
        %1959 = vmatprep.mubr.bf16.mxu0 0
        %1960 = vmatmul.mubr.bf16.gmra.mxu0 %v1796
        %v1961 = vpop.f32.mrf.mxu0
        %v1962 = vadd.f32 0.0, %v1961
        %v1963 = vpop.f32.mrf.mxu0
        %v1964 = vpop.f32.mrf.mxu0
        %v1965 = vadd.f32 0.0, %v1964
        %v1966 = vpop.f32.mrf.mxu0
        %1967 = vmatprep.mubr.bf16.mxu0 0
        %1968 = vmatmul.mubr.bf16.gmra.mxu0 %v1798
        %v1969 = vpop.f32.mrf.mxu0
        %v1970 = vadd.f32 0.0, %v1969
        %v1971 = vpop.f32.mrf.mxu0
        %v1972 = vpop.f32.mrf.mxu0
        %v1973 = vadd.f32 0.0, %v1972
        %v1974 = vpop.f32.mrf.mxu0
        %1975 = vmatprep.mubr.bf16.mxu0 0
        %1976 = vmatmul.mubr.bf16.gmra.mxu0 %v1800
        %v1977 = vpop.f32.mrf.mxu0
        %v1978 = vadd.f32 0.0, %v1977
        %v1979 = vpop.f32.mrf.mxu0
        %v1980 = vpop.f32.mrf.mxu0
        %v1981 = vadd.f32 0.0, %v1980
        %v1982 = vpop.f32.mrf.mxu0
        %1983 = vmatprep.mubr.bf16.mxu0 0
        %1984 = vmatmul.mubr.bf16.gmra.mxu0 %v1802
        %v1985 = vpop.f32.mrf.mxu0
        %v1986 = vadd.f32 0.0, %v1985
        %v1987 = vpop.f32.mrf.mxu0
        %v1988 = vpop.f32.mrf.mxu0
        %v1989 = vadd.f32 0.0, %v1988
        %v1990 = vpop.f32.mrf.mxu0
        %1991 = vmatprep.mubr.bf16.mxu0 0
        %1992 = vmatmul.mubr.bf16.gmra.mxu0 %v1804
        %v1993 = vpop.f32.mrf.mxu0
        %v1994 = vadd.f32 0.0, %v1993
        %v1995 = vpop.f32.mrf.mxu0
        %v1996 = vpop.f32.mrf.mxu0
        %v1997 = vadd.f32 0.0, %v1996
        %v1998 = vpop.f32.mrf.mxu0
        %1999 = vmatprep.mubr.bf16.mxu0 0
        %2000 = vmatmul.mubr.bf16.gmra.mxu0 %v1806
        %v2001 = vpop.f32.mrf.mxu0
        %v2002 = vadd.f32 0.0, %v2001
        %v2003 = vpop.f32.mrf.mxu0
        %v2004 = vpop.f32.mrf.mxu0
        %v2005 = vadd.f32 0.0, %v2004
        %v2006 = vpop.f32.mrf.mxu0
        %2007 = vmatprep.mubr.bf16.mxu0 0
        %2008 = vmatmul.mubr.bf16.gmra.mxu0 %v1808
        %v2009 = vpop.f32.mrf.mxu0
        %v2010 = vadd.f32 0.0, %v2009
        %v2011 = vpop.f32.mrf.mxu0
        %v2012 = vpop.f32.mrf.mxu0
        %v2013 = vadd.f32 0.0, %v2012
        %v2014 = vpop.f32.mrf.mxu0
        %2015 = vmatprep.mubr.bf16.mxu0 0
        %2016 = vmatmul.mubr.bf16.gmra.mxu0 %v1810
        %v2017 = vpop.f32.mrf.mxu0
        %v2018 = vadd.f32 0.0, %v2017
        %v2019 = vpop.f32.mrf.mxu0
        %v2020 = vpop.f32.mrf.mxu0
        %v2021 = vadd.f32 0.0, %v2020
        %v2022 = vpop.f32.mrf.mxu0
        %2023 = vdwg.mxu0
        %v2024 = vsel %vm1911, %v1962, -1e+30
        %v2025 = vsel %vm1912, %v1965, -1e+30
        %v2026 = vsel %vm1913, %v1970, -1e+30
        %v2027 = vsel %vm1914, %v1973, -1e+30
        %v2028 = vsel %vm1915, %v1978, -1e+30
        %v2029 = vsel %vm1916, %v1981, -1e+30
        %v2030 = vsel %vm1917, %v1986, -1e+30
        %v2031 = vsel %vm1918, %v1989, -1e+30
        %v2032 = vsel %vm1919, %v1994, -1e+30
        %v2033 = vsel %vm1920, %v1997, -1e+30
        %v2034 = vsel %vm1921, %v2002, -1e+30
        %v2035 = vsel %vm1922, %v2005, -1e+30
        %v2036 = vsel %vm1923, %v2010, -1e+30
        %v2037 = vsel %vm1924, %v2013, -1e+30
        %v2038 = vsel %vm1925, %v2018, -1e+30
        %v2039 = vsel %vm1926, %v2021, -1e+30
        %2040 = vmax.xlane.f32.xlu0 %v2024
        %v2041 = vpop.xlane.xlu0 %2040
        %2042 = vmax.xlane.f32.xlu0 %v2025
        %v2043 = vpop.xlane.xlu0 %2042
        %2044 = vmax.xlane.f32.xlu0 %v2026
        %v2045 = vpop.xlane.xlu0 %2044
        %2046 = vmax.xlane.f32.xlu0 %v2027
        %v2047 = vpop.xlane.xlu0 %2046
        %2048 = vmax.xlane.f32.xlu0 %v2028
        %v2049 = vpop.xlane.xlu0 %2048
        %2050 = vmax.xlane.f32.xlu0 %v2029
        %v2051 = vpop.xlane.xlu0 %2050
        %2052 = vmax.xlane.f32.xlu0 %v2030
        %v2053 = vpop.xlane.xlu0 %2052
        %2054 = vmax.xlane.f32.xlu0 %v2031
        %v2055 = vpop.xlane.xlu0 %2054
        %2056 = vmax.xlane.f32.xlu0 %v2032
        %v2057 = vpop.xlane.xlu0 %2056
        %2058 = vmax.xlane.f32.xlu0 %v2033
        %v2059 = vpop.xlane.xlu0 %2058
        %2060 = vmax.xlane.f32.xlu0 %v2034
        %v2061 = vpop.xlane.xlu0 %2060
        %2062 = vmax.xlane.f32.xlu0 %v2035
        %v2063 = vpop.xlane.xlu0 %2062
        %2064 = vmax.xlane.f32.xlu0 %v2036
        %v2065 = vpop.xlane.xlu0 %2064
        %2066 = vmax.xlane.f32.xlu0 %v2037
        %v2067 = vpop.xlane.xlu0 %2066
        %2068 = vmax.xlane.f32.xlu0 %v2038
        %v2069 = vpop.xlane.xlu0 %2068
        %2070 = vmax.xlane.f32.xlu0 %v2039
        %v2071 = vpop.xlane.xlu0 %2070
        %v2072 = vsub.f32 %v2024, %v2041
        %v2073 = vsub.f32 %v2025, %v2043
        %v2074 = vsub.f32 %v2026, %v2045
        %v2075 = vsub.f32 %v2027, %v2047
        %v2076 = vsub.f32 %v2028, %v2049
        %v2077 = vsub.f32 %v2029, %v2051
        %v2078 = vsub.f32 %v2030, %v2053
        %v2079 = vsub.f32 %v2031, %v2055
        %v2080 = vsub.f32 %v2032, %v2057
        %v2081 = vsub.f32 %v2033, %v2059
        %v2082 = vsub.f32 %v2034, %v2061
        %v2083 = vsub.f32 %v2035, %v2063
        %v2084 = vsub.f32 %v2036, %v2065
        %v2085 = vsub.f32 %v2037, %v2067
        %v2086 = vsub.f32 %v2038, %v2069
        %v2087 = vsub.f32 %v2039, %v2071
        %v2088 = vmul.f32 %v2072, 1.442695
        %v2089 = vpow.pop %v2088
        %v2090 = vmul.f32 %v2073, 1.442695
        %v2091 = vpow.pop %v2090
        %v2092 = vmul.f32 %v2074, 1.442695
        %v2093 = vpow.pop %v2092
        %v2094 = vmul.f32 %v2075, 1.442695
        %v2095 = vpow.pop %v2094
        %v2096 = vmul.f32 %v2076, 1.442695
        %v2097 = vpow.pop %v2096
        %v2098 = vmul.f32 %v2077, 1.442695
        %v2099 = vpow.pop %v2098
        %v2100 = vmul.f32 %v2078, 1.442695
        %v2101 = vpow.pop %v2100
        %v2102 = vmul.f32 %v2079, 1.442695
        %v2103 = vpow.pop %v2102
        %v2104 = vmul.f32 %v2080, 1.442695
        %v2105 = vpow.pop %v2104
        %v2106 = vmul.f32 %v2081, 1.442695
        %v2107 = vpow.pop %v2106
        %v2108 = vmul.f32 %v2082, 1.442695
        %v2109 = vpow.pop %v2108
        %v2110 = vmul.f32 %v2083, 1.442695
        %v2111 = vpow.pop %v2110
        %v2112 = vmul.f32 %v2084, 1.442695
        %v2113 = vpow.pop %v2112
        %v2114 = vmul.f32 %v2085, 1.442695
        %v2115 = vpow.pop %v2114
        %v2116 = vmul.f32 %v2086, 1.442695
        %v2117 = vpow.pop %v2116
        %v2118 = vmul.f32 %v2087, 1.442695
        %v2119 = vpow.pop %v2118
        %2120 = vadd.xlane.f32.xlu0 %v2089
        %v2121 = vpop.xlane.xlu0 %2120
        %2122 = vadd.xlane.f32.xlu0 %v2091
        %v2123 = vpop.xlane.xlu0 %2122
        %2124 = vadd.xlane.f32.xlu0 %v2093
        %v2125 = vpop.xlane.xlu0 %2124
        %2126 = vadd.xlane.f32.xlu0 %v2095
        %v2127 = vpop.xlane.xlu0 %2126
        %2128 = vadd.xlane.f32.xlu0 %v2097
        %v2129 = vpop.xlane.xlu0 %2128
        %2130 = vadd.xlane.f32.xlu0 %v2099
        %v2131 = vpop.xlane.xlu0 %2130
        %2132 = vadd.xlane.f32.xlu0 %v2101
        %v2133 = vpop.xlane.xlu0 %2132
        %2134 = vadd.xlane.f32.xlu0 %v2103
        %v2135 = vpop.xlane.xlu0 %2134
        %2136 = vadd.xlane.f32.xlu0 %v2105
        %v2137 = vpop.xlane.xlu0 %2136
        %2138 = vadd.xlane.f32.xlu0 %v2107
        %v2139 = vpop.xlane.xlu0 %2138
        %2140 = vadd.xlane.f32.xlu0 %v2109
        %v2141 = vpop.xlane.xlu0 %2140
        %2142 = vadd.xlane.f32.xlu0 %v2111
        %v2143 = vpop.xlane.xlu0 %2142
        %2144 = vadd.xlane.f32.xlu0 %v2113
        %v2145 = vpop.xlane.xlu0 %2144
        %2146 = vadd.xlane.f32.xlu0 %v2115
        %v2147 = vpop.xlane.xlu0 %2146
        %2148 = vadd.xlane.f32.xlu0 %v2117
        %v2149 = vpop.xlane.xlu0 %2148
        %2150 = vadd.xlane.f32.xlu0 %v2119
        %v2151 = vpop.xlane.xlu0 %2150
        %v2152 = vrcp.pop %v2121
        %v2153 = vrcp.pop %v2123
        %v2154 = vrcp.pop %v2125
        %v2155 = vrcp.pop %v2127
        %v2156 = vrcp.pop %v2129
        %v2157 = vrcp.pop %v2131
        %v2158 = vrcp.pop %v2133
        %v2159 = vrcp.pop %v2135
        %v2160 = vrcp.pop %v2137
        %v2161 = vrcp.pop %v2139
        %v2162 = vrcp.pop %v2141
        %v2163 = vrcp.pop %v2143
        %v2164 = vrcp.pop %v2145
        %v2165 = vrcp.pop %v2147
        %v2166 = vrcp.pop %v2149
        %v2167 = vrcp.pop %v2151
        %v2168 = vmul.f32 %v2089, %v2152
        %v2169 = vmul.f32 %v2091, %v2153
        %v2170 = vmul.f32 %v2093, %v2154
        %v2171 = vmul.f32 %v2095, %v2155
        %v2172 = vmul.f32 %v2097, %v2156
        %v2173 = vmul.f32 %v2099, %v2157
        %v2174 = vmul.f32 %v2101, %v2158
        %v2175 = vmul.f32 %v2103, %v2159
        %v2176 = vmul.f32 %v2105, %v2160
        %v2177 = vmul.f32 %v2107, %v2161
        %v2178 = vmul.f32 %v2109, %v2162
        %v2179 = vmul.f32 %v2111, %v2163
        %v2180 = vmul.f32 %v2113, %v2164
        %v2181 = vmul.f32 %v2115, %v2165
        %v2182 = vmul.f32 %v2117, %v2166
        %v2183 = vmul.f32 %v2119, %v2167
        %v2184 = vpack.c.bf16 %v2169, %v2168
        %v2185 = vpack.c.bf16 %v2171, %v2170
        %v2186 = vpack.c.bf16 %v2173, %v2172
        %v2187 = vpack.c.bf16 %v2175, %v2174
        %v2188 = vpack.c.bf16 %v2177, %v2176
        %v2189 = vpack.c.bf16 %v2179, %v2178
        %v2190 = vpack.c.bf16 %v2181, %v2180
        %v2191 = vpack.c.bf16 %v2183, %v2182
        %2192 = vmatprep.subr.bf16.mxu0 0
        %2193 = vmatpush1.bf16.msra.mxu0 %v1874
        %2194 = vmatprep.subr.bf16.mxu0 0
        %2195 = vmatpush1.bf16.msra.mxu0 %v1872
        %2196 = vmatprep.subr.bf16.mxu0 0
        %2197 = vmatpush1.bf16.msra.mxu0 %v1870
        %2198 = vmatprep.subr.bf16.mxu0 0
        %2199 = vmatpush1.bf16.msra.mxu0 %v1868
        %2200 = vmatprep.subr.bf16.mxu0 0
        %2201 = vmatpush1.bf16.msra.mxu0 %v1866
        %2202 = vmatprep.subr.bf16.mxu0 0
        %2203 = vmatpush1.bf16.msra.mxu0 %v1864
        %2204 = vmatprep.subr.bf16.mxu0 0
        %2205 = vmatpush1.bf16.msra.mxu0 %v1862
        %2206 = vmatprep.subr.bf16.mxu0 0
        %2207 = vmatpush1.bf16.msra.mxu0 %v1860
        %2208 = vmatprep.subr.bf16.mxu0 0
        %2209 = vmatpush2.bf16.msra.mxu0 0
        %2210 = vmatprep.subr.bf16.mxu0 0
        %2211 = vmatpush2.bf16.msra.mxu0 0
        %2212 = vmatprep.subr.bf16.mxu0 0
        %2213 = vmatpush2.bf16.msra.mxu0 0
        %2214 = vmatprep.subr.bf16.mxu0 0
        %2215 = vmatpush2.bf16.msra.mxu0 0
        %2216 = vmatprep.subr.bf16.mxu0 0
        %2217 = vmatpush2.bf16.msra.mxu0 0
        %2218 = vmatprep.subr.bf16.mxu0 0
        %2219 = vmatpush2.bf16.msra.mxu0 0
        %2220 = vmatprep.subr.bf16.mxu0 0
        %2221 = vmatpush2.bf16.msra.mxu0 0
        %2222 = vmatprep.subr.bf16.mxu0 0
        %2223 = vmatpush2.bf16.msra.mxu0 0
        %2224 = vmatprep.mubr.bf16.mxu0 0
        %2225 = vmatmul.mubr.bf16.gmra.mxu0 %v2184
        %v2226 = vpop.f32.mrf.mxu0
        %v2227 = vadd.f32 0.0, %v2226
        %v2228 = vpop.f32.mrf.mxu0
        %v2229 = vpop.f32.mrf.mxu0
        %v2230 = vadd.f32 0.0, %v2229
        %v2231 = vpop.f32.mrf.mxu0
        %2232 = vmatprep.mubr.bf16.mxu0 0
        %2233 = vmatmul.mubr.bf16.gmra.mxu0 %v2185
        %v2234 = vpop.f32.mrf.mxu0
        %v2235 = vadd.f32 0.0, %v2234
        %v2236 = vpop.f32.mrf.mxu0
        %v2237 = vpop.f32.mrf.mxu0
        %v2238 = vadd.f32 0.0, %v2237
        %v2239 = vpop.f32.mrf.mxu0
        %2240 = vmatprep.mubr.bf16.mxu0 0
        %2241 = vmatmul.mubr.bf16.gmra.mxu0 %v2186
        %v2242 = vpop.f32.mrf.mxu0
        %v2243 = vadd.f32 0.0, %v2242
        %v2244 = vpop.f32.mrf.mxu0
        %v2245 = vpop.f32.mrf.mxu0
        %v2246 = vadd.f32 0.0, %v2245
        %v2247 = vpop.f32.mrf.mxu0
        %2248 = vmatprep.mubr.bf16.mxu0 0
        %2249 = vmatmul.mubr.bf16.gmra.mxu0 %v2187
        %v2250 = vpop.f32.mrf.mxu0
        %v2251 = vadd.f32 0.0, %v2250
        %v2252 = vpop.f32.mrf.mxu0
        %v2253 = vpop.f32.mrf.mxu0
        %v2254 = vadd.f32 0.0, %v2253
        %v2255 = vpop.f32.mrf.mxu0
        %2256 = vmatprep.mubr.bf16.mxu0 0
        %2257 = vmatmul.mubr.bf16.gmra.mxu0 %v2188
        %v2258 = vpop.f32.mrf.mxu0
        %v2259 = vadd.f32 0.0, %v2258
        %v2260 = vpop.f32.mrf.mxu0
        %v2261 = vpop.f32.mrf.mxu0
        %v2262 = vadd.f32 0.0, %v2261
        %v2263 = vpop.f32.mrf.mxu0
        %2264 = vmatprep.mubr.bf16.mxu0 0
        %2265 = vmatmul.mubr.bf16.gmra.mxu0 %v2189
        %v2266 = vpop.f32.mrf.mxu0
        %v2267 = vadd.f32 0.0, %v2266
        %v2268 = vpop.f32.mrf.mxu0
        %v2269 = vpop.f32.mrf.mxu0
        %v2270 = vadd.f32 0.0, %v2269
        %v2271 = vpop.f32.mrf.mxu0
        %2272 = vmatprep.mubr.bf16.mxu0 0
        %2273 = vmatmul.mubr.bf16.gmra.mxu0 %v2190
        %v2274 = vpop.f32.mrf.mxu0
        %v2275 = vadd.f32 0.0, %v2274
        %v2276 = vpop.f32.mrf.mxu0
        %v2277 = vpop.f32.mrf.mxu0
        %v2278 = vadd.f32 0.0, %v2277
        %v2279 = vpop.f32.mrf.mxu0
        %2280 = vmatprep.mubr.bf16.mxu0 0
        %2281 = vmatmul.mubr.bf16.gmra.mxu0 %v2191
        %v2282 = vpop.f32.mrf.mxu0
        %v2283 = vadd.f32 0.0, %v2282
        %v2284 = vpop.f32.mrf.mxu0
        %v2285 = vpop.f32.mrf.mxu0
        %v2286 = vadd.f32 0.0, %v2285
        %v2287 = vpop.f32.mrf.mxu0
        %2288 = vdwg.mxu0
        %v2289 = vpack.c.bf16 %v2230, %v2227
        %v2290 = vpack.c.bf16 %v2238, %v2235
        %v2291 = vpack.c.bf16 %v2246, %v2243
        %v2292 = vpack.c.bf16 %v2254, %v2251
        %v2293 = vpack.c.bf16 %v2262, %v2259
        %v2294 = vpack.c.bf16 %v2270, %v2267
        %v2295 = vpack.c.bf16 %v2278, %v2275
        %v2296 = vpack.c.bf16 %v2286, %v2283
        %v2305 = vunpack.c.l.b16 %v2289
        %v2306 = vunpack.c.h.b16 %v2289
        %v2307 = vunpack.c.l.b16 %v2290
        %v2308 = vunpack.c.h.b16 %v2290
        %v2309 = vunpack.c.l.b16 %v2291
        %v2310 = vunpack.c.h.b16 %v2291
        %v2311 = vunpack.c.l.b16 %v2292
        %v2312 = vunpack.c.h.b16 %v2292
        %v2313 = vunpack.c.l.b16 %v2293
        %v2314 = vunpack.c.h.b16 %v2293
        %v2315 = vunpack.c.l.b16 %v2294
        %v2316 = vunpack.c.h.b16 %v2294
        %v2317 = vunpack.c.l.b16 %v2295
        %v2318 = vunpack.c.h.b16 %v2295
        %v2319 = vunpack.c.l.b16 %v2296
        %v2320 = vunpack.c.h.b16 %v2296
        %v2321 = vpack.c.b16 %v2305, %v2305
        %v2322 = vpack.c.b16 %v2306, %v2306
        %v2323 = vpack.c.b16 %v2307, %v2307
        %v2324 = vpack.c.b16 %v2308, %v2308
        %v2325 = vpack.c.b16 %v2309, %v2309
        %v2326 = vpack.c.b16 %v2310, %v2310
        %v2327 = vpack.c.b16 %v2311, %v2311
        %v2328 = vpack.c.b16 %v2312, %v2312
        %v2329 = vpack.c.b16 %v2313, %v2313
        %v2330 = vpack.c.b16 %v2314, %v2314
        %v2331 = vpack.c.b16 %v2315, %v2315
        %v2332 = vpack.c.b16 %v2316, %v2316
        %v2333 = vpack.c.b16 %v2317, %v2317
        %v2334 = vpack.c.b16 %v2318, %v2318
        %v2335 = vpack.c.b16 %v2319, %v2319
        %v2336 = vpack.c.b16 %v2320, %v2320
        %2353 = vst [vmem:[#allocation2] sm:$0xf] %v2321
        %2354 = vst [vmem:[#allocation2 + $0x8] sm:$0xf] %v2322
        %2355 = vst [vmem:[#allocation2 + $0x10] sm:$0xf] %v2323
        %2356 = vst [vmem:[#allocation2 + $0x18] sm:$0xf] %v2324
        %2357 = vst [vmem:[#allocation2 + $0x20] sm:$0xf] %v2325
        %2358 = vst [vmem:[#allocation2 + $0x28] sm:$0xf] %v2326
        %2359 = vst [vmem:[#allocation2 + $0x30] sm:$0xf] %v2327
        %2360 = vst [vmem:[#allocation2 + $0x38] sm:$0xf] %v2328
        %2361 = vst [vmem:[#allocation2 + $0x40] sm:$0xf] %v2329
        %2362 = vst [vmem:[#allocation2 + $0x48] sm:$0xf] %v2330
        %2363 = vst [vmem:[#allocation2 + $0x50] sm:$0xf] %v2331
        %2364 = vst [vmem:[#allocation2 + $0x58] sm:$0xf] %v2332
        %2365 = vst [vmem:[#allocation2 + $0x60] sm:$0xf] %v2333
        %2366 = vst [vmem:[#allocation2 + $0x68] sm:$0xf] %v2334
        %2367 = vst [vmem:[#allocation2 + $0x70] sm:$0xf] %v2335
        %2368 = vst [vmem:[#allocation2 + $0x78] sm:$0xf] %v2336
        %2369 = vmatprep.subr.bf16.mxu0 0
        %2370 = vmatpush1.bf16.xpose.msra.mxu0 %v1843
        %2371 = vmatprep.subr.bf16.mxu0 0
        %2372 = vmatpush1.bf16.xpose.msra.mxu0 %v1841
        %2373 = vmatprep.subr.bf16.mxu0 0
        %2374 = vmatpush1.bf16.xpose.msra.mxu0 %v1839
        %2375 = vmatprep.subr.bf16.mxu0 0
        %2376 = vmatpush1.bf16.xpose.msra.mxu0 %v1837
        %2377 = vmatprep.subr.bf16.mxu0 0
        %2378 = vmatpush1.bf16.xpose.msra.mxu0 %v1835
        %2379 = vmatprep.subr.bf16.mxu0 0
        %2380 = vmatpush1.bf16.xpose.msra.mxu0 %v1833
        %2381 = vmatprep.subr.bf16.mxu0 0
        %2382 = vmatpush1.bf16.xpose.msra.mxu0 %v1831
        %2383 = vmatprep.subr.bf16.mxu0 0
        %2384 = vmatpush1.bf16.xpose.msra.mxu0 %v1829
        %2385 = vmatprep.subr.bf16.mxu0 0
        %2386 = vmatpush2.bf16.xpose.msra.mxu0 0
        %2387 = vmatprep.subr.bf16.mxu0 0
        %2388 = vmatpush2.bf16.xpose.msra.mxu0 0
        %2389 = vmatprep.subr.bf16.mxu0 0
        %2390 = vmatpush2.bf16.xpose.msra.mxu0 0
        %2391 = vmatprep.subr.bf16.mxu0 0
        %2392 = vmatpush2.bf16.xpose.msra.mxu0 0
        %2393 = vmatprep.subr.bf16.mxu0 0
        %2394 = vmatpush2.bf16.xpose.msra.mxu0 0
        %2395 = vmatprep.subr.bf16.mxu0 0
        %2396 = vmatpush2.bf16.xpose.msra.mxu0 0
        %2397 = vmatprep.subr.bf16.mxu0 0
        %2398 = vmatpush2.bf16.xpose.msra.mxu0 0
        %2399 = vmatprep.subr.bf16.mxu0 0
        %2400 = vmatpush2.bf16.xpose.msra.mxu0 0
        %2401 = vmatprep.mubr.bf16.mxu0 0
        %2402 = vmatmul.mubr.bf16.gmra.mxu0 %v1797
        %v2403 = vpop.f32.mrf.mxu0
        %v2404 = vadd.f32 0.0, %v2403
        %v2405 = vpop.f32.mrf.mxu0
        %v2406 = vpop.f32.mrf.mxu0
        %v2407 = vadd.f32 0.0, %v2406
        %v2408 = vpop.f32.mrf.mxu0
        %2409 = vmatprep.mubr.bf16.mxu0 0
        %2410 = vmatmul.mubr.bf16.gmra.mxu0 %v1799
        %v2411 = vpop.f32.mrf.mxu0
        %v2412 = vadd.f32 0.0, %v2411
        %v2413 = vpop.f32.mrf.mxu0
        %v2414 = vpop.f32.mrf.mxu0
        %v2415 = vadd.f32 0.0, %v2414
        %v2416 = vpop.f32.mrf.mxu0
        %2417 = vmatprep.mubr.bf16.mxu0 0
        %2418 = vmatmul.mubr.bf16.gmra.mxu0 %v1801
        %v2419 = vpop.f32.mrf.mxu0
        %v2420 = vadd.f32 0.0, %v2419
        %v2421 = vpop.f32.mrf.mxu0
        %v2422 = vpop.f32.mrf.mxu0
        %v2423 = vadd.f32 0.0, %v2422
        %v2424 = vpop.f32.mrf.mxu0
        %2425 = vmatprep.mubr.bf16.mxu0 0
        %2426 = vmatmul.mubr.bf16.gmra.mxu0 %v1803
        %v2427 = vpop.f32.mrf.mxu0
        %v2428 = vadd.f32 0.0, %v2427
        %v2429 = vpop.f32.mrf.mxu0
        %v2430 = vpop.f32.mrf.mxu0
        %v2431 = vadd.f32 0.0, %v2430
        %v2432 = vpop.f32.mrf.mxu0
        %2433 = vmatprep.mubr.bf16.mxu0 0
        %2434 = vmatmul.mubr.bf16.gmra.mxu0 %v1805
        %v2435 = vpop.f32.mrf.mxu0
        %v2436 = vadd.f32 0.0, %v2435
        %v2437 = vpop.f32.mrf.mxu0
        %v2438 = vpop.f32.mrf.mxu0
        %v2439 = vadd.f32 0.0, %v2438
        %v2440 = vpop.f32.mrf.mxu0
        %2441 = vmatprep.mubr.bf16.mxu0 0
        %2442 = vmatmul.mubr.bf16.gmra.mxu0 %v1807
        %v2443 = vpop.f32.mrf.mxu0
        %v2444 = vadd.f32 0.0, %v2443
        %v2445 = vpop.f32.mrf.mxu0
        %v2446 = vpop.f32.mrf.mxu0
        %v2447 = vadd.f32 0.0, %v2446
        %v2448 = vpop.f32.mrf.mxu0
        %2449 = vmatprep.mubr.bf16.mxu0 0
        %2450 = vmatmul.mubr.bf16.gmra.mxu0 %v1809
        %v2451 = vpop.f32.mrf.mxu0
        %v2452 = vadd.f32 0.0, %v2451
        %v2453 = vpop.f32.mrf.mxu0
        %v2454 = vpop.f32.mrf.mxu0
        %v2455 = vadd.f32 0.0, %v2454
        %v2456 = vpop.f32.mrf.mxu0
        %2457 = vmatprep.mubr.bf16.mxu0 0
        %2458 = vmatmul.mubr.bf16.gmra.mxu0 %v1811
        %v2459 = vpop.f32.mrf.mxu0
        %v2460 = vadd.f32 0.0, %v2459
        %v2461 = vpop.f32.mrf.mxu0
        %v2462 = vpop.f32.mrf.mxu0
        %v2463 = vadd.f32 0.0, %v2462
        %v2464 = vpop.f32.mrf.mxu0
        %2465 = vdwg.mxu0
        %v2466 = vsel %vm1911, %v2404, -1e+30
        %v2467 = vsel %vm1912, %v2407, -1e+30
        %v2468 = vsel %vm1913, %v2412, -1e+30
        %v2469 = vsel %vm1914, %v2415, -1e+30
        %v2470 = vsel %vm1915, %v2420, -1e+30
        %v2471 = vsel %vm1916, %v2423, -1e+30
        %v2472 = vsel %vm1917, %v2428, -1e+30
        %v2473 = vsel %vm1918, %v2431, -1e+30
        %v2474 = vsel %vm1919, %v2436, -1e+30
        %v2475 = vsel %vm1920, %v2439, -1e+30
        %v2476 = vsel %vm1921, %v2444, -1e+30
        %v2477 = vsel %vm1922, %v2447, -1e+30
        %v2478 = vsel %vm1923, %v2452, -1e+30
        %v2479 = vsel %vm1924, %v2455, -1e+30
        %v2480 = vsel %vm1925, %v2460, -1e+30
        %v2481 = vsel %vm1926, %v2463, -1e+30
        %2482 = vmax.xlane.f32.xlu0 %v2466
        %v2483 = vpop.xlane.xlu0 %2482
        %2484 = vmax.xlane.f32.xlu0 %v2467
        %v2485 = vpop.xlane.xlu0 %2484
        %2486 = vmax.xlane.f32.xlu0 %v2468
        %v2487 = vpop.xlane.xlu0 %2486
        %2488 = vmax.xlane.f32.xlu0 %v2469
        %v2489 = vpop.xlane.xlu0 %2488
        %2490 = vmax.xlane.f32.xlu0 %v2470
        %v2491 = vpop.xlane.xlu0 %2490
        %2492 = vmax.xlane.f32.xlu0 %v2471
        %v2493 = vpop.xlane.xlu0 %2492
        %2494 = vmax.xlane.f32.xlu0 %v2472
        %v2495 = vpop.xlane.xlu0 %2494
        %2496 = vmax.xlane.f32.xlu0 %v2473
        %v2497 = vpop.xlane.xlu0 %2496
        %2498 = vmax.xlane.f32.xlu0 %v2474
        %v2499 = vpop.xlane.xlu0 %2498
        %2500 = vmax.xlane.f32.xlu0 %v2475
        %v2501 = vpop.xlane.xlu0 %2500
        %2502 = vmax.xlane.f32.xlu0 %v2476
        %v2503 = vpop.xlane.xlu0 %2502
        %2504 = vmax.xlane.f32.xlu0 %v2477
        %v2505 = vpop.xlane.xlu0 %2504
        %2506 = vmax.xlane.f32.xlu0 %v2478
        %v2507 = vpop.xlane.xlu0 %2506
        %2508 = vmax.xlane.f32.xlu0 %v2479
        %v2509 = vpop.xlane.xlu0 %2508
        %2510 = vmax.xlane.f32.xlu0 %v2480
        %v2511 = vpop.xlane.xlu0 %2510
        %2512 = vmax.xlane.f32.xlu0 %v2481
        %v2513 = vpop.xlane.xlu0 %2512
        %v2514 = vsub.f32 %v2466, %v2483
        %v2515 = vsub.f32 %v2467, %v2485
        %v2516 = vsub.f32 %v2468, %v2487
        %v2517 = vsub.f32 %v2469, %v2489
        %v2518 = vsub.f32 %v2470, %v2491
        %v2519 = vsub.f32 %v2471, %v2493
        %v2520 = vsub.f32 %v2472, %v2495
        %v2521 = vsub.f32 %v2473, %v2497
        %v2522 = vsub.f32 %v2474, %v2499
        %v2523 = vsub.f32 %v2475, %v2501
        %v2524 = vsub.f32 %v2476, %v2503
        %v2525 = vsub.f32 %v2477, %v2505
        %v2526 = vsub.f32 %v2478, %v2507
        %v2527 = vsub.f32 %v2479, %v2509
        %v2528 = vsub.f32 %v2480, %v2511
        %v2529 = vsub.f32 %v2481, %v2513
        %v2530 = vmul.f32 %v2514, 1.442695
        %v2531 = vpow.pop %v2530
        %v2532 = vmul.f32 %v2515, 1.442695
        %v2533 = vpow.pop %v2532
        %v2534 = vmul.f32 %v2516, 1.442695
        %v2535 = vpow.pop %v2534
        %v2536 = vmul.f32 %v2517, 1.442695
        %v2537 = vpow.pop %v2536
        %v2538 = vmul.f32 %v2518, 1.442695
        %v2539 = vpow.pop %v2538
        %v2540 = vmul.f32 %v2519, 1.442695
        %v2541 = vpow.pop %v2540
        %v2542 = vmul.f32 %v2520, 1.442695
        %v2543 = vpow.pop %v2542
        %v2544 = vmul.f32 %v2521, 1.442695
        %v2545 = vpow.pop %v2544
        %v2546 = vmul.f32 %v2522, 1.442695
        %v2547 = vpow.pop %v2546
        %v2548 = vmul.f32 %v2523, 1.442695
        %v2549 = vpow.pop %v2548
        %v2550 = vmul.f32 %v2524, 1.442695
        %v2551 = vpow.pop %v2550
        %v2552 = vmul.f32 %v2525, 1.442695
        %v2553 = vpow.pop %v2552
        %v2554 = vmul.f32 %v2526, 1.442695
        %v2555 = vpow.pop %v2554
        %v2556 = vmul.f32 %v2527, 1.442695
        %v2557 = vpow.pop %v2556
        %v2558 = vmul.f32 %v2528, 1.442695
        %v2559 = vpow.pop %v2558
        %v2560 = vmul.f32 %v2529, 1.442695
        %v2561 = vpow.pop %v2560
        %2562 = vadd.xlane.f32.xlu0 %v2531
        %v2563 = vpop.xlane.xlu0 %2562
        %2564 = vadd.xlane.f32.xlu0 %v2533
        %v2565 = vpop.xlane.xlu0 %2564
        %2566 = vadd.xlane.f32.xlu0 %v2535
        %v2567 = vpop.xlane.xlu0 %2566
        %2568 = vadd.xlane.f32.xlu0 %v2537
        %v2569 = vpop.xlane.xlu0 %2568
        %2570 = vadd.xlane.f32.xlu0 %v2539
        %v2571 = vpop.xlane.xlu0 %2570
        %2572 = vadd.xlane.f32.xlu0 %v2541
        %v2573 = vpop.xlane.xlu0 %2572
        %2574 = vadd.xlane.f32.xlu0 %v2543
        %v2575 = vpop.xlane.xlu0 %2574
        %2576 = vadd.xlane.f32.xlu0 %v2545
        %v2577 = vpop.xlane.xlu0 %2576
        %2578 = vadd.xlane.f32.xlu0 %v2547
        %v2579 = vpop.xlane.xlu0 %2578
        %2580 = vadd.xlane.f32.xlu0 %v2549
        %v2581 = vpop.xlane.xlu0 %2580
        %2582 = vadd.xlane.f32.xlu0 %v2551
        %v2583 = vpop.xlane.xlu0 %2582
        %2584 = vadd.xlane.f32.xlu0 %v2553
        %v2585 = vpop.xlane.xlu0 %2584
        %2586 = vadd.xlane.f32.xlu0 %v2555
        %v2587 = vpop.xlane.xlu0 %2586
        %2588 = vadd.xlane.f32.xlu0 %v2557
        %v2589 = vpop.xlane.xlu0 %2588
        %2590 = vadd.xlane.f32.xlu0 %v2559
        %v2591 = vpop.xlane.xlu0 %2590
        %2592 = vadd.xlane.f32.xlu0 %v2561
        %v2593 = vpop.xlane.xlu0 %2592
        %v2594 = vrcp.pop %v2563
        %v2595 = vrcp.pop %v2565
        %v2596 = vrcp.pop %v2567
        %v2597 = vrcp.pop %v2569
        %v2598 = vrcp.pop %v2571
        %v2599 = vrcp.pop %v2573
        %v2600 = vrcp.pop %v2575
        %v2601 = vrcp.pop %v2577
        %v2602 = vrcp.pop %v2579
        %v2603 = vrcp.pop %v2581
        %v2604 = vrcp.pop %v2583
        %v2605 = vrcp.pop %v2585
        %v2606 = vrcp.pop %v2587
        %v2607 = vrcp.pop %v2589
        %v2608 = vrcp.pop %v2591
        %v2609 = vrcp.pop %v2593
        %v2610 = vmul.f32 %v2531, %v2594
        %v2611 = vmul.f32 %v2533, %v2595
        %v2612 = vmul.f32 %v2535, %v2596
        %v2613 = vmul.f32 %v2537, %v2597
        %v2614 = vmul.f32 %v2539, %v2598
        %v2615 = vmul.f32 %v2541, %v2599
        %v2616 = vmul.f32 %v2543, %v2600
        %v2617 = vmul.f32 %v2545, %v2601
        %v2618 = vmul.f32 %v2547, %v2602
        %v2619 = vmul.f32 %v2549, %v2603
        %v2620 = vmul.f32 %v2551, %v2604
        %v2621 = vmul.f32 %v2553, %v2605
        %v2622 = vmul.f32 %v2555, %v2606
        %v2623 = vmul.f32 %v2557, %v2607
        %v2624 = vmul.f32 %v2559, %v2608
        %v2625 = vmul.f32 %v2561, %v2609
        %v2626 = vpack.c.bf16 %v2611, %v2610
        %v2627 = vpack.c.bf16 %v2613, %v2612
        %v2628 = vpack.c.bf16 %v2615, %v2614
        %v2629 = vpack.c.bf16 %v2617, %v2616
        %v2630 = vpack.c.bf16 %v2619, %v2618
        %v2631 = vpack.c.bf16 %v2621, %v2620
        %v2632 = vpack.c.bf16 %v2623, %v2622
        %v2633 = vpack.c.bf16 %v2625, %v2624
        %2634 = vmatprep.subr.bf16.mxu0 0
        %2635 = vmatpush1.bf16.msra.mxu0 %v1875
        %2636 = vmatprep.subr.bf16.mxu0 0
        %2637 = vmatpush1.bf16.msra.mxu0 %v1873
        %2638 = vmatprep.subr.bf16.mxu0 0
        %2639 = vmatpush1.bf16.msra.mxu0 %v1871
        %2640 = vmatprep.subr.bf16.mxu0 0
        %2641 = vmatpush1.bf16.msra.mxu0 %v1869
        %2642 = vmatprep.subr.bf16.mxu0 0
        %2643 = vmatpush1.bf16.msra.mxu0 %v1867
        %2644 = vmatprep.subr.bf16.mxu0 0
        %2645 = vmatpush1.bf16.msra.mxu0 %v1865
        %2646 = vmatprep.subr.bf16.mxu0 0
        %2647 = vmatpush1.bf16.msra.mxu0 %v1863
        %2648 = vmatprep.subr.bf16.mxu0 0
        %2649 = vmatpush1.bf16.msra.mxu0 %v1861
        %2650 = vmatprep.subr.bf16.mxu0 0
        %2651 = vmatpush2.bf16.msra.mxu0 0
        %2652 = vmatprep.subr.bf16.mxu0 0
        %2653 = vmatpush2.bf16.msra.mxu0 0
        %2654 = vmatprep.subr.bf16.mxu0 0
        %2655 = vmatpush2.bf16.msra.mxu0 0
        %2656 = vmatprep.subr.bf16.mxu0 0
        %2657 = vmatpush2.bf16.msra.mxu0 0
        %2658 = vmatprep.subr.bf16.mxu0 0
        %2659 = vmatpush2.bf16.msra.mxu0 0
        %2660 = vmatprep.subr.bf16.mxu0 0
        %2661 = vmatpush2.bf16.msra.mxu0 0
        %2662 = vmatprep.subr.bf16.mxu0 0
        %2663 = vmatpush2.bf16.msra.mxu0 0
        %2664 = vmatprep.subr.bf16.mxu0 0
        %2665 = vmatpush2.bf16.msra.mxu0 0
        %2666 = vmatprep.mubr.bf16.mxu0 0
        %2667 = vmatmul.mubr.bf16.gmra.mxu0 %v2626
        %v2668 = vpop.f32.mrf.mxu0
        %v2669 = vadd.f32 0.0, %v2668
        %v2670 = vpop.f32.mrf.mxu0
        %v2671 = vpop.f32.mrf.mxu0
        %v2672 = vadd.f32 0.0, %v2671
        %v2673 = vpop.f32.mrf.mxu0
        %2674 = vmatprep.mubr.bf16.mxu0 0
        %2675 = vmatmul.mubr.bf16.gmra.mxu0 %v2627
        %v2676 = vpop.f32.mrf.mxu0
        %v2677 = vadd.f32 0.0, %v2676
        %v2678 = vpop.f32.mrf.mxu0
        %v2679 = vpop.f32.mrf.mxu0
        %v2680 = vadd.f32 0.0, %v2679
        %v2681 = vpop.f32.mrf.mxu0
        %2682 = vmatprep.mubr.bf16.mxu0 0
        %2683 = vmatmul.mubr.bf16.gmra.mxu0 %v2628
        %v2684 = vpop.f32.mrf.mxu0
        %v2685 = vadd.f32 0.0, %v2684
        %v2686 = vpop.f32.mrf.mxu0
        %v2687 = vpop.f32.mrf.mxu0
        %v2688 = vadd.f32 0.0, %v2687
        %v2689 = vpop.f32.mrf.mxu0
        %2690 = vmatprep.mubr.bf16.mxu0 0
        %2691 = vmatmul.mubr.bf16.gmra.mxu0 %v2629
        %v2692 = vpop.f32.mrf.mxu0
        %v2693 = vadd.f32 0.0, %v2692
        %v2694 = vpop.f32.mrf.mxu0
        %v2695 = vpop.f32.mrf.mxu0
        %v2696 = vadd.f32 0.0, %v2695
        %v2697 = vpop.f32.mrf.mxu0
        %2698 = vmatprep.mubr.bf16.mxu0 0
        %2699 = vmatmul.mubr.bf16.gmra.mxu0 %v2630
        %v2700 = vpop.f32.mrf.mxu0
        %v2701 = vadd.f32 0.0, %v2700
        %v2702 = vpop.f32.mrf.mxu0
        %v2703 = vpop.f32.mrf.mxu0
        %v2704 = vadd.f32 0.0, %v2703
        %v2705 = vpop.f32.mrf.mxu0
        %2706 = vmatprep.mubr.bf16.mxu0 0
        %2707 = vmatmul.mubr.bf16.gmra.mxu0 %v2631
        %v2708 = vpop.f32.mrf.mxu0
        %v2709 = vadd.f32 0.0, %v2708
        %v2710 = vpop.f32.mrf.mxu0
        %v2711 = vpop.f32.mrf.mxu0
        %v2712 = vadd.f32 0.0, %v2711
        %v2713 = vpop.f32.mrf.mxu0
        %2714 = vmatprep.mubr.bf16.mxu0 0
        %2715 = vmatmul.mubr.bf16.gmra.mxu0 %v2632
        %v2716 = vpop.f32.mrf.mxu0
        %v2717 = vadd.f32 0.0, %v2716
        %v2718 = vpop.f32.mrf.mxu0
        %v2719 = vpop.f32.mrf.mxu0
        %v2720 = vadd.f32 0.0, %v2719
        %v2721 = vpop.f32.mrf.mxu0
        %2722 = vmatprep.mubr.bf16.mxu0 0
        %2723 = vmatmul.mubr.bf16.gmra.mxu0 %v2633
        %v2724 = vpop.f32.mrf.mxu0
        %v2725 = vadd.f32 0.0, %v2724
        %v2726 = vpop.f32.mrf.mxu0
        %v2727 = vpop.f32.mrf.mxu0
        %v2728 = vadd.f32 0.0, %v2727
        %v2729 = vpop.f32.mrf.mxu0
        %2730 = vdwg.mxu0
        %v2731 = vpack.c.bf16 %v2672, %v2669
        %v2732 = vpack.c.bf16 %v2680, %v2677
        %v2733 = vpack.c.bf16 %v2688, %v2685
        %v2734 = vpack.c.bf16 %v2696, %v2693
        %v2735 = vpack.c.bf16 %v2704, %v2701
        %v2736 = vpack.c.bf16 %v2712, %v2709
        %v2737 = vpack.c.bf16 %v2720, %v2717
        %v2738 = vpack.c.bf16 %v2728, %v2725
        %v2747 = vunpack.c.l.b16 %v2731
        %v2748 = vunpack.c.h.b16 %v2731
        %v2749 = vunpack.c.l.b16 %v2732
        %v2750 = vunpack.c.h.b16 %v2732
        %v2751 = vunpack.c.l.b16 %v2733
        %v2752 = vunpack.c.h.b16 %v2733
        %v2753 = vunpack.c.l.b16 %v2734
        %v2754 = vunpack.c.h.b16 %v2734
        %v2755 = vunpack.c.l.b16 %v2735
        %v2756 = vunpack.c.h.b16 %v2735
        %v2757 = vunpack.c.l.b16 %v2736
        %v2758 = vunpack.c.h.b16 %v2736
        %v2759 = vunpack.c.l.b16 %v2737
        %v2760 = vunpack.c.h.b16 %v2737
        %v2761 = vunpack.c.l.b16 %v2738
        %v2762 = vunpack.c.h.b16 %v2738
        %v2763 = vpack.c.b16 %v2747, %v2747
        %v2764 = vpack.c.b16 %v2748, %v2748
        %v2765 = vpack.c.b16 %v2749, %v2749
        %v2766 = vpack.c.b16 %v2750, %v2750
        %v2767 = vpack.c.b16 %v2751, %v2751
        %v2768 = vpack.c.b16 %v2752, %v2752
        %v2769 = vpack.c.b16 %v2753, %v2753
        %v2770 = vpack.c.b16 %v2754, %v2754
        %v2771 = vpack.c.b16 %v2755, %v2755
        %v2772 = vpack.c.b16 %v2756, %v2756
        %v2773 = vpack.c.b16 %v2757, %v2757
        %v2774 = vpack.c.b16 %v2758, %v2758
        %v2775 = vpack.c.b16 %v2759, %v2759
        %v2776 = vpack.c.b16 %v2760, %v2760
        %v2777 = vpack.c.b16 %v2761, %v2761
        %v2778 = vpack.c.b16 %v2762, %v2762
        %2795 = vst [vmem:[#allocation2 + $0x4] sm:$0xf] %v2763
        %2796 = vst [vmem:[#allocation2 + $0xc] sm:$0xf] %v2764
        %2797 = vst [vmem:[#allocation2 + $0x14] sm:$0xf] %v2765
        %2798 = vst [vmem:[#allocation2 + $0x1c] sm:$0xf] %v2766
        %2799 = vst [vmem:[#allocation2 + $0x24] sm:$0xf] %v2767
        %2800 = vst [vmem:[#allocation2 + $0x2c] sm:$0xf] %v2768
        %2801 = vst [vmem:[#allocation2 + $0x34] sm:$0xf] %v2769
        %2802 = vst [vmem:[#allocation2 + $0x3c] sm:$0xf] %v2770
        %2803 = vst [vmem:[#allocation2 + $0x44] sm:$0xf] %v2771
        %2804 = vst [vmem:[#allocation2 + $0x4c] sm:$0xf] %v2772
        %2805 = vst [vmem:[#allocation2 + $0x54] sm:$0xf] %v2773
        %2806 = vst [vmem:[#allocation2 + $0x5c] sm:$0xf] %v2774
        %2807 = vst [vmem:[#allocation2 + $0x64] sm:$0xf] %v2775
        %2808 = vst [vmem:[#allocation2 + $0x6c] sm:$0xf] %v2776
        %2809 = vst [vmem:[#allocation2 + $0x74] sm:$0xf] %v2777
        %2810 = vst [vmem:[#allocation2 + $0x7c] sm:$0xf] %v2778
        %2811 = vmatprep.subr.bf16.mxu0 0
        %2812 = vmatpush1.bf16.xpose.msra.mxu0 %v1858
        %2813 = vmatprep.subr.bf16.mxu0 0
        %2814 = vmatpush1.bf16.xpose.msra.mxu0 %v1856
        %2815 = vmatprep.subr.bf16.mxu0 0
        %2816 = vmatpush1.bf16.xpose.msra.mxu0 %v1854
        %2817 = vmatprep.subr.bf16.mxu0 0
        %2818 = vmatpush1.bf16.xpose.msra.mxu0 %v1852
        %2819 = vmatprep.subr.bf16.mxu0 0
        %2820 = vmatpush1.bf16.xpose.msra.mxu0 %v1850
        %2821 = vmatprep.subr.bf16.mxu0 0
        %2822 = vmatpush1.bf16.xpose.msra.mxu0 %v1848
        %2823 = vmatprep.subr.bf16.mxu0 0
        %2824 = vmatpush1.bf16.xpose.msra.mxu0 %v1846
        %2825 = vmatprep.subr.bf16.mxu0 0
        %2826 = vmatpush1.bf16.xpose.msra.mxu0 %v1844
        %2827 = vmatprep.subr.bf16.mxu0 0
        %2828 = vmatpush2.bf16.xpose.msra.mxu0 0
        %2829 = vmatprep.subr.bf16.mxu0 0
        %2830 = vmatpush2.bf16.xpose.msra.mxu0 0
        %2831 = vmatprep.subr.bf16.mxu0 0
        %2832 = vmatpush2.bf16.xpose.msra.mxu0 0
        %2833 = vmatprep.subr.bf16.mxu0 0
        %2834 = vmatpush2.bf16.xpose.msra.mxu0 0
        %2835 = vmatprep.subr.bf16.mxu0 0
        %2836 = vmatpush2.bf16.xpose.msra.mxu0 0
        %2837 = vmatprep.subr.bf16.mxu0 0
        %2838 = vmatpush2.bf16.xpose.msra.mxu0 0
        %2839 = vmatprep.subr.bf16.mxu0 0
        %2840 = vmatpush2.bf16.xpose.msra.mxu0 0
        %2841 = vmatprep.subr.bf16.mxu0 0
        %2842 = vmatpush2.bf16.xpose.msra.mxu0 0
        %2843 = vmatprep.mubr.bf16.mxu0 0
        %2844 = vmatmul.mubr.bf16.gmra.mxu0 %v1812
        %v2845 = vpop.f32.mrf.mxu0
        %v2846 = vadd.f32 0.0, %v2845
        %v2847 = vpop.f32.mrf.mxu0
        %v2848 = vpop.f32.mrf.mxu0
        %v2849 = vadd.f32 0.0, %v2848
        %v2850 = vpop.f32.mrf.mxu0
        %2851 = vmatprep.mubr.bf16.mxu0 0
        %2852 = vmatmul.mubr.bf16.gmra.mxu0 %v1814
        %v2853 = vpop.f32.mrf.mxu0
        %v2854 = vadd.f32 0.0, %v2853
        %v2855 = vpop.f32.mrf.mxu0
        %v2856 = vpop.f32.mrf.mxu0
        %v2857 = vadd.f32 0.0, %v2856
        %v2858 = vpop.f32.mrf.mxu0
        %2859 = vmatprep.mubr.bf16.mxu0 0
        %2860 = vmatmul.mubr.bf16.gmra.mxu0 %v1816
        %v2861 = vpop.f32.mrf.mxu0
        %v2862 = vadd.f32 0.0, %v2861
        %v2863 = vpop.f32.mrf.mxu0
        %v2864 = vpop.f32.mrf.mxu0
        %v2865 = vadd.f32 0.0, %v2864
        %v2866 = vpop.f32.mrf.mxu0
        %2867 = vmatprep.mubr.bf16.mxu0 0
        %2868 = vmatmul.mubr.bf16.gmra.mxu0 %v1818
        %v2869 = vpop.f32.mrf.mxu0
        %v2870 = vadd.f32 0.0, %v2869
        %v2871 = vpop.f32.mrf.mxu0
        %v2872 = vpop.f32.mrf.mxu0
        %v2873 = vadd.f32 0.0, %v2872
        %v2874 = vpop.f32.mrf.mxu0
        %2875 = vmatprep.mubr.bf16.mxu0 0
        %2876 = vmatmul.mubr.bf16.gmra.mxu0 %v1820
        %v2877 = vpop.f32.mrf.mxu0
        %v2878 = vadd.f32 0.0, %v2877
        %v2879 = vpop.f32.mrf.mxu0
        %v2880 = vpop.f32.mrf.mxu0
        %v2881 = vadd.f32 0.0, %v2880
        %v2882 = vpop.f32.mrf.mxu0
        %2883 = vmatprep.mubr.bf16.mxu0 0
        %2884 = vmatmul.mubr.bf16.gmra.mxu0 %v1822
        %v2885 = vpop.f32.mrf.mxu0
        %v2886 = vadd.f32 0.0, %v2885
        %v2887 = vpop.f32.mrf.mxu0
        %v2888 = vpop.f32.mrf.mxu0
        %v2889 = vadd.f32 0.0, %v2888
        %v2890 = vpop.f32.mrf.mxu0
        %2891 = vmatprep.mubr.bf16.mxu0 0
        %2892 = vmatmul.mubr.bf16.gmra.mxu0 %v1824
        %v2893 = vpop.f32.mrf.mxu0
        %v2894 = vadd.f32 0.0, %v2893
        %v2895 = vpop.f32.mrf.mxu0
        %v2896 = vpop.f32.mrf.mxu0
        %v2897 = vadd.f32 0.0, %v2896
        %v2898 = vpop.f32.mrf.mxu0
        %2899 = vmatprep.mubr.bf16.mxu0 0
        %2900 = vmatmul.mubr.bf16.gmra.mxu0 %v1826
        %v2901 = vpop.f32.mrf.mxu0
        %v2902 = vadd.f32 0.0, %v2901
        %v2903 = vpop.f32.mrf.mxu0
        %v2904 = vpop.f32.mrf.mxu0
        %v2905 = vadd.f32 0.0, %v2904
        %v2906 = vpop.f32.mrf.mxu0
        %2907 = vdwg.mxu0
        %v2908 = vsel %vm1911, %v2846, -1e+30
        %v2909 = vsel %vm1912, %v2849, -1e+30
        %v2910 = vsel %vm1913, %v2854, -1e+30
        %v2911 = vsel %vm1914, %v2857, -1e+30
        %v2912 = vsel %vm1915, %v2862, -1e+30
        %v2913 = vsel %vm1916, %v2865, -1e+30
        %v2914 = vsel %vm1917, %v2870, -1e+30
        %v2915 = vsel %vm1918, %v2873, -1e+30
        %v2916 = vsel %vm1919, %v2878, -1e+30
        %v2917 = vsel %vm1920, %v2881, -1e+30
        %v2918 = vsel %vm1921, %v2886, -1e+30
        %v2919 = vsel %vm1922, %v2889, -1e+30
        %v2920 = vsel %vm1923, %v2894, -1e+30
        %v2921 = vsel %vm1924, %v2897, -1e+30
        %v2922 = vsel %vm1925, %v2902, -1e+30
        %v2923 = vsel %vm1926, %v2905, -1e+30
        %2924 = vmax.xlane.f32.xlu0 %v2908
        %v2925 = vpop.xlane.xlu0 %2924
        %2926 = vmax.xlane.f32.xlu0 %v2909
        %v2927 = vpop.xlane.xlu0 %2926
        %2928 = vmax.xlane.f32.xlu0 %v2910
        %v2929 = vpop.xlane.xlu0 %2928
        %2930 = vmax.xlane.f32.xlu0 %v2911
        %v2931 = vpop.xlane.xlu0 %2930
        %2932 = vmax.xlane.f32.xlu0 %v2912
        %v2933 = vpop.xlane.xlu0 %2932
        %2934 = vmax.xlane.f32.xlu0 %v2913
        %v2935 = vpop.xlane.xlu0 %2934
        %2936 = vmax.xlane.f32.xlu0 %v2914
        %v2937 = vpop.xlane.xlu0 %2936
        %2938 = vmax.xlane.f32.xlu0 %v2915
        %v2939 = vpop.xlane.xlu0 %2938
        %2940 = vmax.xlane.f32.xlu0 %v2916
        %v2941 = vpop.xlane.xlu0 %2940
        %2942 = vmax.xlane.f32.xlu0 %v2917
        %v2943 = vpop.xlane.xlu0 %2942
        %2944 = vmax.xlane.f32.xlu0 %v2918
        %v2945 = vpop.xlane.xlu0 %2944
        %2946 = vmax.xlane.f32.xlu0 %v2919
        %v2947 = vpop.xlane.xlu0 %2946
        %2948 = vmax.xlane.f32.xlu0 %v2920
        %v2949 = vpop.xlane.xlu0 %2948
        %2950 = vmax.xlane.f32.xlu0 %v2921
        %v2951 = vpop.xlane.xlu0 %2950
        %2952 = vmax.xlane.f32.xlu0 %v2922
        %v2953 = vpop.xlane.xlu0 %2952
        %2954 = vmax.xlane.f32.xlu0 %v2923
        %v2955 = vpop.xlane.xlu0 %2954
        %v2956 = vsub.f32 %v2908, %v2925
        %v2957 = vsub.f32 %v2909, %v2927
        %v2958 = vsub.f32 %v2910, %v2929
        %v2959 = vsub.f32 %v2911, %v2931
        %v2960 = vsub.f32 %v2912, %v2933
        %v2961 = vsub.f32 %v2913, %v2935
        %v2962 = vsub.f32 %v2914, %v2937
        %v2963 = vsub.f32 %v2915, %v2939
        %v2964 = vsub.f32 %v2916, %v2941
        %v2965 = vsub.f32 %v2917, %v2943
        %v2966 = vsub.f32 %v2918, %v2945
        %v2967 = vsub.f32 %v2919, %v2947
        %v2968 = vsub.f32 %v2920, %v2949
        %v2969 = vsub.f32 %v2921, %v2951
        %v2970 = vsub.f32 %v2922, %v2953
        %v2971 = vsub.f32 %v2923, %v2955
        %v2972 = vmul.f32 %v2956, 1.442695
        %v2973 = vpow.pop %v2972
        %v2974 = vmul.f32 %v2957, 1.442695
        %v2975 = vpow.pop %v2974
        %v2976 = vmul.f32 %v2958, 1.442695
        %v2977 = vpow.pop %v2976
        %v2978 = vmul.f32 %v2959, 1.442695
        %v2979 = vpow.pop %v2978
        %v2980 = vmul.f32 %v2960, 1.442695
        %v2981 = vpow.pop %v2980
        %v2982 = vmul.f32 %v2961, 1.442695
        %v2983 = vpow.pop %v2982
        %v2984 = vmul.f32 %v2962, 1.442695
        %v2985 = vpow.pop %v2984
        %v2986 = vmul.f32 %v2963, 1.442695
        %v2987 = vpow.pop %v2986
        %v2988 = vmul.f32 %v2964, 1.442695
        %v2989 = vpow.pop %v2988
        %v2990 = vmul.f32 %v2965, 1.442695
        %v2991 = vpow.pop %v2990
        %v2992 = vmul.f32 %v2966, 1.442695
        %v2993 = vpow.pop %v2992
        %v2994 = vmul.f32 %v2967, 1.442695
        %v2995 = vpow.pop %v2994
        %v2996 = vmul.f32 %v2968, 1.442695
        %v2997 = vpow.pop %v2996
        %v2998 = vmul.f32 %v2969, 1.442695
        %v2999 = vpow.pop %v2998
        %v3000 = vmul.f32 %v2970, 1.442695
        %v3001 = vpow.pop %v3000
        %v3002 = vmul.f32 %v2971, 1.442695
        %v3003 = vpow.pop %v3002
        %3004 = vadd.xlane.f32.xlu0 %v2973
        %v3005 = vpop.xlane.xlu0 %3004
        %3006 = vadd.xlane.f32.xlu0 %v2975
        %v3007 = vpop.xlane.xlu0 %3006
        %3008 = vadd.xlane.f32.xlu0 %v2977
        %v3009 = vpop.xlane.xlu0 %3008
        %3010 = vadd.xlane.f32.xlu0 %v2979
        %v3011 = vpop.xlane.xlu0 %3010
        %3012 = vadd.xlane.f32.xlu0 %v2981
        %v3013 = vpop.xlane.xlu0 %3012
        %3014 = vadd.xlane.f32.xlu0 %v2983
        %v3015 = vpop.xlane.xlu0 %3014
        %3016 = vadd.xlane.f32.xlu0 %v2985
        %v3017 = vpop.xlane.xlu0 %3016
        %3018 = vadd.xlane.f32.xlu0 %v2987
        %v3019 = vpop.xlane.xlu0 %3018
        %3020 = vadd.xlane.f32.xlu0 %v2989
        %v3021 = vpop.xlane.xlu0 %3020
        %3022 = vadd.xlane.f32.xlu0 %v2991
        %v3023 = vpop.xlane.xlu0 %3022
        %3024 = vadd.xlane.f32.xlu0 %v2993
        %v3025 = vpop.xlane.xlu0 %3024
        %3026 = vadd.xlane.f32.xlu0 %v2995
        %v3027 = vpop.xlane.xlu0 %3026
        %3028 = vadd.xlane.f32.xlu0 %v2997
        %v3029 = vpop.xlane.xlu0 %3028
        %3030 = vadd.xlane.f32.xlu0 %v2999
        %v3031 = vpop.xlane.xlu0 %3030
        %3032 = vadd.xlane.f32.xlu0 %v3001
        %v3033 = vpop.xlane.xlu0 %3032
        %3034 = vadd.xlane.f32.xlu0 %v3003
        %v3035 = vpop.xlane.xlu0 %3034
        %v3036 = vrcp.pop %v3005
        %v3037 = vrcp.pop %v3007
        %v3038 = vrcp.pop %v3009
        %v3039 = vrcp.pop %v3011
        %v3040 = vrcp.pop %v3013
        %v3041 = vrcp.pop %v3015
        %v3042 = vrcp.pop %v3017
        %v3043 = vrcp.pop %v3019
        %v3044 = vrcp.pop %v3021
        %v3045 = vrcp.pop %v3023
        %v3046 = vrcp.pop %v3025
        %v3047 = vrcp.pop %v3027
        %v3048 = vrcp.pop %v3029
        %v3049 = vrcp.pop %v3031
        %v3050 = vrcp.pop %v3033
        %v3051 = vrcp.pop %v3035
        %v3052 = vmul.f32 %v2973, %v3036
        %v3053 = vmul.f32 %v2975, %v3037
        %v3054 = vmul.f32 %v2977, %v3038
        %v3055 = vmul.f32 %v2979, %v3039
        %v3056 = vmul.f32 %v2981, %v3040
        %v3057 = vmul.f32 %v2983, %v3041
        %v3058 = vmul.f32 %v2985, %v3042
        %v3059 = vmul.f32 %v2987, %v3043
        %v3060 = vmul.f32 %v2989, %v3044
        %v3061 = vmul.f32 %v2991, %v3045
        %v3062 = vmul.f32 %v2993, %v3046
        %v3063 = vmul.f32 %v2995, %v3047
        %v3064 = vmul.f32 %v2997, %v3048
        %v3065 = vmul.f32 %v2999, %v3049
        %v3066 = vmul.f32 %v3001, %v3050
        %v3067 = vmul.f32 %v3003, %v3051
        %v3068 = vpack.c.bf16 %v3053, %v3052
        %v3069 = vpack.c.bf16 %v3055, %v3054
        %v3070 = vpack.c.bf16 %v3057, %v3056
        %v3071 = vpack.c.bf16 %v3059, %v3058
        %v3072 = vpack.c.bf16 %v3061, %v3060
        %v3073 = vpack.c.bf16 %v3063, %v3062
        %v3074 = vpack.c.bf16 %v3065, %v3064
        %v3075 = vpack.c.bf16 %v3067, %v3066
        %3076 = vmatprep.subr.bf16.mxu0 0
        %3077 = vmatpush1.bf16.msra.mxu0 %v1890
        %3078 = vmatprep.subr.bf16.mxu0 0
        %3079 = vmatpush1.bf16.msra.mxu0 %v1888
        %3080 = vmatprep.subr.bf16.mxu0 0
        %3081 = vmatpush1.bf16.msra.mxu0 %v1886
        %3082 = vmatprep.subr.bf16.mxu0 0
        %3083 = vmatpush1.bf16.msra.mxu0 %v1884
        %3084 = vmatprep.subr.bf16.mxu0 0
        %3085 = vmatpush1.bf16.msra.mxu0 %v1882
        %3086 = vmatprep.subr.bf16.mxu0 0
        %3087 = vmatpush1.bf16.msra.mxu0 %v1880
        %3088 = vmatprep.subr.bf16.mxu0 0
        %3089 = vmatpush1.bf16.msra.mxu0 %v1878
        %3090 = vmatprep.subr.bf16.mxu0 0
        %3091 = vmatpush1.bf16.msra.mxu0 %v1876
        %3092 = vmatprep.subr.bf16.mxu0 0
        %3093 = vmatpush2.bf16.msra.mxu0 0
        %3094 = vmatprep.subr.bf16.mxu0 0
        %3095 = vmatpush2.bf16.msra.mxu0 0
        %3096 = vmatprep.subr.bf16.mxu0 0
        %3097 = vmatpush2.bf16.msra.mxu0 0
        %3098 = vmatprep.subr.bf16.mxu0 0
        %3099 = vmatpush2.bf16.msra.mxu0 0
        %3100 = vmatprep.subr.bf16.mxu0 0
        %3101 = vmatpush2.bf16.msra.mxu0 0
        %3102 = vmatprep.subr.bf16.mxu0 0
        %3103 = vmatpush2.bf16.msra.mxu0 0
        %3104 = vmatprep.subr.bf16.mxu0 0
        %3105 = vmatpush2.bf16.msra.mxu0 0
        %3106 = vmatprep.subr.bf16.mxu0 0
        %3107 = vmatpush2.bf16.msra.mxu0 0
        %3108 = vmatprep.mubr.bf16.mxu0 0
        %3109 = vmatmul.mubr.bf16.gmra.mxu0 %v3068
        %v3110 = vpop.f32.mrf.mxu0
        %v3111 = vadd.f32 0.0, %v3110
        %v3112 = vpop.f32.mrf.mxu0
        %v3113 = vpop.f32.mrf.mxu0
        %v3114 = vadd.f32 0.0, %v3113
        %v3115 = vpop.f32.mrf.mxu0
        %3116 = vmatprep.mubr.bf16.mxu0 0
        %3117 = vmatmul.mubr.bf16.gmra.mxu0 %v3069
        %v3118 = vpop.f32.mrf.mxu0
        %v3119 = vadd.f32 0.0, %v3118
        %v3120 = vpop.f32.mrf.mxu0
        %v3121 = vpop.f32.mrf.mxu0
        %v3122 = vadd.f32 0.0, %v3121
        %v3123 = vpop.f32.mrf.mxu0
        %3124 = vmatprep.mubr.bf16.mxu0 0
        %3125 = vmatmul.mubr.bf16.gmra.mxu0 %v3070
        %v3126 = vpop.f32.mrf.mxu0
        %v3127 = vadd.f32 0.0, %v3126
        %v3128 = vpop.f32.mrf.mxu0
        %v3129 = vpop.f32.mrf.mxu0
        %v3130 = vadd.f32 0.0, %v3129
        %v3131 = vpop.f32.mrf.mxu0
        %3132 = vmatprep.mubr.bf16.mxu0 0
        %3133 = vmatmul.mubr.bf16.gmra.mxu0 %v3071
        %v3134 = vpop.f32.mrf.mxu0
        %v3135 = vadd.f32 0.0, %v3134
        %v3136 = vpop.f32.mrf.mxu0
        %v3137 = vpop.f32.mrf.mxu0
        %v3138 = vadd.f32 0.0, %v3137
        %v3139 = vpop.f32.mrf.mxu0
        %3140 = vmatprep.mubr.bf16.mxu0 0
        %3141 = vmatmul.mubr.bf16.gmra.mxu0 %v3072
        %v3142 = vpop.f32.mrf.mxu0
        %v3143 = vadd.f32 0.0, %v3142
        %v3144 = vpop.f32.mrf.mxu0
        %v3145 = vpop.f32.mrf.mxu0
        %v3146 = vadd.f32 0.0, %v3145
        %v3147 = vpop.f32.mrf.mxu0
        %3148 = vmatprep.mubr.bf16.mxu0 0
        %3149 = vmatmul.mubr.bf16.gmra.mxu0 %v3073
        %v3150 = vpop.f32.mrf.mxu0
        %v3151 = vadd.f32 0.0, %v3150
        %v3152 = vpop.f32.mrf.mxu0
        %v3153 = vpop.f32.mrf.mxu0
        %v3154 = vadd.f32 0.0, %v3153
        %v3155 = vpop.f32.mrf.mxu0
        %3156 = vmatprep.mubr.bf16.mxu0 0
        %3157 = vmatmul.mubr.bf16.gmra.mxu0 %v3074
        %v3158 = vpop.f32.mrf.mxu0
        %v3159 = vadd.f32 0.0, %v3158
        %v3160 = vpop.f32.mrf.mxu0
        %v3161 = vpop.f32.mrf.mxu0
        %v3162 = vadd.f32 0.0, %v3161
        %v3163 = vpop.f32.mrf.mxu0
        %3164 = vmatprep.mubr.bf16.mxu0 0
        %3165 = vmatmul.mubr.bf16.gmra.mxu0 %v3075
        %v3166 = vpop.f32.mrf.mxu0
        %v3167 = vadd.f32 0.0, %v3166
        %v3168 = vpop.f32.mrf.mxu0
        %v3169 = vpop.f32.mrf.mxu0
        %v3170 = vadd.f32 0.0, %v3169
        %v3171 = vpop.f32.mrf.mxu0
        %3172 = vdwg.mxu0
        %v3173 = vpack.c.bf16 %v3114, %v3111
        %v3174 = vpack.c.bf16 %v3122, %v3119
        %v3175 = vpack.c.bf16 %v3130, %v3127
        %v3176 = vpack.c.bf16 %v3138, %v3135
        %v3177 = vpack.c.bf16 %v3146, %v3143
        %v3178 = vpack.c.bf16 %v3154, %v3151
        %v3179 = vpack.c.bf16 %v3162, %v3159
        %v3180 = vpack.c.bf16 %v3170, %v3167
        %v3189 = vunpack.c.l.b16 %v3173
        %v3190 = vunpack.c.h.b16 %v3173
        %v3191 = vunpack.c.l.b16 %v3174
        %v3192 = vunpack.c.h.b16 %v3174
        %v3193 = vunpack.c.l.b16 %v3175
        %v3194 = vunpack.c.h.b16 %v3175
        %v3195 = vunpack.c.l.b16 %v3176
        %v3196 = vunpack.c.h.b16 %v3176
        %v3197 = vunpack.c.l.b16 %v3177
        %v3198 = vunpack.c.h.b16 %v3177
        %v3199 = vunpack.c.l.b16 %v3178
        %v3200 = vunpack.c.h.b16 %v3178
        %v3201 = vunpack.c.l.b16 %v3179
        %v3202 = vunpack.c.h.b16 %v3179
        %v3203 = vunpack.c.l.b16 %v3180
        %v3204 = vunpack.c.h.b16 %v3180
        %v3205 = vpack.c.b16 %v3189, %v3189
        %v3206 = vpack.c.b16 %v3190, %v3190
        %v3207 = vpack.c.b16 %v3191, %v3191
        %v3208 = vpack.c.b16 %v3192, %v3192
        %v3209 = vpack.c.b16 %v3193, %v3193
        %v3210 = vpack.c.b16 %v3194, %v3194
        %v3211 = vpack.c.b16 %v3195, %v3195
        %v3212 = vpack.c.b16 %v3196, %v3196
        %v3213 = vpack.c.b16 %v3197, %v3197
        %v3214 = vpack.c.b16 %v3198, %v3198
        %v3215 = vpack.c.b16 %v3199, %v3199
        %v3216 = vpack.c.b16 %v3200, %v3200
        %v3217 = vpack.c.b16 %v3201, %v3201
        %v3218 = vpack.c.b16 %v3202, %v3202
        %v3219 = vpack.c.b16 %v3203, %v3203
        %v3220 = vpack.c.b16 %v3204, %v3204
        %3237 = vst [vmem:[#allocation2 + $0x80] sm:$0xf] %v3205
        %3238 = vst [vmem:[#allocation2 + $0x88] sm:$0xf] %v3206
        %3239 = vst [vmem:[#allocation2 + $0x90] sm:$0xf] %v3207
        %3240 = vst [vmem:[#allocation2 + $0x98] sm:$0xf] %v3208
        %3241 = vst [vmem:[#allocation2 + $0xa0] sm:$0xf] %v3209
        %3242 = vst [vmem:[#allocation2 + $0xa8] sm:$0xf] %v3210
        %3243 = vst [vmem:[#allocation2 + $0xb0] sm:$0xf] %v3211
        %3244 = vst [vmem:[#allocation2 + $0xb8] sm:$0xf] %v3212
        %3245 = vst [vmem:[#allocation2 + $0xc0] sm:$0xf] %v3213
        %3246 = vst [vmem:[#allocation2 + $0xc8] sm:$0xf] %v3214
        %3247 = vst [vmem:[#allocation2 + $0xd0] sm:$0xf] %v3215
        %3248 = vst [vmem:[#allocation2 + $0xd8] sm:$0xf] %v3216
        %3249 = vst [vmem:[#allocation2 + $0xe0] sm:$0xf] %v3217
        %3250 = vst [vmem:[#allocation2 + $0xe8] sm:$0xf] %v3218
        %3251 = vst [vmem:[#allocation2 + $0xf0] sm:$0xf] %v3219
        %3252 = vst [vmem:[#allocation2 + $0xf8] sm:$0xf] %v3220
        %3253 = vmatprep.subr.bf16.mxu0 0
        %3254 = vmatpush1.bf16.xpose.msra.mxu0 %v1859
        %3255 = vmatprep.subr.bf16.mxu0 0
        %3256 = vmatpush1.bf16.xpose.msra.mxu0 %v1857
        %3257 = vmatprep.subr.bf16.mxu0 0
        %3258 = vmatpush1.bf16.xpose.msra.mxu0 %v1855
        %3259 = vmatprep.subr.bf16.mxu0 0
        %3260 = vmatpush1.bf16.xpose.msra.mxu0 %v1853
        %3261 = vmatprep.subr.bf16.mxu0 0
        %3262 = vmatpush1.bf16.xpose.msra.mxu0 %v1851
        %3263 = vmatprep.subr.bf16.mxu0 0
        %3264 = vmatpush1.bf16.xpose.msra.mxu0 %v1849
        %3265 = vmatprep.subr.bf16.mxu0 0
        %3266 = vmatpush1.bf16.xpose.msra.mxu0 %v1847
        %3267 = vmatprep.subr.bf16.mxu0 0
        %3268 = vmatpush1.bf16.xpose.msra.mxu0 %v1845
        %3269 = vmatprep.subr.bf16.mxu0 0
        %3270 = vmatpush2.bf16.xpose.msra.mxu0 0
        %3271 = vmatprep.subr.bf16.mxu0 0
        %3272 = vmatpush2.bf16.xpose.msra.mxu0 0
        %3273 = vmatprep.subr.bf16.mxu0 0
        %3274 = vmatpush2.bf16.xpose.msra.mxu0 0
        %3275 = vmatprep.subr.bf16.mxu0 0
        %3276 = vmatpush2.bf16.xpose.msra.mxu0 0
        %3277 = vmatprep.subr.bf16.mxu0 0
        %3278 = vmatpush2.bf16.xpose.msra.mxu0 0
        %3279 = vmatprep.subr.bf16.mxu0 0
        %3280 = vmatpush2.bf16.xpose.msra.mxu0 0
        %3281 = vmatprep.subr.bf16.mxu0 0
        %3282 = vmatpush2.bf16.xpose.msra.mxu0 0
        %3283 = vmatprep.subr.bf16.mxu0 0
        %3284 = vmatpush2.bf16.xpose.msra.mxu0 0
        %3285 = vmatprep.mubr.bf16.mxu0 0
        %3286 = vmatmul.mubr.bf16.gmra.mxu0 %v1813
        %v3287 = vpop.f32.mrf.mxu0
        %v3288 = vadd.f32 0.0, %v3287
        %v3289 = vpop.f32.mrf.mxu0
        %v3290 = vpop.f32.mrf.mxu0
        %v3291 = vadd.f32 0.0, %v3290
        %v3292 = vpop.f32.mrf.mxu0
        %3293 = vmatprep.mubr.bf16.mxu0 0
        %3294 = vmatmul.mubr.bf16.gmra.mxu0 %v1815
        %v3295 = vpop.f32.mrf.mxu0
        %v3296 = vadd.f32 0.0, %v3295
        %v3297 = vpop.f32.mrf.mxu0
        %v3298 = vpop.f32.mrf.mxu0
        %v3299 = vadd.f32 0.0, %v3298
        %v3300 = vpop.f32.mrf.mxu0
        %3301 = vmatprep.mubr.bf16.mxu0 0
        %3302 = vmatmul.mubr.bf16.gmra.mxu0 %v1817
        %v3303 = vpop.f32.mrf.mxu0
        %v3304 = vadd.f32 0.0, %v3303
        %v3305 = vpop.f32.mrf.mxu0
        %v3306 = vpop.f32.mrf.mxu0
        %v3307 = vadd.f32 0.0, %v3306
        %v3308 = vpop.f32.mrf.mxu0
        %3309 = vmatprep.mubr.bf16.mxu0 0
        %3310 = vmatmul.mubr.bf16.gmra.mxu0 %v1819
        %v3311 = vpop.f32.mrf.mxu0
        %v3312 = vadd.f32 0.0, %v3311
        %v3313 = vpop.f32.mrf.mxu0
        %v3314 = vpop.f32.mrf.mxu0
        %v3315 = vadd.f32 0.0, %v3314
        %v3316 = vpop.f32.mrf.mxu0
        %3317 = vmatprep.mubr.bf16.mxu0 0
        %3318 = vmatmul.mubr.bf16.gmra.mxu0 %v1821
        %v3319 = vpop.f32.mrf.mxu0
        %v3320 = vadd.f32 0.0, %v3319
        %v3321 = vpop.f32.mrf.mxu0
        %v3322 = vpop.f32.mrf.mxu0
        %v3323 = vadd.f32 0.0, %v3322
        %v3324 = vpop.f32.mrf.mxu0
        %3325 = vmatprep.mubr.bf16.mxu0 0
        %3326 = vmatmul.mubr.bf16.gmra.mxu0 %v1823
        %v3327 = vpop.f32.mrf.mxu0
        %v3328 = vadd.f32 0.0, %v3327
        %v3329 = vpop.f32.mrf.mxu0
        %v3330 = vpop.f32.mrf.mxu0
        %v3331 = vadd.f32 0.0, %v3330
        %v3332 = vpop.f32.mrf.mxu0
        %3333 = vmatprep.mubr.bf16.mxu0 0
        %3334 = vmatmul.mubr.bf16.gmra.mxu0 %v1825
        %v3335 = vpop.f32.mrf.mxu0
        %v3336 = vadd.f32 0.0, %v3335
        %v3337 = vpop.f32.mrf.mxu0
        %v3338 = vpop.f32.mrf.mxu0
        %v3339 = vadd.f32 0.0, %v3338
        %v3340 = vpop.f32.mrf.mxu0
        %3341 = vmatprep.mubr.bf16.mxu0 0
        %3342 = vmatmul.mubr.bf16.gmra.mxu0 %v1827
        %v3343 = vpop.f32.mrf.mxu0
        %v3344 = vadd.f32 0.0, %v3343
        %v3345 = vpop.f32.mrf.mxu0
        %v3346 = vpop.f32.mrf.mxu0
        %v3347 = vadd.f32 0.0, %v3346
        %v3348 = vpop.f32.mrf.mxu0
        %3349 = vdwg.mxu0
        %v3350 = vsel %vm1911, %v3288, -1e+30
        %v3351 = vsel %vm1912, %v3291, -1e+30
        %v3352 = vsel %vm1913, %v3296, -1e+30
        %v3353 = vsel %vm1914, %v3299, -1e+30
        %v3354 = vsel %vm1915, %v3304, -1e+30
        %v3355 = vsel %vm1916, %v3307, -1e+30
        %v3356 = vsel %vm1917, %v3312, -1e+30
        %v3357 = vsel %vm1918, %v3315, -1e+30
        %v3358 = vsel %vm1919, %v3320, -1e+30
        %v3359 = vsel %vm1920, %v3323, -1e+30
        %v3360 = vsel %vm1921, %v3328, -1e+30
        %v3361 = vsel %vm1922, %v3331, -1e+30
        %v3362 = vsel %vm1923, %v3336, -1e+30
        %v3363 = vsel %vm1924, %v3339, -1e+30
        %v3364 = vsel %vm1925, %v3344, -1e+30
        %v3365 = vsel %vm1926, %v3347, -1e+30
        %3366 = vmax.xlane.f32.xlu0 %v3350
        %v3367 = vpop.xlane.xlu0 %3366
        %3368 = vmax.xlane.f32.xlu0 %v3351
        %v3369 = vpop.xlane.xlu0 %3368
        %3370 = vmax.xlane.f32.xlu0 %v3352
        %v3371 = vpop.xlane.xlu0 %3370
        %3372 = vmax.xlane.f32.xlu0 %v3353
        %v3373 = vpop.xlane.xlu0 %3372
        %3374 = vmax.xlane.f32.xlu0 %v3354
        %v3375 = vpop.xlane.xlu0 %3374
        %3376 = vmax.xlane.f32.xlu0 %v3355
        %v3377 = vpop.xlane.xlu0 %3376
        %3378 = vmax.xlane.f32.xlu0 %v3356
        %v3379 = vpop.xlane.xlu0 %3378
        %3380 = vmax.xlane.f32.xlu0 %v3357
        %v3381 = vpop.xlane.xlu0 %3380
        %3382 = vmax.xlane.f32.xlu0 %v3358
        %v3383 = vpop.xlane.xlu0 %3382
        %3384 = vmax.xlane.f32.xlu0 %v3359
        %v3385 = vpop.xlane.xlu0 %3384
        %3386 = vmax.xlane.f32.xlu0 %v3360
        %v3387 = vpop.xlane.xlu0 %3386
        %3388 = vmax.xlane.f32.xlu0 %v3361
        %v3389 = vpop.xlane.xlu0 %3388
        %3390 = vmax.xlane.f32.xlu0 %v3362
        %v3391 = vpop.xlane.xlu0 %3390
        %3392 = vmax.xlane.f32.xlu0 %v3363
        %v3393 = vpop.xlane.xlu0 %3392
        %3394 = vmax.xlane.f32.xlu0 %v3364
        %v3395 = vpop.xlane.xlu0 %3394
        %3396 = vmax.xlane.f32.xlu0 %v3365
        %v3397 = vpop.xlane.xlu0 %3396
        %v3398 = vsub.f32 %v3350, %v3367
        %v3399 = vsub.f32 %v3351, %v3369
        %v3400 = vsub.f32 %v3352, %v3371
        %v3401 = vsub.f32 %v3353, %v3373
        %v3402 = vsub.f32 %v3354, %v3375
        %v3403 = vsub.f32 %v3355, %v3377
        %v3404 = vsub.f32 %v3356, %v3379
        %v3405 = vsub.f32 %v3357, %v3381
        %v3406 = vsub.f32 %v3358, %v3383
        %v3407 = vsub.f32 %v3359, %v3385
        %v3408 = vsub.f32 %v3360, %v3387
        %v3409 = vsub.f32 %v3361, %v3389
        %v3410 = vsub.f32 %v3362, %v3391
        %v3411 = vsub.f32 %v3363, %v3393
        %v3412 = vsub.f32 %v3364, %v3395
        %v3413 = vsub.f32 %v3365, %v3397
        %v3414 = vmul.f32 %v3398, 1.442695
        %v3415 = vpow.pop %v3414
        %v3416 = vmul.f32 %v3399, 1.442695
        %v3417 = vpow.pop %v3416
        %v3418 = vmul.f32 %v3400, 1.442695
        %v3419 = vpow.pop %v3418
        %v3420 = vmul.f32 %v3401, 1.442695
        %v3421 = vpow.pop %v3420
        %v3422 = vmul.f32 %v3402, 1.442695
        %v3423 = vpow.pop %v3422
        %v3424 = vmul.f32 %v3403, 1.442695
        %v3425 = vpow.pop %v3424
        %v3426 = vmul.f32 %v3404, 1.442695
        %v3427 = vpow.pop %v3426
        %v3428 = vmul.f32 %v3405, 1.442695
        %v3429 = vpow.pop %v3428
        %v3430 = vmul.f32 %v3406, 1.442695
        %v3431 = vpow.pop %v3430
        %v3432 = vmul.f32 %v3407, 1.442695
        %v3433 = vpow.pop %v3432
        %v3434 = vmul.f32 %v3408, 1.442695
        %v3435 = vpow.pop %v3434
        %v3436 = vmul.f32 %v3409, 1.442695
        %v3437 = vpow.pop %v3436
        %v3438 = vmul.f32 %v3410, 1.442695
        %v3439 = vpow.pop %v3438
        %v3440 = vmul.f32 %v3411, 1.442695
        %v3441 = vpow.pop %v3440
        %v3442 = vmul.f32 %v3412, 1.442695
        %v3443 = vpow.pop %v3442
        %v3444 = vmul.f32 %v3413, 1.442695
        %v3445 = vpow.pop %v3444
        %3446 = vadd.xlane.f32.xlu0 %v3415
        %v3447 = vpop.xlane.xlu0 %3446
        %3448 = vadd.xlane.f32.xlu0 %v3417
        %v3449 = vpop.xlane.xlu0 %3448
        %3450 = vadd.xlane.f32.xlu0 %v3419
        %v3451 = vpop.xlane.xlu0 %3450
        %3452 = vadd.xlane.f32.xlu0 %v3421
        %v3453 = vpop.xlane.xlu0 %3452
        %3454 = vadd.xlane.f32.xlu0 %v3423
        %v3455 = vpop.xlane.xlu0 %3454
        %3456 = vadd.xlane.f32.xlu0 %v3425
        %v3457 = vpop.xlane.xlu0 %3456
        %3458 = vadd.xlane.f32.xlu0 %v3427
        %v3459 = vpop.xlane.xlu0 %3458
        %3460 = vadd.xlane.f32.xlu0 %v3429
        %v3461 = vpop.xlane.xlu0 %3460
        %3462 = vadd.xlane.f32.xlu0 %v3431
        %v3463 = vpop.xlane.xlu0 %3462
        %3464 = vadd.xlane.f32.xlu0 %v3433
        %v3465 = vpop.xlane.xlu0 %3464
        %3466 = vadd.xlane.f32.xlu0 %v3435
        %v3467 = vpop.xlane.xlu0 %3466
        %3468 = vadd.xlane.f32.xlu0 %v3437
        %v3469 = vpop.xlane.xlu0 %3468
        %3470 = vadd.xlane.f32.xlu0 %v3439
        %v3471 = vpop.xlane.xlu0 %3470
        %3472 = vadd.xlane.f32.xlu0 %v3441
        %v3473 = vpop.xlane.xlu0 %3472
        %3474 = vadd.xlane.f32.xlu0 %v3443
        %v3475 = vpop.xlane.xlu0 %3474
        %3476 = vadd.xlane.f32.xlu0 %v3445
        %v3477 = vpop.xlane.xlu0 %3476
        %v3478 = vrcp.pop %v3447
        %v3479 = vrcp.pop %v3449
        %v3480 = vrcp.pop %v3451
        %v3481 = vrcp.pop %v3453
        %v3482 = vrcp.pop %v3455
        %v3483 = vrcp.pop %v3457
        %v3484 = vrcp.pop %v3459
        %v3485 = vrcp.pop %v3461
        %v3486 = vrcp.pop %v3463
        %v3487 = vrcp.pop %v3465
        %v3488 = vrcp.pop %v3467
        %v3489 = vrcp.pop %v3469
        %v3490 = vrcp.pop %v3471
        %v3491 = vrcp.pop %v3473
        %v3492 = vrcp.pop %v3475
        %v3493 = vrcp.pop %v3477
        %v3494 = vmul.f32 %v3415, %v3478
        %v3495 = vmul.f32 %v3417, %v3479
        %v3496 = vmul.f32 %v3419, %v3480
        %v3497 = vmul.f32 %v3421, %v3481
        %v3498 = vmul.f32 %v3423, %v3482
        %v3499 = vmul.f32 %v3425, %v3483
        %v3500 = vmul.f32 %v3427, %v3484
        %v3501 = vmul.f32 %v3429, %v3485
        %v3502 = vmul.f32 %v3431, %v3486
        %v3503 = vmul.f32 %v3433, %v3487
        %v3504 = vmul.f32 %v3435, %v3488
        %v3505 = vmul.f32 %v3437, %v3489
        %v3506 = vmul.f32 %v3439, %v3490
        %v3507 = vmul.f32 %v3441, %v3491
        %v3508 = vmul.f32 %v3443, %v3492
        %v3509 = vmul.f32 %v3445, %v3493
        %v3510 = vpack.c.bf16 %v3495, %v3494
        %v3511 = vpack.c.bf16 %v3497, %v3496
        %v3512 = vpack.c.bf16 %v3499, %v3498
        %v3513 = vpack.c.bf16 %v3501, %v3500
        %v3514 = vpack.c.bf16 %v3503, %v3502
        %v3515 = vpack.c.bf16 %v3505, %v3504
        %v3516 = vpack.c.bf16 %v3507, %v3506
        %v3517 = vpack.c.bf16 %v3509, %v3508
        %3518 = vmatprep.subr.bf16.mxu0 0
        %3519 = vmatpush1.bf16.msra.mxu0 %v1891
        %3520 = vmatprep.subr.bf16.mxu0 0
        %3521 = vmatpush1.bf16.msra.mxu0 %v1889
        %3522 = vmatprep.subr.bf16.mxu0 0
        %3523 = vmatpush1.bf16.msra.mxu0 %v1887
        %3524 = vmatprep.subr.bf16.mxu0 0
        %3525 = vmatpush1.bf16.msra.mxu0 %v1885
        %3526 = vmatprep.subr.bf16.mxu0 0
        %3527 = vmatpush1.bf16.msra.mxu0 %v1883
        %3528 = vmatprep.subr.bf16.mxu0 0
        %3529 = vmatpush1.bf16.msra.mxu0 %v1881
        %3530 = vmatprep.subr.bf16.mxu0 0
        %3531 = vmatpush1.bf16.msra.mxu0 %v1879
        %3532 = vmatprep.subr.bf16.mxu0 0
        %3533 = vmatpush1.bf16.msra.mxu0 %v1877
        %3534 = vmatprep.subr.bf16.mxu0 0
        %3535 = vmatpush2.bf16.msra.mxu0 0
        %3536 = vmatprep.subr.bf16.mxu0 0
        %3537 = vmatpush2.bf16.msra.mxu0 0
        %3538 = vmatprep.subr.bf16.mxu0 0
        %3539 = vmatpush2.bf16.msra.mxu0 0
        %3540 = vmatprep.subr.bf16.mxu0 0
        %3541 = vmatpush2.bf16.msra.mxu0 0
        %3542 = vmatprep.subr.bf16.mxu0 0
        %3543 = vmatpush2.bf16.msra.mxu0 0
        %3544 = vmatprep.subr.bf16.mxu0 0
        %3545 = vmatpush2.bf16.msra.mxu0 0
        %3546 = vmatprep.subr.bf16.mxu0 0
        %3547 = vmatpush2.bf16.msra.mxu0 0
        %3548 = vmatprep.subr.bf16.mxu0 0
        %3549 = vmatpush2.bf16.msra.mxu0 0
        %3550 = vmatprep.mubr.bf16.mxu0 0
        %3551 = vmatmul.mubr.bf16.gmra.mxu0 %v3510
        %v3552 = vpop.f32.mrf.mxu0
        %v3553 = vadd.f32 0.0, %v3552
        %v3554 = vpop.f32.mrf.mxu0
        %v3555 = vpop.f32.mrf.mxu0
        %v3556 = vadd.f32 0.0, %v3555
        %v3557 = vpop.f32.mrf.mxu0
        %3558 = vmatprep.mubr.bf16.mxu0 0
        %3559 = vmatmul.mubr.bf16.gmra.mxu0 %v3511
        %v3560 = vpop.f32.mrf.mxu0
        %v3561 = vadd.f32 0.0, %v3560
        %v3562 = vpop.f32.mrf.mxu0
        %v3563 = vpop.f32.mrf.mxu0
        %v3564 = vadd.f32 0.0, %v3563
        %v3565 = vpop.f32.mrf.mxu0
        %3566 = vmatprep.mubr.bf16.mxu0 0
        %3567 = vmatmul.mubr.bf16.gmra.mxu0 %v3512
        %v3568 = vpop.f32.mrf.mxu0
        %v3569 = vadd.f32 0.0, %v3568
        %v3570 = vpop.f32.mrf.mxu0
        %v3571 = vpop.f32.mrf.mxu0
        %v3572 = vadd.f32 0.0, %v3571
        %v3573 = vpop.f32.mrf.mxu0
        %3574 = vmatprep.mubr.bf16.mxu0 0
        %3575 = vmatmul.mubr.bf16.gmra.mxu0 %v3513
        %v3576 = vpop.f32.mrf.mxu0
        %v3577 = vadd.f32 0.0, %v3576
        %v3578 = vpop.f32.mrf.mxu0
        %v3579 = vpop.f32.mrf.mxu0
        %v3580 = vadd.f32 0.0, %v3579
        %v3581 = vpop.f32.mrf.mxu0
        %3582 = vmatprep.mubr.bf16.mxu0 0
        %3583 = vmatmul.mubr.bf16.gmra.mxu0 %v3514
        %v3584 = vpop.f32.mrf.mxu0
        %v3585 = vadd.f32 0.0, %v3584
        %v3586 = vpop.f32.mrf.mxu0
        %v3587 = vpop.f32.mrf.mxu0
        %v3588 = vadd.f32 0.0, %v3587
        %v3589 = vpop.f32.mrf.mxu0
        %3590 = vmatprep.mubr.bf16.mxu0 0
        %3591 = vmatmul.mubr.bf16.gmra.mxu0 %v3515
        %v3592 = vpop.f32.mrf.mxu0
        %v3593 = vadd.f32 0.0, %v3592
        %v3594 = vpop.f32.mrf.mxu0
        %v3595 = vpop.f32.mrf.mxu0
        %v3596 = vadd.f32 0.0, %v3595
        %v3597 = vpop.f32.mrf.mxu0
        %3598 = vmatprep.mubr.bf16.mxu0 0
        %3599 = vmatmul.mubr.bf16.gmra.mxu0 %v3516
        %v3600 = vpop.f32.mrf.mxu0
        %v3601 = vadd.f32 0.0, %v3600
        %v3602 = vpop.f32.mrf.mxu0
        %v3603 = vpop.f32.mrf.mxu0
        %v3604 = vadd.f32 0.0, %v3603
        %v3605 = vpop.f32.mrf.mxu0
        %3606 = vmatprep.mubr.bf16.mxu0 0
        %3607 = vmatmul.mubr.bf16.gmra.mxu0 %v3517
        %v3608 = vpop.f32.mrf.mxu0
        %v3609 = vadd.f32 0.0, %v3608
        %v3610 = vpop.f32.mrf.mxu0
        %v3611 = vpop.f32.mrf.mxu0
        %v3612 = vadd.f32 0.0, %v3611
        %v3613 = vpop.f32.mrf.mxu0
        %3614 = vdwg.mxu0
        %v3615 = vpack.c.bf16 %v3556, %v3553
        %v3616 = vpack.c.bf16 %v3564, %v3561
        %v3617 = vpack.c.bf16 %v3572, %v3569
        %v3618 = vpack.c.bf16 %v3580, %v3577
        %v3619 = vpack.c.bf16 %v3588, %v3585
        %v3620 = vpack.c.bf16 %v3596, %v3593
        %v3621 = vpack.c.bf16 %v3604, %v3601
        %v3622 = vpack.c.bf16 %v3612, %v3609
        %v3631 = vunpack.c.l.b16 %v3615
        %v3632 = vunpack.c.h.b16 %v3615
        %v3633 = vunpack.c.l.b16 %v3616
        %v3634 = vunpack.c.h.b16 %v3616
        %v3635 = vunpack.c.l.b16 %v3617
        %v3636 = vunpack.c.h.b16 %v3617
        %v3637 = vunpack.c.l.b16 %v3618
        %v3638 = vunpack.c.h.b16 %v3618
        %v3639 = vunpack.c.l.b16 %v3619
        %v3640 = vunpack.c.h.b16 %v3619
        %v3641 = vunpack.c.l.b16 %v3620
        %v3642 = vunpack.c.h.b16 %v3620
        %v3643 = vunpack.c.l.b16 %v3621
        %v3644 = vunpack.c.h.b16 %v3621
        %v3645 = vunpack.c.l.b16 %v3622
        %v3646 = vunpack.c.h.b16 %v3622
        %v3647 = vpack.c.b16 %v3631, %v3631
        %v3648 = vpack.c.b16 %v3632, %v3632
        %v3649 = vpack.c.b16 %v3633, %v3633
        %v3650 = vpack.c.b16 %v3634, %v3634
        %v3651 = vpack.c.b16 %v3635, %v3635
        %v3652 = vpack.c.b16 %v3636, %v3636
        %v3653 = vpack.c.b16 %v3637, %v3637
        %v3654 = vpack.c.b16 %v3638, %v3638
        %v3655 = vpack.c.b16 %v3639, %v3639
        %v3656 = vpack.c.b16 %v3640, %v3640
        %v3657 = vpack.c.b16 %v3641, %v3641
        %v3658 = vpack.c.b16 %v3642, %v3642
        %v3659 = vpack.c.b16 %v3643, %v3643
        %v3660 = vpack.c.b16 %v3644, %v3644
        %v3661 = vpack.c.b16 %v3645, %v3645
        %v3662 = vpack.c.b16 %v3646, %v3646
        %3679 = vst [vmem:[#allocation2 + $0x84] sm:$0xf] %v3647
        %3680 = vst [vmem:[#allocation2 + $0x8c] sm:$0xf] %v3648
        %3681 = vst [vmem:[#allocation2 + $0x94] sm:$0xf] %v3649
        %3682 = vst [vmem:[#allocation2 + $0x9c] sm:$0xf] %v3650
        %3683 = vst [vmem:[#allocation2 + $0xa4] sm:$0xf] %v3651
        %3684 = vst [vmem:[#allocation2 + $0xac] sm:$0xf] %v3652
        %3685 = vst [vmem:[#allocation2 + $0xb4] sm:$0xf] %v3653
        %3686 = vst [vmem:[#allocation2 + $0xbc] sm:$0xf] %v3654
        %3687 = vst [vmem:[#allocation2 + $0xc4] sm:$0xf] %v3655
        %3688 = vst [vmem:[#allocation2 + $0xcc] sm:$0xf] %v3656
        %3689 = vst [vmem:[#allocation2 + $0xd4] sm:$0xf] %v3657
        %3690 = vst [vmem:[#allocation2 + $0xdc] sm:$0xf] %v3658
        %3691 = vst [vmem:[#allocation2 + $0xe4] sm:$0xf] %v3659
        %3692 = vst [vmem:[#allocation2 + $0xec] sm:$0xf] %v3660
        %3693 = vst [vmem:[#allocation2 + $0xf4] sm:$0xf] %v3661
        %3694 = vst [vmem:[#allocation2 + $0xfc] sm:$0xf] %v3662
        %v3695 = vld [vmem:[#allocation2] sm:$0xff]
        %v3696 = vld [vmem:[#allocation2 + $0x8] sm:$0xff]
        %v3697 = vld [vmem:[#allocation2 + $0x10] sm:$0xff]
        %v3698 = vld [vmem:[#allocation2 + $0x18] sm:$0xff]
        %v3699 = vld [vmem:[#allocation2 + $0x20] sm:$0xff]
        %v3700 = vld [vmem:[#allocation2 + $0x28] sm:$0xff]
        %v3701 = vld [vmem:[#allocation2 + $0x30] sm:$0xff]
        %v3702 = vld [vmem:[#allocation2 + $0x38] sm:$0xff]
        %v3703 = vld [vmem:[#allocation2 + $0x40] sm:$0xff]
        %v3704 = vld [vmem:[#allocation2 + $0x48] sm:$0xff]
        %v3705 = vld [vmem:[#allocation2 + $0x50] sm:$0xff]
        %v3706 = vld [vmem:[#allocation2 + $0x58] sm:$0xff]
        %v3707 = vld [vmem:[#allocation2 + $0x60] sm:$0xff]
        %v3708 = vld [vmem:[#allocation2 + $0x68] sm:$0xff]
        %v3709 = vld [vmem:[#allocation2 + $0x70] sm:$0xff]
        %v3710 = vld [vmem:[#allocation2 + $0x78] sm:$0xff]
        %v3711 = vld [vmem:[#allocation2 + $0x80] sm:$0xff]
        %v3712 = vld [vmem:[#allocation2 + $0x88] sm:$0xff]
        %v3713 = vld [vmem:[#allocation2 + $0x90] sm:$0xff]
        %v3714 = vld [vmem:[#allocation2 + $0x98] sm:$0xff]
        %v3715 = vld [vmem:[#allocation2 + $0xa0] sm:$0xff]
        %v3716 = vld [vmem:[#allocation2 + $0xa8] sm:$0xff]
        %v3717 = vld [vmem:[#allocation2 + $0xb0] sm:$0xff]
        %v3718 = vld [vmem:[#allocation2 + $0xb8] sm:$0xff]
        %v3719 = vld [vmem:[#allocation2 + $0xc0] sm:$0xff]
        %v3720 = vld [vmem:[#allocation2 + $0xc8] sm:$0xff]
        %v3721 = vld [vmem:[#allocation2 + $0xd0] sm:$0xff]
        %v3722 = vld [vmem:[#allocation2 + $0xd8] sm:$0xff]
        %v3723 = vld [vmem:[#allocation2 + $0xe0] sm:$0xff]
        %v3724 = vld [vmem:[#allocation2 + $0xe8] sm:$0xff]
        %v3725 = vld [vmem:[#allocation2 + $0xf0] sm:$0xff]
        %v3726 = vld [vmem:[#allocation2 + $0xf8] sm:$0xff]
        %v3727 = vld [vmem:[#allocation11] sm:$0xff]
        %v3728 = vld [vmem:[#allocation11 + $0x8] sm:$0xff]
        %v3729 = vld [vmem:[#allocation11 + $0x10] sm:$0xff]
        %v3730 = vld [vmem:[#allocation11 + $0x18] sm:$0xff]
        %v3731 = vld [vmem:[#allocation11 + $0x20] sm:$0xff]
        %v3732 = vld [vmem:[#allocation11 + $0x28] sm:$0xff]
        %v3733 = vld [vmem:[#allocation11 + $0x30] sm:$0xff]
        %v3734 = vld [vmem:[#allocation11 + $0x38] sm:$0xff]
        %v3735 = vld [vmem:[#allocation11 + $0x40] sm:$0xff]
        %v3736 = vld [vmem:[#allocation11 + $0x48] sm:$0xff]
        %v3737 = vld [vmem:[#allocation11 + $0x50] sm:$0xff]
        %v3738 = vld [vmem:[#allocation11 + $0x58] sm:$0xff]
        %v3739 = vld [vmem:[#allocation11 + $0x60] sm:$0xff]
        %v3740 = vld [vmem:[#allocation11 + $0x68] sm:$0xff]
        %v3741 = vld [vmem:[#allocation11 + $0x70] sm:$0xff]
        %v3742 = vld [vmem:[#allocation11 + $0x78] sm:$0xff]
        %v3743 = vld [vmem:[#allocation11 + $0x80] sm:$0xff]
        %v3744 = vld [vmem:[#allocation11 + $0x88] sm:$0xff]
        %v3745 = vld [vmem:[#allocation11 + $0x90] sm:$0xff]
        %v3746 = vld [vmem:[#allocation11 + $0x98] sm:$0xff]
        %v3747 = vld [vmem:[#allocation11 + $0xa0] sm:$0xff]
        %v3748 = vld [vmem:[#allocation11 + $0xa8] sm:$0xff]
        %v3749 = vld [vmem:[#allocation11 + $0xb0] sm:$0xff]
        %v3750 = vld [vmem:[#allocation11 + $0xb8] sm:$0xff]
        %v3751 = vld [vmem:[#allocation11 + $0xc0] sm:$0xff]
        %v3752 = vld [vmem:[#allocation11 + $0xc8] sm:$0xff]
        %v3753 = vld [vmem:[#allocation11 + $0xd0] sm:$0xff]
        %v3754 = vld [vmem:[#allocation11 + $0xd8] sm:$0xff]
        %v3755 = vld [vmem:[#allocation11 + $0xe0] sm:$0xff]
        %v3756 = vld [vmem:[#allocation11 + $0xe8] sm:$0xff]
        %v3757 = vld [vmem:[#allocation11 + $0xf0] sm:$0xff]
        %v3758 = vld [vmem:[#allocation11 + $0xf8] sm:$0xff]
        %v3759 = vld [vmem:[%s8] sm:$0x3]
        %v3761 = vlaneseq
        %v3762 = vshrl.u32 %v3761, 7
        %v3763 = vsub.s32 0, %v3762
        %v3764 = vrot.slane %v3759, %v3763
        %v3765 = vlaneseq
        %v3766 = vshrl.u32 %v3765, 7
        %v3767 = vsub.s32 1, %v3766
        %v3768 = vrot.slane %v3759, %v3767
        %v3803 = vunpack.c.l.b16 %v3695
        %v3804 = vunpack.c.h.b16 %v3695
        %v3805 = vunpack.c.l.b16 %v3696
        %v3806 = vunpack.c.h.b16 %v3696
        %v3807 = vunpack.c.l.b16 %v3697
        %v3808 = vunpack.c.h.b16 %v3697
        %v3809 = vunpack.c.l.b16 %v3698
        %v3810 = vunpack.c.h.b16 %v3698
        %v3811 = vunpack.c.l.b16 %v3699
        %v3812 = vunpack.c.h.b16 %v3699
        %v3813 = vunpack.c.l.b16 %v3700
        %v3814 = vunpack.c.h.b16 %v3700
        %v3815 = vunpack.c.l.b16 %v3701
        %v3816 = vunpack.c.h.b16 %v3701
        %v3817 = vunpack.c.l.b16 %v3702
        %v3818 = vunpack.c.h.b16 %v3702
        %v3819 = vunpack.c.l.b16 %v3703
        %v3820 = vunpack.c.h.b16 %v3703
        %v3821 = vunpack.c.l.b16 %v3704
        %v3822 = vunpack.c.h.b16 %v3704
        %v3823 = vunpack.c.l.b16 %v3705
        %v3824 = vunpack.c.h.b16 %v3705
        %v3825 = vunpack.c.l.b16 %v3706
        %v3826 = vunpack.c.h.b16 %v3706
        %v3827 = vunpack.c.l.b16 %v3707
        %v3828 = vunpack.c.h.b16 %v3707
        %v3829 = vunpack.c.l.b16 %v3708
        %v3830 = vunpack.c.h.b16 %v3708
        %v3831 = vunpack.c.l.b16 %v3709
        %v3832 = vunpack.c.h.b16 %v3709
        %v3833 = vunpack.c.l.b16 %v3710
        %v3834 = vunpack.c.h.b16 %v3710
        %v3835 = vunpack.c.l.b16 %v3711
        %v3836 = vunpack.c.h.b16 %v3711
        %v3837 = vunpack.c.l.b16 %v3712
        %v3838 = vunpack.c.h.b16 %v3712
        %v3839 = vunpack.c.l.b16 %v3713
        %v3840 = vunpack.c.h.b16 %v3713
        %v3841 = vunpack.c.l.b16 %v3714
        %v3842 = vunpack.c.h.b16 %v3714
        %v3843 = vunpack.c.l.b16 %v3715
        %v3844 = vunpack.c.h.b16 %v3715
        %v3845 = vunpack.c.l.b16 %v3716
        %v3846 = vunpack.c.h.b16 %v3716
        %v3847 = vunpack.c.l.b16 %v3717
        %v3848 = vunpack.c.h.b16 %v3717
        %v3849 = vunpack.c.l.b16 %v3718
        %v3850 = vunpack.c.h.b16 %v3718
        %v3851 = vunpack.c.l.b16 %v3719
        %v3852 = vunpack.c.h.b16 %v3719
        %v3853 = vunpack.c.l.b16 %v3720
        %v3854 = vunpack.c.h.b16 %v3720
        %v3855 = vunpack.c.l.b16 %v3721
        %v3856 = vunpack.c.h.b16 %v3721
        %v3857 = vunpack.c.l.b16 %v3722
        %v3858 = vunpack.c.h.b16 %v3722
        %v3859 = vunpack.c.l.b16 %v3723
        %v3860 = vunpack.c.h.b16 %v3723
        %v3861 = vunpack.c.l.b16 %v3724
        %v3862 = vunpack.c.h.b16 %v3724
        %v3863 = vunpack.c.l.b16 %v3725
        %v3864 = vunpack.c.h.b16 %v3725
        %v3865 = vunpack.c.l.b16 %v3726
        %v3866 = vunpack.c.h.b16 %v3726
        %v3867 = vpack.c.b16 %v3805, %v3803
        %v3868 = vpack.c.b16 %v3806, %v3804
        %v3869 = vpack.c.b16 %v3809, %v3807
        %v3870 = vpack.c.b16 %v3810, %v3808
        %v3871 = vpack.c.b16 %v3813, %v3811
        %v3872 = vpack.c.b16 %v3814, %v3812
        %v3873 = vpack.c.b16 %v3817, %v3815
        %v3874 = vpack.c.b16 %v3818, %v3816
        %v3875 = vpack.c.b16 %v3821, %v3819
        %v3876 = vpack.c.b16 %v3822, %v3820
        %v3877 = vpack.c.b16 %v3825, %v3823
        %v3878 = vpack.c.b16 %v3826, %v3824
        %v3879 = vpack.c.b16 %v3829, %v3827
        %v3880 = vpack.c.b16 %v3830, %v3828
        %v3881 = vpack.c.b16 %v3833, %v3831
        %v3882 = vpack.c.b16 %v3834, %v3832
        %v3883 = vpack.c.b16 %v3837, %v3835
        %v3884 = vpack.c.b16 %v3838, %v3836
        %v3885 = vpack.c.b16 %v3841, %v3839
        %v3886 = vpack.c.b16 %v3842, %v3840
        %v3887 = vpack.c.b16 %v3845, %v3843
        %v3888 = vpack.c.b16 %v3846, %v3844
        %v3889 = vpack.c.b16 %v3849, %v3847
        %v3890 = vpack.c.b16 %v3850, %v3848
        %v3891 = vpack.c.b16 %v3853, %v3851
        %v3892 = vpack.c.b16 %v3854, %v3852
        %v3893 = vpack.c.b16 %v3857, %v3855
        %v3894 = vpack.c.b16 %v3858, %v3856
        %v3895 = vpack.c.b16 %v3861, %v3859
        %v3896 = vpack.c.b16 %v3862, %v3860
        %v3897 = vpack.c.b16 %v3865, %v3863
        %v3898 = vpack.c.b16 %v3866, %v3864
        %v3963 = vunpack.c.l.b16 %v3727
        %v3964 = vunpack.c.h.b16 %v3727
        %v3965 = vunpack.c.l.b16 %v3728
        %v3966 = vunpack.c.h.b16 %v3728
        %v3967 = vunpack.c.l.b16 %v3729
        %v3968 = vunpack.c.h.b16 %v3729
        %v3969 = vunpack.c.l.b16 %v3730
        %v3970 = vunpack.c.h.b16 %v3730
        %v3971 = vunpack.c.l.b16 %v3731
        %v3972 = vunpack.c.h.b16 %v3731
        %v3973 = vunpack.c.l.b16 %v3732
        %v3974 = vunpack.c.h.b16 %v3732
        %v3975 = vunpack.c.l.b16 %v3733
        %v3976 = vunpack.c.h.b16 %v3733
        %v3977 = vunpack.c.l.b16 %v3734
        %v3978 = vunpack.c.h.b16 %v3734
        %v3979 = vunpack.c.l.b16 %v3735
        %v3980 = vunpack.c.h.b16 %v3735
        %v3981 = vunpack.c.l.b16 %v3736
        %v3982 = vunpack.c.h.b16 %v3736
        %v3983 = vunpack.c.l.b16 %v3737
        %v3984 = vunpack.c.h.b16 %v3737
        %v3985 = vunpack.c.l.b16 %v3738
        %v3986 = vunpack.c.h.b16 %v3738
        %v3987 = vunpack.c.l.b16 %v3739
        %v3988 = vunpack.c.h.b16 %v3739
        %v3989 = vunpack.c.l.b16 %v3740
        %v3990 = vunpack.c.h.b16 %v3740
        %v3991 = vunpack.c.l.b16 %v3741
        %v3992 = vunpack.c.h.b16 %v3741
        %v3993 = vunpack.c.l.b16 %v3742
        %v3994 = vunpack.c.h.b16 %v3742
        %v3995 = vunpack.c.l.b16 %v3743
        %v3996 = vunpack.c.h.b16 %v3743
        %v3997 = vunpack.c.l.b16 %v3744
        %v3998 = vunpack.c.h.b16 %v3744
        %v3999 = vunpack.c.l.b16 %v3745
        %v4000 = vunpack.c.h.b16 %v3745
        %v4001 = vunpack.c.l.b16 %v3746
        %v4002 = vunpack.c.h.b16 %v3746
        %v4003 = vunpack.c.l.b16 %v3747
        %v4004 = vunpack.c.h.b16 %v3747
        %v4005 = vunpack.c.l.b16 %v3748
        %v4006 = vunpack.c.h.b16 %v3748
        %v4007 = vunpack.c.l.b16 %v3749
        %v4008 = vunpack.c.h.b16 %v3749
        %v4009 = vunpack.c.l.b16 %v3750
        %v4010 = vunpack.c.h.b16 %v3750
        %v4011 = vunpack.c.l.b16 %v3751
        %v4012 = vunpack.c.h.b16 %v3751
        %v4013 = vunpack.c.l.b16 %v3752
        %v4014 = vunpack.c.h.b16 %v3752
        %v4015 = vunpack.c.l.b16 %v3753
        %v4016 = vunpack.c.h.b16 %v3753
        %v4017 = vunpack.c.l.b16 %v3754
        %v4018 = vunpack.c.h.b16 %v3754
        %v4019 = vunpack.c.l.b16 %v3755
        %v4020 = vunpack.c.h.b16 %v3755
        %v4021 = vunpack.c.l.b16 %v3756
        %v4022 = vunpack.c.h.b16 %v3756
        %v4023 = vunpack.c.l.b16 %v3757
        %v4024 = vunpack.c.h.b16 %v3757
        %v4025 = vunpack.c.l.b16 %v3758
        %v4026 = vunpack.c.h.b16 %v3758
        %v4027 = vpack.c.b16 %v3965, %v3963
        %v4028 = vpack.c.b16 %v3966, %v3964
        %v4029 = vpack.c.b16 %v3969, %v3967
        %v4030 = vpack.c.b16 %v3970, %v3968
        %v4031 = vpack.c.b16 %v3973, %v3971
        %v4032 = vpack.c.b16 %v3974, %v3972
        %v4033 = vpack.c.b16 %v3977, %v3975
        %v4034 = vpack.c.b16 %v3978, %v3976
        %v4035 = vpack.c.b16 %v3981, %v3979
        %v4036 = vpack.c.b16 %v3982, %v3980
        %v4037 = vpack.c.b16 %v3985, %v3983
        %v4038 = vpack.c.b16 %v3986, %v3984
        %v4039 = vpack.c.b16 %v3989, %v3987
        %v4040 = vpack.c.b16 %v3990, %v3988
        %v4041 = vpack.c.b16 %v3993, %v3991
        %v4042 = vpack.c.b16 %v3994, %v3992
        %v4043 = vpack.c.b16 %v3997, %v3995
        %v4044 = vpack.c.b16 %v3998, %v3996
        %v4045 = vpack.c.b16 %v4001, %v3999
        %v4046 = vpack.c.b16 %v4002, %v4000
        %v4047 = vpack.c.b16 %v4005, %v4003
        %v4048 = vpack.c.b16 %v4006, %v4004
        %v4049 = vpack.c.b16 %v4009, %v4007
        %v4050 = vpack.c.b16 %v4010, %v4008
        %v4051 = vpack.c.b16 %v4013, %v4011
        %v4052 = vpack.c.b16 %v4014, %v4012
        %v4053 = vpack.c.b16 %v4017, %v4015
        %v4054 = vpack.c.b16 %v4018, %v4016
        %v4055 = vpack.c.b16 %v4021, %v4019
        %v4056 = vpack.c.b16 %v4022, %v4020
        %v4057 = vpack.c.b16 %v4025, %v4023
        %v4058 = vpack.c.b16 %v4026, %v4024
        %4091 = vmatprep.subr.bf16.mxu0 %v4042
        %4092 = vmatpush1.bf16.msra.mxu0 %v4041
        %4093 = vmatprep.subr.bf16.mxu0 %v4040
        %4094 = vmatpush1.bf16.msra.mxu0 %v4039
        %4095 = vmatprep.subr.bf16.mxu0 %v4038
        %4096 = vmatpush1.bf16.msra.mxu0 %v4037
        %4097 = vmatprep.subr.bf16.mxu0 %v4036
        %4098 = vmatpush1.bf16.msra.mxu0 %v4035
        %4099 = vmatprep.subr.bf16.mxu0 %v4034
        %4100 = vmatpush1.bf16.msra.mxu0 %v4033
        %4101 = vmatprep.subr.bf16.mxu0 %v4032
        %4102 = vmatpush1.bf16.msra.mxu0 %v4031
        %4103 = vmatprep.subr.bf16.mxu0 %v4030
        %4104 = vmatpush1.bf16.msra.mxu0 %v4029
        %4105 = vmatprep.subr.bf16.mxu0 %v4028
        %4106 = vmatpush1.bf16.msra.mxu0 %v4027
        %4107 = vmatprep.subr.bf16.mxu0 %v4058
        %4108 = vmatpush2.bf16.msra.mxu0 %v4057
        %4109 = vmatprep.subr.bf16.mxu0 %v4056
        %4110 = vmatpush2.bf16.msra.mxu0 %v4055
        %4111 = vmatprep.subr.bf16.mxu0 %v4054
        %4112 = vmatpush2.bf16.msra.mxu0 %v4053
        %4113 = vmatprep.subr.bf16.mxu0 %v4052
        %4114 = vmatpush2.bf16.msra.mxu0 %v4051
        %4115 = vmatprep.subr.bf16.mxu0 %v4050
        %4116 = vmatpush2.bf16.msra.mxu0 %v4049
        %4117 = vmatprep.subr.bf16.mxu0 %v4048
        %4118 = vmatpush2.bf16.msra.mxu0 %v4047
        %4119 = vmatprep.subr.bf16.mxu0 %v4046
        %4120 = vmatpush2.bf16.msra.mxu0 %v4045
        %4121 = vmatprep.subr.bf16.mxu0 %v4044
        %4122 = vmatpush2.bf16.msra.mxu0 %v4043
        %4123 = vmatprep.mubr.bf16.mxu0 %v3868
        %4124 = vmatmul.mubr.bf16.gmra.mxu0 %v3867
        %v4125 = vpop.f32.mrf.mxu0
        %v4126 = vadd.f32 %v3764, %v4125
        %v4127 = vpop.f32.mrf.mxu0
        %v4128 = vadd.f32 %v3768, %v4127
        %v4129 = vpop.f32.mrf.mxu0
        %v4130 = vadd.f32 %v3764, %v4129
        %v4131 = vpop.f32.mrf.mxu0
        %v4132 = vadd.f32 %v3768, %v4131
        %4133 = vmatprep.mubr.bf16.mxu0 %v3870
        %4134 = vmatmul.mubr.bf16.gmra.mxu0 %v3869
        %v4135 = vpop.f32.mrf.mxu0
        %v4136 = vadd.f32 %v3764, %v4135
        %v4137 = vpop.f32.mrf.mxu0
        %v4138 = vadd.f32 %v3768, %v4137
        %v4139 = vpop.f32.mrf.mxu0
        %v4140 = vadd.f32 %v3764, %v4139
        %v4141 = vpop.f32.mrf.mxu0
        %v4142 = vadd.f32 %v3768, %v4141
        %4143 = vmatprep.mubr.bf16.mxu0 %v3872
        %4144 = vmatmul.mubr.bf16.gmra.mxu0 %v3871
        %v4145 = vpop.f32.mrf.mxu0
        %v4146 = vadd.f32 %v3764, %v4145
        %v4147 = vpop.f32.mrf.mxu0
        %v4148 = vadd.f32 %v3768, %v4147
        %v4149 = vpop.f32.mrf.mxu0
        %v4150 = vadd.f32 %v3764, %v4149
        %v4151 = vpop.f32.mrf.mxu0
        %v4152 = vadd.f32 %v3768, %v4151
        %4153 = vmatprep.mubr.bf16.mxu0 %v3874
        %4154 = vmatmul.mubr.bf16.gmra.mxu0 %v3873
        %v4155 = vpop.f32.mrf.mxu0
        %v4156 = vadd.f32 %v3764, %v4155
        %v4157 = vpop.f32.mrf.mxu0
        %v4158 = vadd.f32 %v3768, %v4157
        %v4159 = vpop.f32.mrf.mxu0
        %v4160 = vadd.f32 %v3764, %v4159
        %v4161 = vpop.f32.mrf.mxu0
        %v4162 = vadd.f32 %v3768, %v4161
        %4163 = vmatprep.mubr.bf16.mxu0 %v3876
        %4164 = vmatmul.mubr.bf16.gmra.mxu0 %v3875
        %v4165 = vpop.f32.mrf.mxu0
        %v4166 = vadd.f32 %v3764, %v4165
        %v4167 = vpop.f32.mrf.mxu0
        %v4168 = vadd.f32 %v3768, %v4167
        %v4169 = vpop.f32.mrf.mxu0
        %v4170 = vadd.f32 %v3764, %v4169
        %v4171 = vpop.f32.mrf.mxu0
        %v4172 = vadd.f32 %v3768, %v4171
        %4173 = vmatprep.mubr.bf16.mxu0 %v3878
        %4174 = vmatmul.mubr.bf16.gmra.mxu0 %v3877
        %v4175 = vpop.f32.mrf.mxu0
        %v4176 = vadd.f32 %v3764, %v4175
        %v4177 = vpop.f32.mrf.mxu0
        %v4178 = vadd.f32 %v3768, %v4177
        %v4179 = vpop.f32.mrf.mxu0
        %v4180 = vadd.f32 %v3764, %v4179
        %v4181 = vpop.f32.mrf.mxu0
        %v4182 = vadd.f32 %v3768, %v4181
        %4183 = vmatprep.mubr.bf16.mxu0 %v3880
        %4184 = vmatmul.mubr.bf16.gmra.mxu0 %v3879
        %v4185 = vpop.f32.mrf.mxu0
        %v4186 = vadd.f32 %v3764, %v4185
        %v4187 = vpop.f32.mrf.mxu0
        %v4188 = vadd.f32 %v3768, %v4187
        %v4189 = vpop.f32.mrf.mxu0
        %v4190 = vadd.f32 %v3764, %v4189
        %v4191 = vpop.f32.mrf.mxu0
        %v4192 = vadd.f32 %v3768, %v4191
        %4193 = vmatprep.mubr.bf16.mxu0 %v3882
        %4194 = vmatmul.mubr.bf16.gmra.mxu0 %v3881
        %v4195 = vpop.f32.mrf.mxu0
        %v4196 = vadd.f32 %v3764, %v4195
        %v4197 = vpop.f32.mrf.mxu0
        %v4198 = vadd.f32 %v3768, %v4197
        %v4199 = vpop.f32.mrf.mxu0
        %v4200 = vadd.f32 %v3764, %v4199
        %v4201 = vpop.f32.mrf.mxu0
        %v4202 = vadd.f32 %v3768, %v4201
        %4203 = vmatprep.mubr.bf16.mxu0 %v3884
        %4204 = vmatmul.mubr.bf16.gmra.mxu0 %v3883
        %v4205 = vpop.f32.mrf.mxu0
        %v4206 = vadd.f32 %v3764, %v4205
        %v4207 = vpop.f32.mrf.mxu0
        %v4208 = vadd.f32 %v3768, %v4207
        %v4209 = vpop.f32.mrf.mxu0
        %v4210 = vadd.f32 %v3764, %v4209
        %v4211 = vpop.f32.mrf.mxu0
        %v4212 = vadd.f32 %v3768, %v4211
        %4213 = vmatprep.mubr.bf16.mxu0 %v3886
        %4214 = vmatmul.mubr.bf16.gmra.mxu0 %v3885
        %v4215 = vpop.f32.mrf.mxu0
        %v4216 = vadd.f32 %v3764, %v4215
        %v4217 = vpop.f32.mrf.mxu0
        %v4218 = vadd.f32 %v3768, %v4217
        %v4219 = vpop.f32.mrf.mxu0
        %v4220 = vadd.f32 %v3764, %v4219
        %v4221 = vpop.f32.mrf.mxu0
        %v4222 = vadd.f32 %v3768, %v4221
        %4223 = vmatprep.mubr.bf16.mxu0 %v3888
        %4224 = vmatmul.mubr.bf16.gmra.mxu0 %v3887
        %v4225 = vpop.f32.mrf.mxu0
        %v4226 = vadd.f32 %v3764, %v4225
        %v4227 = vpop.f32.mrf.mxu0
        %v4228 = vadd.f32 %v3768, %v4227
        %v4229 = vpop.f32.mrf.mxu0
        %v4230 = vadd.f32 %v3764, %v4229
        %v4231 = vpop.f32.mrf.mxu0
        %v4232 = vadd.f32 %v3768, %v4231
        %4233 = vmatprep.mubr.bf16.mxu0 %v3890
        %4234 = vmatmul.mubr.bf16.gmra.mxu0 %v3889
        %v4235 = vpop.f32.mrf.mxu0
        %v4236 = vadd.f32 %v3764, %v4235
        %v4237 = vpop.f32.mrf.mxu0
        %v4238 = vadd.f32 %v3768, %v4237
        %v4239 = vpop.f32.mrf.mxu0
        %v4240 = vadd.f32 %v3764, %v4239
        %v4241 = vpop.f32.mrf.mxu0
        %v4242 = vadd.f32 %v3768, %v4241
        %4243 = vmatprep.mubr.bf16.mxu0 %v3892
        %4244 = vmatmul.mubr.bf16.gmra.mxu0 %v3891
        %v4245 = vpop.f32.mrf.mxu0
        %v4246 = vadd.f32 %v3764, %v4245
        %v4247 = vpop.f32.mrf.mxu0
        %v4248 = vadd.f32 %v3768, %v4247
        %v4249 = vpop.f32.mrf.mxu0
        %v4250 = vadd.f32 %v3764, %v4249
        %v4251 = vpop.f32.mrf.mxu0
        %v4252 = vadd.f32 %v3768, %v4251
        %4253 = vmatprep.mubr.bf16.mxu0 %v3894
        %4254 = vmatmul.mubr.bf16.gmra.mxu0 %v3893
        %v4255 = vpop.f32.mrf.mxu0
        %v4256 = vadd.f32 %v3764, %v4255
        %v4257 = vpop.f32.mrf.mxu0
        %v4258 = vadd.f32 %v3768, %v4257
        %v4259 = vpop.f32.mrf.mxu0
        %v4260 = vadd.f32 %v3764, %v4259
        %v4261 = vpop.f32.mrf.mxu0
        %v4262 = vadd.f32 %v3768, %v4261
        %4263 = vmatprep.mubr.bf16.mxu0 %v3896
        %4264 = vmatmul.mubr.bf16.gmra.mxu0 %v3895
        %v4265 = vpop.f32.mrf.mxu0
        %v4266 = vadd.f32 %v3764, %v4265
        %v4267 = vpop.f32.mrf.mxu0
        %v4268 = vadd.f32 %v3768, %v4267
        %v4269 = vpop.f32.mrf.mxu0
        %v4270 = vadd.f32 %v3764, %v4269
        %v4271 = vpop.f32.mrf.mxu0
        %v4272 = vadd.f32 %v3768, %v4271
        %4273 = vmatprep.mubr.bf16.mxu0 %v3898
        %4274 = vmatmul.mubr.bf16.gmra.mxu0 %v3897
        %v4275 = vpop.f32.mrf.mxu0
        %v4276 = vadd.f32 %v3764, %v4275
        %v4277 = vpop.f32.mrf.mxu0
        %v4278 = vadd.f32 %v3768, %v4277
        %v4279 = vpop.f32.mrf.mxu0
        %v4280 = vadd.f32 %v3764, %v4279
        %v4281 = vpop.f32.mrf.mxu0
        %v4282 = vadd.f32 %v3768, %v4281
        %4283 = vdwg.mxu0
        %4284 = vst [vmem:[%s409] sm:$0xff] %v4126
        %4285 = vst [vmem:[%s409 + $0x8] sm:$0xff] %v4128
        %4286 = vst [vmem:[%s409 + $0x10] sm:$0xff] %v4130
        %4287 = vst [vmem:[%s409 + $0x18] sm:$0xff] %v4132
        %4288 = vst [vmem:[%s409 + $0x20] sm:$0xff] %v4136
        %4289 = vst [vmem:[%s409 + $0x28] sm:$0xff] %v4138
        %4290 = vst [vmem:[%s409 + $0x30] sm:$0xff] %v4140
        %4291 = vst [vmem:[%s409 + $0x38] sm:$0xff] %v4142
        %4292 = vst [vmem:[%s409 + $0x40] sm:$0xff] %v4146
        %4293 = vst [vmem:[%s409 + $0x48] sm:$0xff] %v4148
        %4294 = vst [vmem:[%s409 + $0x50] sm:$0xff] %v4150
        %4295 = vst [vmem:[%s409 + $0x58] sm:$0xff] %v4152
        %4296 = vst [vmem:[%s409 + $0x60] sm:$0xff] %v4156
        %4297 = vst [vmem:[%s409 + $0x68] sm:$0xff] %v4158
        %4298 = vst [vmem:[%s409 + $0x70] sm:$0xff] %v4160
        %4299 = vst [vmem:[%s409 + $0x78] sm:$0xff] %v4162
        %4300 = vst [vmem:[%s409 + $0x80] sm:$0xff] %v4166
        %4301 = vst [vmem:[%s409 + $0x88] sm:$0xff] %v4168
        %4302 = vst [vmem:[%s409 + $0x90] sm:$0xff] %v4170
        %4303 = vst [vmem:[%s409 + $0x98] sm:$0xff] %v4172
        %4304 = vst [vmem:[%s409 + $0xa0] sm:$0xff] %v4176
        %4305 = vst [vmem:[%s409 + $0xa8] sm:$0xff] %v4178
        %4306 = vst [vmem:[%s409 + $0xb0] sm:$0xff] %v4180
        %4307 = vst [vmem:[%s409 + $0xb8] sm:$0xff] %v4182
        %4308 = vst [vmem:[%s409 + $0xc0] sm:$0xff] %v4186
        %4309 = vst [vmem:[%s409 + $0xc8] sm:$0xff] %v4188
        %4310 = vst [vmem:[%s409 + $0xd0] sm:$0xff] %v4190
        %4311 = vst [vmem:[%s409 + $0xd8] sm:$0xff] %v4192
        %4312 = vst [vmem:[%s409 + $0xe0] sm:$0xff] %v4196
        %4313 = vst [vmem:[%s409 + $0xe8] sm:$0xff] %v4198
        %4314 = vst [vmem:[%s409 + $0xf0] sm:$0xff] %v4200
        %4315 = vst [vmem:[%s409 + $0xf8] sm:$0xff] %v4202
        %4316 = vst [vmem:[%s409 + $0x100] sm:$0xff] %v4206
        %4317 = vst [vmem:[%s409 + $0x108] sm:$0xff] %v4208
        %4318 = vst [vmem:[%s409 + $0x110] sm:$0xff] %v4210
        %4319 = vst [vmem:[%s409 + $0x118] sm:$0xff] %v4212
        %4320 = vst [vmem:[%s409 + $0x120] sm:$0xff] %v4216
        %4321 = vst [vmem:[%s409 + $0x128] sm:$0xff] %v4218
        %4322 = vst [vmem:[%s409 + $0x130] sm:$0xff] %v4220
        %4323 = vst [vmem:[%s409 + $0x138] sm:$0xff] %v4222
        %4324 = vst [vmem:[%s409 + $0x140] sm:$0xff] %v4226
        %4325 = vst [vmem:[%s409 + $0x148] sm:$0xff] %v4228
        %4326 = vst [vmem:[%s409 + $0x150] sm:$0xff] %v4230
        %4327 = vst [vmem:[%s409 + $0x158] sm:$0xff] %v4232
        %4328 = vst [vmem:[%s409 + $0x160] sm:$0xff] %v4236
        %4329 = vst [vmem:[%s409 + $0x168] sm:$0xff] %v4238
        %4330 = vst [vmem:[%s409 + $0x170] sm:$0xff] %v4240
        %4331 = vst [vmem:[%s409 + $0x178] sm:$0xff] %v4242
        %4332 = vst [vmem:[%s409 + $0x180] sm:$0xff] %v4246
        %4333 = vst [vmem:[%s409 + $0x188] sm:$0xff] %v4248
        %4334 = vst [vmem:[%s409 + $0x190] sm:$0xff] %v4250
        %4335 = vst [vmem:[%s409 + $0x198] sm:$0xff] %v4252
        %4336 = vst [vmem:[%s409 + $0x1a0] sm:$0xff] %v4256
        %4337 = vst [vmem:[%s409 + $0x1a8] sm:$0xff] %v4258
        %4338 = vst [vmem:[%s409 + $0x1b0] sm:$0xff] %v4260
        %4339 = vst [vmem:[%s409 + $0x1b8] sm:$0xff] %v4262
        %4340 = vst [vmem:[%s409 + $0x1c0] sm:$0xff] %v4266
        %4341 = vst [vmem:[%s409 + $0x1c8] sm:$0xff] %v4268
        %4342 = vst [vmem:[%s409 + $0x1d0] sm:$0xff] %v4270
        %4343 = vst [vmem:[%s409 + $0x1d8] sm:$0xff] %v4272
        %4344 = vst [vmem:[%s409 + $0x1e0] sm:$0xff] %v4276
        %4345 = vst [vmem:[%s409 + $0x1e8] sm:$0xff] %v4278
        %4346 = vst [vmem:[%s409 + $0x1f0] sm:$0xff] %v4280
        %4347 = vst [vmem:[%s409 + $0x1f8] sm:$0xff] %v4282
        %s4348 = sand.u32 %s230, 1
        %s4349 = scalar_lea.sflag [#allocation5], %s4348
        %s4350 = sand.u32 %s230, 1
        %s4351 = smul.addr %s4350, 512
        %s4352 = scalar_lea.vmem [#allocation12], %s4351
        // Predicated region
        $region77: #{tpu_custom_call.1} parent=55 // pred_check
          %p4353 = pneg %p240
        $region78: #{tpu_custom_call.1} parent=55 // pred_check_branch
          %4355 = sbr.rel (%p4353) target = $region80
        $region79: #{tpu_custom_call.1} parent=55 // pred_region
          %s4356 = smul.u32 2, %s28
          %s4358 = ssub.s32 8192, 8192
          %4359 = vsyncadd %s4349, %s4358
          %s4360 = smul.addr %s4356, 32
          %s4361 = smul.addr %s4360, 128
          %s4362 = scalar_lea.hbm %s9, %s4361
          %s4363 = sshll.u32 %s4352, 4
          %s4364 = int_to_ptr.vmem [resolvable:$true] %s4363
          %4369 = dma.vmem_to_hbm [thread:$0]  %s4364, 8192, %s4362, %s4349, 256, 256, 16
        $region80: #{tpu_custom_call.1} parent=55 // pred_fallthru
          _
      $region56: #{tpu_custom_call.1} parent=5 // pred_fallthru
        _
      %p4370 = scmp.le.s32.totalorder 2, %s23
      // Predicated region
      $region81: #{tpu_custom_call.1} parent=5 // pred_check
        %p4371 = pneg %p4370
      $region82: #{tpu_custom_call.1} parent=5 // pred_check_branch
        %4373 = sbr.rel (%p4371) target = $region84
      $region83: #{tpu_custom_call.1} parent=5 // pred_region
        %s4374 = ssub.s32 %s23, 2
        // Predicated region
        $region85: #{tpu_custom_call.1} parent=83 // pred_check
          %p4375 = pneg %p246
        $region86: #{tpu_custom_call.1} parent=83 // pred_check_branch
          %4377 = sbr.rel (%p4375) target = $region88
        $region87: #{tpu_custom_call.1} parent=83 // pred_region
          %s4378 = sand.u32 %s231, 1
          %s4379 = scalar_lea.sflag [#allocation5], %s4378
          %s4380 = sand.u32 %s231, 1
          %s4381 = smul.addr %s4380, 512
          %s4382 = scalar_lea.vmem [#allocation12], %s4381
          %4383 = dma.done %s4379, 8192
        $region88: #{tpu_custom_call.1} parent=83 // pred_fallthru
          _
      $region84: #{tpu_custom_call.1} parent=5 // pred_fallthru
        _
    $region6: #{tpu_custom_call.1} parent=1 // loop_footer
      %s27 = sadd.s32 1, %s23
    $region7: #{tpu_custom_call.1} parent=1 // loop_footer_branch
      %22 = sbr.rel target = $region3
    $region8: #{tpu_custom_call.1} parent=1 // loop_exit
      _
    %4384 = vsyncpa [#allocation4], 1
    %s4385 = scalar_lea.sflag [#allocation4], 1
    %4386 = vsyncpa %s4385, 1
    %4387 = vsyncpa [#allocation7], 1
    %4388 = vsyncpa [#allocation10], 1
    %4389 = vsyncpa [#allocation5], 1
    %s4390 = scalar_lea.sflag [#allocation5], 1
    %4391 = vsyncpa %s4390, 1

</llo_original>
